<compile_context>
chip_gen: v7x
topology: tpu7x:2x2x1
jax: 0.10.0
libtpu: 0.0.40
codegen_flags: <defaults>
</compile_context>

<pallas_src>
import functools

import jax
import jax.numpy as jnp
from jax import lax
from jax.experimental import pallas as pl
from jax.experimental.pallas import tpu as pltpu


def _attention_kernel(q_ref, k_ref, v_ref,
                      wq_ref, wk_ref, wv_ref, wp_ref, bp_ref,
                      o_ref, *, num_heads):
    """One (batch, query-tile) grid step.

    q_ref : (1, TN, C)  bf16  query tile
    k_ref : (1, M, C)   bf16  full key sequence of this batch
    v_ref : (1, M, C)   bf16
    wq/wk/wv_ref : (C, C) bf16  pre-transposed to (in, out); wq pre-scaled
    wp_ref : (H, D, C)  bf16  output projection, head-split
    bp_ref : (1, C)     f32   output projection bias
    o_ref  : (1, TN, C)       output tile
    """
    q = q_ref[0]                       # (TN, C)
    k = k_ref[0]                       # (M, C)
    v = v_ref[0]                       # (M, C)

    tn, c = q.shape
    d = c // num_heads

    # q/k/v projections (qkv_bias=False): bf16 MXU operands, f32 accumulation.
    qp = jnp.dot(q, wq_ref[...], preferred_element_type=jnp.float32)   # (TN, C)
    kp = jnp.dot(k, wk_ref[...], preferred_element_type=jnp.float32)   # (M, C)
    vp = jnp.dot(v, wv_ref[...], preferred_element_type=jnp.float32)   # (M, C)
    qp = qp.astype(jnp.bfloat16)
    kp = kp.astype(jnp.bfloat16)
    vp = vp.astype(jnp.bfloat16)

    acc = jnp.zeros((tn, c), jnp.float32)

    # Static (unrolled) loop over heads: static lane slices + 2-D MXU dots,
    # no reshape/transpose of full tensors.
    # TODO(synk): for very large num_heads, switch to a fori_loop / head grid axis.
    for h in range(num_heads):
        sl = slice(h * d, (h + 1) * d)
        qh = qp[:, sl]                 # (TN, D)
        kh = kp[:, sl]                 # (M, D)
        vh = vp[:, sl]                 # (M, D)

        # scores = (q Wq * scale) @ (k Wk)^T   (scale folded into Wq).
        s = lax.dot_general(qh, kh, (((1,), (1,)), ((), ())),
                            preferred_element_type=jnp.float32)        # (TN, M)

        # f32 softmax over keys (safe on v5e: no bf16 VPU/EUP path needed).
        s_max = jnp.max(s, axis=-1, keepdims=True)
        p = jnp.exp(s - s_max)
        denom = jnp.sum(p, axis=-1, keepdims=True)
        p = p * pl.reciprocal(denom, approx=True)

        ctx = jnp.dot(p.astype(jnp.bfloat16), vh,
                      preferred_element_type=jnp.float32)               # (TN, D)

        # Head merge folded into the output projection: acc += ctx @ Wp[h].
        acc = acc + jnp.dot(ctx.astype(jnp.bfloat16), wp_ref[h],
                            preferred_element_type=jnp.float32)          # (TN, C)

    o_ref[0] = (acc + bp_ref[...]).astype(o_ref.dtype)


def _pick_block_n(n, min_mult):
    for t in (512, 256, 128, 64, 32, 16, 8):
        if t <= n and n % t == 0 and t % min_mult == 0:
            return t
    return n


def attention_pallas(q, k, v, params, *, num_heads, block_n=None,
                     compute_dtype=jnp.bfloat16):
    """q: (B, N, C), k/v: (B, M, C). Returns (B, N, C) in q.dtype."""
    B, N, C = q.shape
    Bk, M, Ck = k.shape
    assert k.shape == v.shape and Bk == B and Ck == C
    assert C % num_heads == 0
    D = C // num_heads
    scale = D ** (-0.5)

    min_mult = 16 if compute_dtype == jnp.bfloat16 else 8
    if block_n is None:
        block_n = _pick_block_n(N, min_mult)
    assert N % block_n == 0, "query length must be divisible by block_n"
    # TODO(synk): ragged N (masked last query tile) not implemented.

    # PyTorch Linear stores (out, in) and computes x @ W.T -> pre-transpose to
    # (in, out). Fold the softmax scale into Wq; head-split Wp to (H, D, C) so
    # the kernel folds the head merge into the projection matmul.
    wq_t = (params["wq"].T * scale).astype(compute_dtype)
    wk_t = params["wk"].T.astype(compute_dtype)
    wv_t = params["wv"].T.astype(compute_dtype)
    wp_hdc = params["wp"].T.reshape(num_heads, D, C).astype(compute_dtype)
    bp = params["bp"].reshape(1, C).astype(jnp.float32)

    qc = q.astype(compute_dtype)
    kc = k.astype(compute_dtype)
    vc = v.astype(compute_dtype)

    kernel = functools.partial(_attention_kernel, num_heads=num_heads)
    grid = (B, N // block_n)

    def build(single_buffer_weights):
        def const_spec(shape):
            zeros = (0,) * len(shape)
            if single_buffer_weights:
                # Constant index map across the grid: no double buffering needed.
                return pl.BlockSpec(shape, lambda b, n, _z=zeros: _z,
                                    pipeline_mode=pl.Buffered(1))
            return pl.BlockSpec(shape, lambda b, n, _z=zeros: _z)

        grid_spec = pltpu.PrefetchScalarGridSpec(
            num_scalar_prefetch=0,
            grid=grid,
            in_specs=[
                pl.BlockSpec((1, block_n, C), lambda b, n: (b, n, 0)),   # q
                pl.BlockSpec((1, M, C), lambda b, n: (b, 0, 0)),         # k
                pl.BlockSpec((1, M, C), lambda b, n: (b, 0, 0)),         # v
                const_spec((C, C)),              # wq^T * scale
                const_spec((C, C)),              # wk^T
                const_spec((C, C)),              # wv^T
                const_spec((num_heads, D, C)),   # wp^T, head-split
                const_spec((1, C)),              # proj bias
            ],
            out_specs=pl.BlockSpec((1, block_n, C), lambda b, n: (b, n, 0)),
        )

        # Raise the scoped-VMEM limit only when the working set needs it
        # (keeps the default on small shapes and on v7x's 64 MiB VMEM).
        bpe = jnp.dtype(compute_dtype).itemsize
        weight_bufs = 1 if single_buffer_weights else 2
        working = (2 * (block_n * C + 2 * M * C) * bpe               # q,k,v blocks (double-buffered)
                   + 2 * block_n * C * jnp.dtype(q.dtype).itemsize   # out blocks
                   + (4 * C * C + C) * bpe * weight_bufs             # weights + bias
                   + 4 * block_n * C * 4)                            # f32 accumulators / slack
        compiler_kwargs = dict(dimension_semantics=("parallel", "parallel"))
        if working > 32 * 1024 * 1024:
            compiler_kwargs["vmem_limit_bytes"] = int(min(working * 3 // 2,
                                                          100 * 1024 * 1024))
        return pl.pallas_call(
            kernel,
            out_shape=jax.ShapeDtypeStruct((B, N, C), q.dtype),
            grid_spec=grid_spec,
            compiler_params=pltpu.CompilerParams(**compiler_kwargs),
        )

    args = (qc, kc, vc, wq_t, wk_t, wv_t, wp_hdc, bp)
    try:
        return build(True)(*args)
    except Exception:
        # pipeline_mode=pl.Buffered(1) not supported by this jax build:
        # fall back to default (double-buffered) weight specs.
        return build(False)(*args)


def attention_reference(q, k, v, params, *, num_heads):
    """Pure-JAX f32 reference mirroring the PyTorch forward exactly."""
    B, N, C = q.shape
    _, M, _ = k.shape
    D = C // num_heads
    scale = D ** (-0.5)
    qp = (q @ params["wq"].T).reshape(B, N, num_heads, D)
    kp = (k @ params["wk"].T).reshape(B, M, num_heads, D)
    vp = (v @ params["wv"].T).reshape(B, M, num_heads, D)
    attn = jnp.einsum('bnkc,bmkc->bknm', qp, kp) * scale
    attn = jax.nn.softmax(attn, axis=-1)
    x = jnp.einsum('bknm,bmkc->bnkc', attn, vp).reshape(B, N, C)
    return x @ params["wp"].T + params["bp"]


if __name__ == "__main__":
    # Small shapes consistent with the module's forward.
    # C=128 keeps the output lane-dense; block_n=16 exercises query tiling.
    B, N, M, C = 2, 32, 16, 128
    NUM_HEADS = 8

    key = jax.random.PRNGKey(0)
    kq, kk, kv, kwq, kwk, kwv, kwp, kbp = jax.random.split(key, 8)

    q = jax.random.normal(kq, (B, N, C), dtype=jnp.float32)
    k = jax.random.normal(kk, (B, M, C), dtype=jnp.float32)
    v = jax.random.normal(kv, (B, M, C), dtype=jnp.float32)

    # Deterministic synthetic parameters (PyTorch Linear layout: (out, in)).
    params = {
        "wq": 0.05 * jax.random.normal(kwq, (C, C), dtype=jnp.float32),
        "wk": 0.05 * jax.random.normal(kwk, (C, C), dtype=jnp.float32),
        "wv": 0.05 * jax.random.normal(kwv, (C, C), dtype=jnp.float32),
        "wp": 0.05 * jax.random.normal(kwp, (C, C), dtype=jnp.float32),
        "bp": 0.01 * jax.random.normal(kbp, (C,), dtype=jnp.float32),
    }

    out = attention_pallas(q, k, v, params, num_heads=NUM_HEADS, block_n=16)
    out = jax.block_until_ready(out)

    ref = attention_reference(q, k, v, params, num_heads=NUM_HEADS)
    assert out.shape == (B, N, C)
    # bf16 MXU operands (f32 accumulation) -> allow ~1e-2-level divergence.
    assert jnp.allclose(out, ref, atol=3e-2, rtol=3e-2), "mismatch vs reference"

    print("KERNEL_OK")
</pallas_src>

<mosaic_0001>
module attributes {stable_mosaic.version = 11 : i64} {
  func.func @_attention_kernel(%arg0: i32, %arg1: i32, %arg2: memref<1x16x128xbf16, #tpu.memory_space<vmem>>, %arg3: memref<1x16x128xbf16, #tpu.memory_space<vmem>>, %arg4: memref<1x16x128xbf16, #tpu.memory_space<vmem>>, %arg5: memref<128x128xbf16, #tpu.memory_space<vmem>>, %arg6: memref<128x128xbf16, #tpu.memory_space<vmem>>, %arg7: memref<128x128xbf16, #tpu.memory_space<vmem>>, %arg8: memref<8x16x128xbf16, #tpu.memory_space<vmem>>, %arg9: memref<1x128xf32, #tpu.memory_space<vmem>>, %arg10: memref<1x16x128xf32, #tpu.memory_space<vmem>>) attributes {dimension_semantics = [#tpu.dimension_semantics<parallel>, #tpu.dimension_semantics<parallel>], iteration_bounds = array<i64: 2, 2>, scalar_prefetch = 0 : i64, scratch_operands = 0 : i64, tpu.core_type = #tpu.core_type<tc>, window_params = [{transform_indices = @transform_0, window_bounds = array<i64: 1, 16, 128>}, {transform_indices = @transform_1, window_bounds = array<i64: 1, 16, 128>}, {transform_indices = @transform_2, window_bounds = array<i64: 1, 16, 128>}, {pipeline_mode = #tpu.pipeline_mode<synchronous>, transform_indices = @transform_3, window_bounds = array<i64: 128, 128>}, {pipeline_mode = #tpu.pipeline_mode<synchronous>, transform_indices = @transform_4, window_bounds = array<i64: 128, 128>}, {pipeline_mode = #tpu.pipeline_mode<synchronous>, transform_indices = @transform_5, window_bounds = array<i64: 128, 128>}, {pipeline_mode = #tpu.pipeline_mode<synchronous>, transform_indices = @transform_6, window_bounds = array<i64: 8, 16, 128>}, {pipeline_mode = #tpu.pipeline_mode<synchronous>, transform_indices = @transform_7, window_bounds = array<i64: 1, 128>}, {transform_indices = @transform_8, window_bounds = array<i64: 1, 16, 128>}]} {
    %c0 = arith.constant 0 : index
    %c0_0 = arith.constant 0 : index
    %c0_1 = arith.constant 0 : index
    %0 = vector.load %arg2[%c0, %c0_0, %c0_1] : memref<1x16x128xbf16, #tpu.memory_space<vmem>>, vector<1x16x128xbf16>
    %1 = vector.shape_cast %0 : vector<1x16x128xbf16> to vector<16x128xbf16>
    %c0_2 = arith.constant 0 : index
    %c0_3 = arith.constant 0 : index
    %c0_4 = arith.constant 0 : index
    %2 = vector.load %arg3[%c0_2, %c0_3, %c0_4] : memref<1x16x128xbf16, #tpu.memory_space<vmem>>, vector<1x16x128xbf16>
    %3 = vector.shape_cast %2 : vector<1x16x128xbf16> to vector<16x128xbf16>
    %c0_5 = arith.constant 0 : index
    %c0_6 = arith.constant 0 : index
    %c0_7 = arith.constant 0 : index
    %4 = vector.load %arg4[%c0_5, %c0_6, %c0_7] : memref<1x16x128xbf16, #tpu.memory_space<vmem>>, vector<1x16x128xbf16>
    %5 = vector.shape_cast %4 : vector<1x16x128xbf16> to vector<16x128xbf16>
    %c0_8 = arith.constant 0 : index
    %c0_9 = arith.constant 0 : index
    %6 = vector.load %arg5[%c0_8, %c0_9] : memref<128x128xbf16, #tpu.memory_space<vmem>>, vector<128x128xbf16>
    %cst = arith.constant dense<0.000000e+00> : vector<16x128xf32>
    %7 = tpu.matmul %1, %6, %cst {dimension_numbers = #tpu.dot_dimension_numbers<[1], [0], [0], [1], [0, 0, 1, 1], [], []>} : vector<16x128xbf16>, vector<128x128xbf16>, vector<16x128xf32> -> vector<16x128xf32>
    %c0_10 = arith.constant 0 : index
    %c0_11 = arith.constant 0 : index
    %8 = vector.load %arg6[%c0_10, %c0_11] : memref<128x128xbf16, #tpu.memory_space<vmem>>, vector<128x128xbf16>
    %cst_12 = arith.constant dense<0.000000e+00> : vector<16x128xf32>
    %9 = tpu.matmul %3, %8, %cst_12 {dimension_numbers = #tpu.dot_dimension_numbers<[1], [0], [0], [1], [0, 0, 1, 1], [], []>} : vector<16x128xbf16>, vector<128x128xbf16>, vector<16x128xf32> -> vector<16x128xf32>
    %c0_13 = arith.constant 0 : index
    %c0_14 = arith.constant 0 : index
    %10 = vector.load %arg7[%c0_13, %c0_14] : memref<128x128xbf16, #tpu.memory_space<vmem>>, vector<128x128xbf16>
    %cst_15 = arith.constant dense<0.000000e+00> : vector<16x128xf32>
    %11 = tpu.matmul %5, %10, %cst_15 {dimension_numbers = #tpu.dot_dimension_numbers<[1], [0], [0], [1], [0, 0, 1, 1], [], []>} : vector<16x128xbf16>, vector<128x128xbf16>, vector<16x128xf32> -> vector<16x128xf32>
    %12 = arith.truncf %7 : vector<16x128xf32> to vector<16x128xbf16>
    %13 = arith.truncf %9 : vector<16x128xf32> to vector<16x128xbf16>
    %14 = arith.truncf %11 : vector<16x128xf32> to vector<16x128xbf16>
    %cst_16 = arith.constant 0.000000e+00 : f32
    %15 = vector.broadcast %cst_16 : f32 to vector<16x128xf32>
    %16 = vector.extract_strided_slice %12 {offsets = [0, 0], sizes = [16, 16], strides = [1, 1]} : vector<16x128xbf16> to vector<16x16xbf16>
    %17 = vector.extract_strided_slice %13 {offsets = [0, 0], sizes = [16, 16], strides = [1, 1]} : vector<16x128xbf16> to vector<16x16xbf16>
    %18 = vector.extract_strided_slice %14 {offsets = [0, 0], sizes = [16, 16], strides = [1, 1]} : vector<16x128xbf16> to vector<16x16xbf16>
    %cst_17 = arith.constant dense<0.000000e+00> : vector<16x16xf32>
    %19 = tpu.matmul %16, %17, %cst_17 {dimension_numbers = #tpu.dot_dimension_numbers<[1], [1], [0], [0], [0, 0, 1, 0], [], []>} : vector<16x16xbf16>, vector<16x16xbf16>, vector<16x16xf32> -> vector<16x16xf32>
    %cst_18 = arith.constant dense<0xFF800000> : vector<16xf32>
    %20 = vector.multi_reduction <maximumf>, %19, %cst_18 [1] : vector<16x16xf32> to vector<16xf32>
    %21 = vector.shape_cast %20 : vector<16xf32> to vector<16x1xf32>
    %22 = vector.broadcast %21 : vector<16x1xf32> to vector<16x16xf32>
    %23 = arith.subf %19, %22 : vector<16x16xf32>
    %24 = math.exp %23 : vector<16x16xf32>
    %cst_19 = arith.constant dense<0.000000e+00> : vector<16xf32>
    %25 = vector.multi_reduction <add>, %24, %cst_19 [1] : vector<16x16xf32> to vector<16xf32>
    %26 = vector.shape_cast %25 : vector<16xf32> to vector<16x1xf32>
    %27 = tpu.reciprocal %26 {approx = true} : vector<16x1xf32> -> vector<16x1xf32>
    %28 = vector.broadcast %27 : vector<16x1xf32> to vector<16x16xf32>
    %29 = arith.mulf %24, %28 : vector<16x16xf32>
    %30 = arith.truncf %29 : vector<16x16xf32> to vector<16x16xbf16>
    %cst_20 = arith.constant dense<0.000000e+00> : vector<16x16xf32>
    %31 = tpu.matmul %30, %18, %cst_20 {dimension_numbers = #tpu.dot_dimension_numbers<[1], [0], [0], [1], [0, 0, 1, 1], [], []>} : vector<16x16xbf16>, vector<16x16xbf16>, vector<16x16xf32> -> vector<16x16xf32>
    %32 = arith.truncf %31 : vector<16x16xf32> to vector<16x16xbf16>
    %c0_21 = arith.constant 0 : index
    %c0_22 = arith.constant 0 : index
    %c0_23 = arith.constant 0 : index
    %33 = vector.load %arg8[%c0_21, %c0_22, %c0_23] : memref<8x16x128xbf16, #tpu.memory_space<vmem>>, vector<1x16x128xbf16>
    %34 = vector.shape_cast %33 : vector<1x16x128xbf16> to vector<16x128xbf16>
    %cst_24 = arith.constant dense<0.000000e+00> : vector<16x128xf32>
    %35 = tpu.matmul %32, %34, %cst_24 {dimension_numbers = #tpu.dot_dimension_numbers<[1], [0], [0], [1], [0, 0, 1, 1], [], []>} : vector<16x16xbf16>, vector<16x128xbf16>, vector<16x128xf32> -> vector<16x128xf32>
    %36 = arith.addf %15, %35 : vector<16x128xf32>
    %37 = vector.extract_strided_slice %12 {offsets = [0, 16], sizes = [16, 16], strides = [1, 1]} : vector<16x128xbf16> to vector<16x16xbf16>
    %38 = vector.extract_strided_slice %13 {offsets = [0, 16], sizes = [16, 16], strides = [1, 1]} : vector<16x128xbf16> to vector<16x16xbf16>
    %39 = vector.extract_strided_slice %14 {offsets = [0, 16], sizes = [16, 16], strides = [1, 1]} : vector<16x128xbf16> to vector<16x16xbf16>
    %cst_25 = arith.constant dense<0.000000e+00> : vector<16x16xf32>
    %40 = tpu.matmul %37, %38, %cst_25 {dimension_numbers = #tpu.dot_dimension_numbers<[1], [1], [0], [0], [0, 0, 1, 0], [], []>} : vector<16x16xbf16>, vector<16x16xbf16>, vector<16x16xf32> -> vector<16x16xf32>
    %cst_26 = arith.constant dense<0xFF800000> : vector<16xf32>
    %41 = vector.multi_reduction <maximumf>, %40, %cst_26 [1] : vector<16x16xf32> to vector<16xf32>
    %42 = vector.shape_cast %41 : vector<16xf32> to vector<16x1xf32>
    %43 = vector.broadcast %42 : vector<16x1xf32> to vector<16x16xf32>
    %44 = arith.subf %40, %43 : vector<16x16xf32>
    %45 = math.exp %44 : vector<16x16xf32>
    %cst_27 = arith.constant dense<0.000000e+00> : vector<16xf32>
    %46 = vector.multi_reduction <add>, %45, %cst_27 [1] : vector<16x16xf32> to vector<16xf32>
    %47 = vector.shape_cast %46 : vector<16xf32> to vector<16x1xf32>
    %48 = tpu.reciprocal %47 {approx = true} : vector<16x1xf32> -> vector<16x1xf32>
    %49 = vector.broadcast %48 : vector<16x1xf32> to vector<16x16xf32>
    %50 = arith.mulf %45, %49 : vector<16x16xf32>
    %51 = arith.truncf %50 : vector<16x16xf32> to vector<16x16xbf16>
    %cst_28 = arith.constant dense<0.000000e+00> : vector<16x16xf32>
    %52 = tpu.matmul %51, %39, %cst_28 {dimension_numbers = #tpu.dot_dimension_numbers<[1], [0], [0], [1], [0, 0, 1, 1], [], []>} : vector<16x16xbf16>, vector<16x16xbf16>, vector<16x16xf32> -> vector<16x16xf32>
    %53 = arith.truncf %52 : vector<16x16xf32> to vector<16x16xbf16>
    %c1 = arith.constant 1 : index
    %c0_29 = arith.constant 0 : index
    %c0_30 = arith.constant 0 : index
    %54 = vector.load %arg8[%c1, %c0_29, %c0_30] : memref<8x16x128xbf16, #tpu.memory_space<vmem>>, vector<1x16x128xbf16>
    %55 = vector.shape_cast %54 : vector<1x16x128xbf16> to vector<16x128xbf16>
    %cst_31 = arith.constant dense<0.000000e+00> : vector<16x128xf32>
    %56 = tpu.matmul %53, %55, %cst_31 {dimension_numbers = #tpu.dot_dimension_numbers<[1], [0], [0], [1], [0, 0, 1, 1], [], []>} : vector<16x16xbf16>, vector<16x128xbf16>, vector<16x128xf32> -> vector<16x128xf32>
    %57 = arith.addf %36, %56 : vector<16x128xf32>
    %58 = vector.extract_strided_slice %12 {offsets = [0, 32], sizes = [16, 16], strides = [1, 1]} : vector<16x128xbf16> to vector<16x16xbf16>
    %59 = vector.extract_strided_slice %13 {offsets = [0, 32], sizes = [16, 16], strides = [1, 1]} : vector<16x128xbf16> to vector<16x16xbf16>
    %60 = vector.extract_strided_slice %14 {offsets = [0, 32], sizes = [16, 16], strides = [1, 1]} : vector<16x128xbf16> to vector<16x16xbf16>
    %cst_32 = arith.constant dense<0.000000e+00> : vector<16x16xf32>
    %61 = tpu.matmul %58, %59, %cst_32 {dimension_numbers = #tpu.dot_dimension_numbers<[1], [1], [0], [0], [0, 0, 1, 0], [], []>} : vector<16x16xbf16>, vector<16x16xbf16>, vector<16x16xf32> -> vector<16x16xf32>
    %cst_33 = arith.constant dense<0xFF800000> : vector<16xf32>
    %62 = vector.multi_reduction <maximumf>, %61, %cst_33 [1] : vector<16x16xf32> to vector<16xf32>
    %63 = vector.shape_cast %62 : vector<16xf32> to vector<16x1xf32>
    %64 = vector.broadcast %63 : vector<16x1xf32> to vector<16x16xf32>
    %65 = arith.subf %61, %64 : vector<16x16xf32>
    %66 = math.exp %65 : vector<16x16xf32>
    %cst_34 = arith.constant dense<0.000000e+00> : vector<16xf32>
    %67 = vector.multi_reduction <add>, %66, %cst_34 [1] : vector<16x16xf32> to vector<16xf32>
    %68 = vector.shape_cast %67 : vector<16xf32> to vector<16x1xf32>
    %69 = tpu.reciprocal %68 {approx = true} : vector<16x1xf32> -> vector<16x1xf32>
    %70 = vector.broadcast %69 : vector<16x1xf32> to vector<16x16xf32>
    %71 = arith.mulf %66, %70 : vector<16x16xf32>
    %72 = arith.truncf %71 : vector<16x16xf32> to vector<16x16xbf16>
    %cst_35 = arith.constant dense<0.000000e+00> : vector<16x16xf32>
    %73 = tpu.matmul %72, %60, %cst_35 {dimension_numbers = #tpu.dot_dimension_numbers<[1], [0], [0], [1], [0, 0, 1, 1], [], []>} : vector<16x16xbf16>, vector<16x16xbf16>, vector<16x16xf32> -> vector<16x16xf32>
    %74 = arith.truncf %73 : vector<16x16xf32> to vector<16x16xbf16>
    %c2 = arith.constant 2 : index
    %c0_36 = arith.constant 0 : index
    %c0_37 = arith.constant 0 : index
    %75 = vector.load %arg8[%c2, %c0_36, %c0_37] : memref<8x16x128xbf16, #tpu.memory_space<vmem>>, vector<1x16x128xbf16>
    %76 = vector.shape_cast %75 : vector<1x16x128xbf16> to vector<16x128xbf16>
    %cst_38 = arith.constant dense<0.000000e+00> : vector<16x128xf32>
    %77 = tpu.matmul %74, %76, %cst_38 {dimension_numbers = #tpu.dot_dimension_numbers<[1], [0], [0], [1], [0, 0, 1, 1], [], []>} : vector<16x16xbf16>, vector<16x128xbf16>, vector<16x128xf32> -> vector<16x128xf32>
    %78 = arith.addf %57, %77 : vector<16x128xf32>
    %79 = vector.extract_strided_slice %12 {offsets = [0, 48], sizes = [16, 16], strides = [1, 1]} : vector<16x128xbf16> to vector<16x16xbf16>
    %80 = vector.extract_strided_slice %13 {offsets = [0, 48], sizes = [16, 16], strides = [1, 1]} : vector<16x128xbf16> to vector<16x16xbf16>
    %81 = vector.extract_strided_slice %14 {offsets = [0, 48], sizes = [16, 16], strides = [1, 1]} : vector<16x128xbf16> to vector<16x16xbf16>
    %cst_39 = arith.constant dense<0.000000e+00> : vector<16x16xf32>
    %82 = tpu.matmul %79, %80, %cst_39 {dimension_numbers = #tpu.dot_dimension_numbers<[1], [1], [0], [0], [0, 0, 1, 0], [], []>} : vector<16x16xbf16>, vector<16x16xbf16>, vector<16x16xf32> -> vector<16x16xf32>
    %cst_40 = arith.constant dense<0xFF800000> : vector<16xf32>
    %83 = vector.multi_reduction <maximumf>, %82, %cst_40 [1] : vector<16x16xf32> to vector<16xf32>
    %84 = vector.shape_cast %83 : vector<16xf32> to vector<16x1xf32>
    %85 = vector.broadcast %84 : vector<16x1xf32> to vector<16x16xf32>
    %86 = arith.subf %82, %85 : vector<16x16xf32>
    %87 = math.exp %86 : vector<16x16xf32>
    %cst_41 = arith.constant dense<0.000000e+00> : vector<16xf32>
    %88 = vector.multi_reduction <add>, %87, %cst_41 [1] : vector<16x16xf32> to vector<16xf32>
    %89 = vector.shape_cast %88 : vector<16xf32> to vector<16x1xf32>
    %90 = tpu.reciprocal %89 {approx = true} : vector<16x1xf32> -> vector<16x1xf32>
    %91 = vector.broadcast %90 : vector<16x1xf32> to vector<16x16xf32>
    %92 = arith.mulf %87, %91 : vector<16x16xf32>
    %93 = arith.truncf %92 : vector<16x16xf32> to vector<16x16xbf16>
    %cst_42 = arith.constant dense<0.000000e+00> : vector<16x16xf32>
    %94 = tpu.matmul %93, %81, %cst_42 {dimension_numbers = #tpu.dot_dimension_numbers<[1], [0], [0], [1], [0, 0, 1, 1], [], []>} : vector<16x16xbf16>, vector<16x16xbf16>, vector<16x16xf32> -> vector<16x16xf32>
    %95 = arith.truncf %94 : vector<16x16xf32> to vector<16x16xbf16>
    %c3 = arith.constant 3 : index
    %c0_43 = arith.constant 0 : index
    %c0_44 = arith.constant 0 : index
    %96 = vector.load %arg8[%c3, %c0_43, %c0_44] : memref<8x16x128xbf16, #tpu.memory_space<vmem>>, vector<1x16x128xbf16>
    %97 = vector.shape_cast %96 : vector<1x16x128xbf16> to vector<16x128xbf16>
    %cst_45 = arith.constant dense<0.000000e+00> : vector<16x128xf32>
    %98 = tpu.matmul %95, %97, %cst_45 {dimension_numbers = #tpu.dot_dimension_numbers<[1], [0], [0], [1], [0, 0, 1, 1], [], []>} : vector<16x16xbf16>, vector<16x128xbf16>, vector<16x128xf32> -> vector<16x128xf32>
    %99 = arith.addf %78, %98 : vector<16x128xf32>
    %100 = vector.extract_strided_slice %12 {offsets = [0, 64], sizes = [16, 16], strides = [1, 1]} : vector<16x128xbf16> to vector<16x16xbf16>
    %101 = vector.extract_strided_slice %13 {offsets = [0, 64], sizes = [16, 16], strides = [1, 1]} : vector<16x128xbf16> to vector<16x16xbf16>
    %102 = vector.extract_strided_slice %14 {offsets = [0, 64], sizes = [16, 16], strides = [1, 1]} : vector<16x128xbf16> to vector<16x16xbf16>
    %cst_46 = arith.constant dense<0.000000e+00> : vector<16x16xf32>
    %103 = tpu.matmul %100, %101, %cst_46 {dimension_numbers = #tpu.dot_dimension_numbers<[1], [1], [0], [0], [0, 0, 1, 0], [], []>} : vector<16x16xbf16>, vector<16x16xbf16>, vector<16x16xf32> -> vector<16x16xf32>
    %cst_47 = arith.constant dense<0xFF800000> : vector<16xf32>
    %104 = vector.multi_reduction <maximumf>, %103, %cst_47 [1] : vector<16x16xf32> to vector<16xf32>
    %105 = vector.shape_cast %104 : vector<16xf32> to vector<16x1xf32>
    %106 = vector.broadcast %105 : vector<16x1xf32> to vector<16x16xf32>
    %107 = arith.subf %103, %106 : vector<16x16xf32>
    %108 = math.exp %107 : vector<16x16xf32>
    %cst_48 = arith.constant dense<0.000000e+00> : vector<16xf32>
    %109 = vector.multi_reduction <add>, %108, %cst_48 [1] : vector<16x16xf32> to vector<16xf32>
    %110 = vector.shape_cast %109 : vector<16xf32> to vector<16x1xf32>
    %111 = tpu.reciprocal %110 {approx = true} : vector<16x1xf32> -> vector<16x1xf32>
    %112 = vector.broadcast %111 : vector<16x1xf32> to vector<16x16xf32>
    %113 = arith.mulf %108, %112 : vector<16x16xf32>
    %114 = arith.truncf %113 : vector<16x16xf32> to vector<16x16xbf16>
    %cst_49 = arith.constant dense<0.000000e+00> : vector<16x16xf32>
    %115 = tpu.matmul %114, %102, %cst_49 {dimension_numbers = #tpu.dot_dimension_numbers<[1], [0], [0], [1], [0, 0, 1, 1], [], []>} : vector<16x16xbf16>, vector<16x16xbf16>, vector<16x16xf32> -> vector<16x16xf32>
    %116 = arith.truncf %115 : vector<16x16xf32> to vector<16x16xbf16>
    %c4 = arith.constant 4 : index
    %c0_50 = arith.constant 0 : index
    %c0_51 = arith.constant 0 : index
    %117 = vector.load %arg8[%c4, %c0_50, %c0_51] : memref<8x16x128xbf16, #tpu.memory_space<vmem>>, vector<1x16x128xbf16>
    %118 = vector.shape_cast %117 : vector<1x16x128xbf16> to vector<16x128xbf16>
    %cst_52 = arith.constant dense<0.000000e+00> : vector<16x128xf32>
    %119 = tpu.matmul %116, %118, %cst_52 {dimension_numbers = #tpu.dot_dimension_numbers<[1], [0], [0], [1], [0, 0, 1, 1], [], []>} : vector<16x16xbf16>, vector<16x128xbf16>, vector<16x128xf32> -> vector<16x128xf32>
    %120 = arith.addf %99, %119 : vector<16x128xf32>
    %121 = vector.extract_strided_slice %12 {offsets = [0, 80], sizes = [16, 16], strides = [1, 1]} : vector<16x128xbf16> to vector<16x16xbf16>
    %122 = vector.extract_strided_slice %13 {offsets = [0, 80], sizes = [16, 16], strides = [1, 1]} : vector<16x128xbf16> to vector<16x16xbf16>
    %123 = vector.extract_strided_slice %14 {offsets = [0, 80], sizes = [16, 16], strides = [1, 1]} : vector<16x128xbf16> to vector<16x16xbf16>
    %cst_53 = arith.constant dense<0.000000e+00> : vector<16x16xf32>
    %124 = tpu.matmul %121, %122, %cst_53 {dimension_numbers = #tpu.dot_dimension_numbers<[1], [1], [0], [0], [0, 0, 1, 0], [], []>} : vector<16x16xbf16>, vector<16x16xbf16>, vector<16x16xf32> -> vector<16x16xf32>
    %cst_54 = arith.constant dense<0xFF800000> : vector<16xf32>
    %125 = vector.multi_reduction <maximumf>, %124, %cst_54 [1] : vector<16x16xf32> to vector<16xf32>
    %126 = vector.shape_cast %125 : vector<16xf32> to vector<16x1xf32>
    %127 = vector.broadcast %126 : vector<16x1xf32> to vector<16x16xf32>
    %128 = arith.subf %124, %127 : vector<16x16xf32>
    %129 = math.exp %128 : vector<16x16xf32>
    %cst_55 = arith.constant dense<0.000000e+00> : vector<16xf32>
    %130 = vector.multi_reduction <add>, %129, %cst_55 [1] : vector<16x16xf32> to vector<16xf32>
    %131 = vector.shape_cast %130 : vector<16xf32> to vector<16x1xf32>
    %132 = tpu.reciprocal %131 {approx = true} : vector<16x1xf32> -> vector<16x1xf32>
    %133 = vector.broadcast %132 : vector<16x1xf32> to vector<16x16xf32>
    %134 = arith.mulf %129, %133 : vector<16x16xf32>
    %135 = arith.truncf %134 : vector<16x16xf32> to vector<16x16xbf16>
    %cst_56 = arith.constant dense<0.000000e+00> : vector<16x16xf32>
    %136 = tpu.matmul %135, %123, %cst_56 {dimension_numbers = #tpu.dot_dimension_numbers<[1], [0], [0], [1], [0, 0, 1, 1], [], []>} : vector<16x16xbf16>, vector<16x16xbf16>, vector<16x16xf32> -> vector<16x16xf32>
    %137 = arith.truncf %136 : vector<16x16xf32> to vector<16x16xbf16>
    %c5 = arith.constant 5 : index
    %c0_57 = arith.constant 0 : index
    %c0_58 = arith.constant 0 : index
    %138 = vector.load %arg8[%c5, %c0_57, %c0_58] : memref<8x16x128xbf16, #tpu.memory_space<vmem>>, vector<1x16x128xbf16>
    %139 = vector.shape_cast %138 : vector<1x16x128xbf16> to vector<16x128xbf16>
    %cst_59 = arith.constant dense<0.000000e+00> : vector<16x128xf32>
    %140 = tpu.matmul %137, %139, %cst_59 {dimension_numbers = #tpu.dot_dimension_numbers<[1], [0], [0], [1], [0, 0, 1, 1], [], []>} : vector<16x16xbf16>, vector<16x128xbf16>, vector<16x128xf32> -> vector<16x128xf32>
    %141 = arith.addf %120, %140 : vector<16x128xf32>
    %142 = vector.extract_strided_slice %12 {offsets = [0, 96], sizes = [16, 16], strides = [1, 1]} : vector<16x128xbf16> to vector<16x16xbf16>
    %143 = vector.extract_strided_slice %13 {offsets = [0, 96], sizes = [16, 16], strides = [1, 1]} : vector<16x128xbf16> to vector<16x16xbf16>
    %144 = vector.extract_strided_slice %14 {offsets = [0, 96], sizes = [16, 16], strides = [1, 1]} : vector<16x128xbf16> to vector<16x16xbf16>
    %cst_60 = arith.constant dense<0.000000e+00> : vector<16x16xf32>
    %145 = tpu.matmul %142, %143, %cst_60 {dimension_numbers = #tpu.dot_dimension_numbers<[1], [1], [0], [0], [0, 0, 1, 0], [], []>} : vector<16x16xbf16>, vector<16x16xbf16>, vector<16x16xf32> -> vector<16x16xf32>
    %cst_61 = arith.constant dense<0xFF800000> : vector<16xf32>
    %146 = vector.multi_reduction <maximumf>, %145, %cst_61 [1] : vector<16x16xf32> to vector<16xf32>
    %147 = vector.shape_cast %146 : vector<16xf32> to vector<16x1xf32>
    %148 = vector.broadcast %147 : vector<16x1xf32> to vector<16x16xf32>
    %149 = arith.subf %145, %148 : vector<16x16xf32>
    %150 = math.exp %149 : vector<16x16xf32>
    %cst_62 = arith.constant dense<0.000000e+00> : vector<16xf32>
    %151 = vector.multi_reduction <add>, %150, %cst_62 [1] : vector<16x16xf32> to vector<16xf32>
    %152 = vector.shape_cast %151 : vector<16xf32> to vector<16x1xf32>
    %153 = tpu.reciprocal %152 {approx = true} : vector<16x1xf32> -> vector<16x1xf32>
    %154 = vector.broadcast %153 : vector<16x1xf32> to vector<16x16xf32>
    %155 = arith.mulf %150, %154 : vector<16x16xf32>
    %156 = arith.truncf %155 : vector<16x16xf32> to vector<16x16xbf16>
    %cst_63 = arith.constant dense<0.000000e+00> : vector<16x16xf32>
    %157 = tpu.matmul %156, %144, %cst_63 {dimension_numbers = #tpu.dot_dimension_numbers<[1], [0], [0], [1], [0, 0, 1, 1], [], []>} : vector<16x16xbf16>, vector<16x16xbf16>, vector<16x16xf32> -> vector<16x16xf32>
    %158 = arith.truncf %157 : vector<16x16xf32> to vector<16x16xbf16>
    %c6 = arith.constant 6 : index
    %c0_64 = arith.constant 0 : index
    %c0_65 = arith.constant 0 : index
    %159 = vector.load %arg8[%c6, %c0_64, %c0_65] : memref<8x16x128xbf16, #tpu.memory_space<vmem>>, vector<1x16x128xbf16>
    %160 = vector.shape_cast %159 : vector<1x16x128xbf16> to vector<16x128xbf16>
    %cst_66 = arith.constant dense<0.000000e+00> : vector<16x128xf32>
    %161 = tpu.matmul %158, %160, %cst_66 {dimension_numbers = #tpu.dot_dimension_numbers<[1], [0], [0], [1], [0, 0, 1, 1], [], []>} : vector<16x16xbf16>, vector<16x128xbf16>, vector<16x128xf32> -> vector<16x128xf32>
    %162 = arith.addf %141, %161 : vector<16x128xf32>
    %163 = vector.extract_strided_slice %12 {offsets = [0, 112], sizes = [16, 16], strides = [1, 1]} : vector<16x128xbf16> to vector<16x16xbf16>
    %164 = vector.extract_strided_slice %13 {offsets = [0, 112], sizes = [16, 16], strides = [1, 1]} : vector<16x128xbf16> to vector<16x16xbf16>
    %165 = vector.extract_strided_slice %14 {offsets = [0, 112], sizes = [16, 16], strides = [1, 1]} : vector<16x128xbf16> to vector<16x16xbf16>
    %cst_67 = arith.constant dense<0.000000e+00> : vector<16x16xf32>
    %166 = tpu.matmul %163, %164, %cst_67 {dimension_numbers = #tpu.dot_dimension_numbers<[1], [1], [0], [0], [0, 0, 1, 0], [], []>} : vector<16x16xbf16>, vector<16x16xbf16>, vector<16x16xf32> -> vector<16x16xf32>
    %cst_68 = arith.constant dense<0xFF800000> : vector<16xf32>
    %167 = vector.multi_reduction <maximumf>, %166, %cst_68 [1] : vector<16x16xf32> to vector<16xf32>
    %168 = vector.shape_cast %167 : vector<16xf32> to vector<16x1xf32>
    %169 = vector.broadcast %168 : vector<16x1xf32> to vector<16x16xf32>
    %170 = arith.subf %166, %169 : vector<16x16xf32>
    %171 = math.exp %170 : vector<16x16xf32>
    %cst_69 = arith.constant dense<0.000000e+00> : vector<16xf32>
    %172 = vector.multi_reduction <add>, %171, %cst_69 [1] : vector<16x16xf32> to vector<16xf32>
    %173 = vector.shape_cast %172 : vector<16xf32> to vector<16x1xf32>
    %174 = tpu.reciprocal %173 {approx = true} : vector<16x1xf32> -> vector<16x1xf32>
    %175 = vector.broadcast %174 : vector<16x1xf32> to vector<16x16xf32>
    %176 = arith.mulf %171, %175 : vector<16x16xf32>
    %177 = arith.truncf %176 : vector<16x16xf32> to vector<16x16xbf16>
    %cst_70 = arith.constant dense<0.000000e+00> : vector<16x16xf32>
    %178 = tpu.matmul %177, %165, %cst_70 {dimension_numbers = #tpu.dot_dimension_numbers<[1], [0], [0], [1], [0, 0, 1, 1], [], []>} : vector<16x16xbf16>, vector<16x16xbf16>, vector<16x16xf32> -> vector<16x16xf32>
    %179 = arith.truncf %178 : vector<16x16xf32> to vector<16x16xbf16>
    %c7 = arith.constant 7 : index
    %c0_71 = arith.constant 0 : index
    %c0_72 = arith.constant 0 : index
    %180 = vector.load %arg8[%c7, %c0_71, %c0_72] : memref<8x16x128xbf16, #tpu.memory_space<vmem>>, vector<1x16x128xbf16>
    %181 = vector.shape_cast %180 : vector<1x16x128xbf16> to vector<16x128xbf16>
    %cst_73 = arith.constant dense<0.000000e+00> : vector<16x128xf32>
    %182 = tpu.matmul %179, %181, %cst_73 {dimension_numbers = #tpu.dot_dimension_numbers<[1], [0], [0], [1], [0, 0, 1, 1], [], []>} : vector<16x16xbf16>, vector<16x128xbf16>, vector<16x128xf32> -> vector<16x128xf32>
    %183 = arith.addf %162, %182 : vector<16x128xf32>
    %c0_74 = arith.constant 0 : index
    %c0_75 = arith.constant 0 : index
    %184 = vector.load %arg9[%c0_74, %c0_75] : memref<1x128xf32, #tpu.memory_space<vmem>>, vector<1x128xf32>
    %185 = vector.broadcast %184 : vector<1x128xf32> to vector<16x128xf32>
    %186 = arith.addf %183, %185 : vector<16x128xf32>
    %c0_76 = arith.constant 0 : index
    %c0_77 = arith.constant 0 : index
    %c0_78 = arith.constant 0 : index
    %187 = vector.load %arg10[%c0_76, %c0_77, %c0_78] : memref<1x16x128xf32, #tpu.memory_space<vmem>>, vector<1x16x128xf32>
    %188 = vector.shape_cast %187 : vector<1x16x128xf32> to vector<16x128xf32>
    %189 = vector.shape_cast %186 : vector<16x128xf32> to vector<1x16x128xf32>
    tpu.vector_store %arg10[%c0_76, %c0_77, %c0_78], %189 {strides = array<i32>} : memref<1x16x128xf32, #tpu.memory_space<vmem>>, vector<1x16x128xf32>,
    return
  }
  func.func @transform_0(%arg0: i32, %arg1: i32) -> (i32, i32, i32) {
    %c0_i32 = arith.constant 0 : i32
    %c0_i32_0 = arith.constant 0 : i32
    return %arg0, %arg1, %c0_i32 : i32, i32, i32
  }
  func.func @transform_1(%arg0: i32, %arg1: i32) -> (i32, i32, i32) {
    %c0_i32 = arith.constant 0 : i32
    %c0_i32_0 = arith.constant 0 : i32
    %c0_i32_1 = arith.constant 0 : i32
    return %arg0, %c0_i32, %c0_i32_0 : i32, i32, i32
  }
  func.func @transform_2(%arg0: i32, %arg1: i32) -> (i32, i32, i32) {
    %c0_i32 = arith.constant 0 : i32
    %c0_i32_0 = arith.constant 0 : i32
    %c0_i32_1 = arith.constant 0 : i32
    return %arg0, %c0_i32, %c0_i32_0 : i32, i32, i32
  }
  func.func @transform_3(%arg0: i32, %arg1: i32) -> (i32, i32) {
    %c0_i32 = arith.constant 0 : i32
    %c0_i32_0 = arith.constant 0 : i32
    %c0_i32_1 = arith.constant 0 : i32
    return %c0_i32, %c0_i32_0 : i32, i32
  }
  func.func @transform_4(%arg0: i32, %arg1: i32) -> (i32, i32) {
    %c0_i32 = arith.constant 0 : i32
    %c0_i32_0 = arith.constant 0 : i32
    %c0_i32_1 = arith.constant 0 : i32
    return %c0_i32, %c0_i32_0 : i32, i32
  }
  func.func @transform_5(%arg0: i32, %arg1: i32) -> (i32, i32) {
    %c0_i32 = arith.constant 0 : i32
    %c0_i32_0 = arith.constant 0 : i32
    %c0_i32_1 = arith.constant 0 : i32
    return %c0_i32, %c0_i32_0 : i32, i32
  }
  func.func @transform_6(%arg0: i32, %arg1: i32) -> (i32, i32, i32) {
    %c0_i32 = arith.constant 0 : i32
    %c0_i32_0 = arith.constant 0 : i32
    %c0_i32_1 = arith.constant 0 : i32
    %c0_i32_2 = arith.constant 0 : i32
    return %c0_i32, %c0_i32_0, %c0_i32_1 : i32, i32, i32
  }
  func.func @transform_7(%arg0: i32, %arg1: i32) -> (i32, i32) {
    %c0_i32 = arith.constant 0 : i32
    %c0_i32_0 = arith.constant 0 : i32
    %c0_i32_1 = arith.constant 0 : i32
    return %c0_i32, %c0_i32_0 : i32, i32
  }
  func.func @transform_8(%arg0: i32, %arg1: i32) -> (i32, i32, i32) {
    %c0_i32 = arith.constant 0 : i32
    %c0_i32_0 = arith.constant 0 : i32
    return %arg0, %arg1, %c0_i32 : i32, i32, i32
  }
}

module attributes {stable_mosaic.version = 11 : i64} {
  func.func @_attention_kernel(%arg0: i32, %arg1: i32, %arg2: memref<1x16x128xbf16, #tpu.memory_space<vmem>>, %arg3: memref<1x16x128xbf16, #tpu.memory_space<vmem>>, %arg4: memref<1x16x128xbf16, #tpu.memory_space<vmem>>, %arg5: memref<128x128xbf16, #tpu.memory_space<vmem>>, %arg6: memref<128x128xbf16, #tpu.memory_space<vmem>>, %arg7: memref<128x128xbf16, #tpu.memory_space<vmem>>, %arg8: memref<8x16x128xbf16, #tpu.memory_space<vmem>>, %arg9: memref<1x128xf32, #tpu.memory_space<vmem>>, %arg10: memref<1x16x128xf32, #tpu.memory_space<vmem>>) attributes {dimension_semantics = [#tpu.dimension_semantics<parallel>, #tpu.dimension_semantics<parallel>], iteration_bounds = array<i64: 2, 2>, scalar_prefetch = 0 : i64, scratch_operands = 0 : i64, tpu.core_type = #tpu.core_type<tc>, window_params = [{transform_indices = @transform_0, window_bounds = array<i64: 1, 16, 128>}, {transform_indices = @transform_1, window_bounds = array<i64: 1, 16, 128>}, {transform_indices = @transform_2, window_bounds = array<i64: 1, 16, 128>}, {pipeline_mode = #tpu.pipeline_mode<synchronous>, transform_indices = @transform_3, window_bounds = array<i64: 128, 128>}, {pipeline_mode = #tpu.pipeline_mode<synchronous>, transform_indices = @transform_4, window_bounds = array<i64: 128, 128>}, {pipeline_mode = #tpu.pipeline_mode<synchronous>, transform_indices = @transform_5, window_bounds = array<i64: 128, 128>}, {pipeline_mode = #tpu.pipeline_mode<synchronous>, transform_indices = @transform_6, window_bounds = array<i64: 8, 16, 128>}, {pipeline_mode = #tpu.pipeline_mode<synchronous>, transform_indices = @transform_7, window_bounds = array<i64: 1, 128>}, {transform_indices = @transform_8, window_bounds = array<i64: 1, 16, 128>}]} {
    %c0 = arith.constant 0 : index
    %c0_0 = arith.constant 0 : index
    %c0_1 = arith.constant 0 : index
    %0 = vector.load %arg2[%c0, %c0_0, %c0_1] : memref<1x16x128xbf16, #tpu.memory_space<vmem>>, vector<1x16x128xbf16>
    %1 = vector.shape_cast %0 : vector<1x16x128xbf16> to vector<16x128xbf16>
    %c0_2 = arith.constant 0 : index
    %c0_3 = arith.constant 0 : index
    %c0_4 = arith.constant 0 : index
    %2 = vector.load %arg3[%c0_2, %c0_3, %c0_4] : memref<1x16x128xbf16, #tpu.memory_space<vmem>>, vector<1x16x128xbf16>
    %3 = vector.shape_cast %2 : vector<1x16x128xbf16> to vector<16x128xbf16>
    %c0_5 = arith.constant 0 : index
    %c0_6 = arith.constant 0 : index
    %c0_7 = arith.constant 0 : index
    %4 = vector.load %arg4[%c0_5, %c0_6, %c0_7] : memref<1x16x128xbf16, #tpu.memory_space<vmem>>, vector<1x16x128xbf16>
    %5 = vector.shape_cast %4 : vector<1x16x128xbf16> to vector<16x128xbf16>
    %c0_8 = arith.constant 0 : index
    %c0_9 = arith.constant 0 : index
    %6 = vector.load %arg5[%c0_8, %c0_9] : memref<128x128xbf16, #tpu.memory_space<vmem>>, vector<128x128xbf16>
    %cst = arith.constant dense<0.000000e+00> : vector<16x128xf32>
    %7 = tpu.matmul %1, %6, %cst {dimension_numbers = #tpu.dot_dimension_numbers<[1], [0], [0], [1], [0, 0, 1, 1], [], []>} : vector<16x128xbf16>, vector<128x128xbf16>, vector<16x128xf32> -> vector<16x128xf32>
    %c0_10 = arith.constant 0 : index
    %c0_11 = arith.constant 0 : index
    %8 = vector.load %arg6[%c0_10, %c0_11] : memref<128x128xbf16, #tpu.memory_space<vmem>>, vector<128x128xbf16>
    %cst_12 = arith.constant dense<0.000000e+00> : vector<16x128xf32>
    %9 = tpu.matmul %3, %8, %cst_12 {dimension_numbers = #tpu.dot_dimension_numbers<[1], [0], [0], [1], [0, 0, 1, 1], [], []>} : vector<16x128xbf16>, vector<128x128xbf16>, vector<16x128xf32> -> vector<16x128xf32>
    %c0_13 = arith.constant 0 : index
    %c0_14 = arith.constant 0 : index
    %10 = vector.load %arg7[%c0_13, %c0_14] : memref<128x128xbf16, #tpu.memory_space<vmem>>, vector<128x128xbf16>
    %cst_15 = arith.constant dense<0.000000e+00> : vector<16x128xf32>
    %11 = tpu.matmul %5, %10, %cst_15 {dimension_numbers = #tpu.dot_dimension_numbers<[1], [0], [0], [1], [0, 0, 1, 1], [], []>} : vector<16x128xbf16>, vector<128x128xbf16>, vector<16x128xf32> -> vector<16x128xf32>
    %12 = arith.truncf %7 : vector<16x128xf32> to vector<16x128xbf16>
    %13 = arith.truncf %9 : vector<16x128xf32> to vector<16x128xbf16>
    %14 = arith.truncf %11 : vector<16x128xf32> to vector<16x128xbf16>
    %cst_16 = arith.constant 0.000000e+00 : f32
    %15 = vector.broadcast %cst_16 : f32 to vector<16x128xf32>
    %16 = vector.extract_strided_slice %12 {offsets = [0, 0], sizes = [16, 16], strides = [1, 1]} : vector<16x128xbf16> to vector<16x16xbf16>
    %17 = vector.extract_strided_slice %13 {offsets = [0, 0], sizes = [16, 16], strides = [1, 1]} : vector<16x128xbf16> to vector<16x16xbf16>
    %18 = vector.extract_strided_slice %14 {offsets = [0, 0], sizes = [16, 16], strides = [1, 1]} : vector<16x128xbf16> to vector<16x16xbf16>
    %cst_17 = arith.constant dense<0.000000e+00> : vector<16x16xf32>
    %19 = tpu.matmul %16, %17, %cst_17 {dimension_numbers = #tpu.dot_dimension_numbers<[1], [1], [0], [0], [0, 0, 1, 0], [], []>} : vector<16x16xbf16>, vector<16x16xbf16>, vector<16x16xf32> -> vector<16x16xf32>
    %cst_18 = arith.constant dense<0xFF800000> : vector<16xf32>
    %20 = vector.multi_reduction <maximumf>, %19, %cst_18 [1] : vector<16x16xf32> to vector<16xf32>
    %21 = vector.shape_cast %20 : vector<16xf32> to vector<16x1xf32>
    %22 = vector.broadcast %21 : vector<16x1xf32> to vector<16x16xf32>
    %23 = arith.subf %19, %22 : vector<16x16xf32>
    %24 = math.exp %23 : vector<16x16xf32>
    %cst_19 = arith.constant dense<0.000000e+00> : vector<16xf32>
    %25 = vector.multi_reduction <add>, %24, %cst_19 [1] : vector<16x16xf32> to vector<16xf32>
    %26 = vector.shape_cast %25 : vector<16xf32> to vector<16x1xf32>
    %27 = tpu.reciprocal %26 {approx = true} : vector<16x1xf32> -> vector<16x1xf32>
    %28 = vector.broadcast %27 : vector<16x1xf32> to vector<16x16xf32>
    %29 = arith.mulf %24, %28 : vector<16x16xf32>
    %30 = arith.truncf %29 : vector<16x16xf32> to vector<16x16xbf16>
    %cst_20 = arith.constant dense<0.000000e+00> : vector<16x16xf32>
    %31 = tpu.matmul %30, %18, %cst_20 {dimension_numbers = #tpu.dot_dimension_numbers<[1], [0], [0], [1], [0, 0, 1, 1], [], []>} : vector<16x16xbf16>, vector<16x16xbf16>, vector<16x16xf32> -> vector<16x16xf32>
    %32 = arith.truncf %31 : vector<16x16xf32> to vector<16x16xbf16>
    %c0_21 = arith.constant 0 : index
    %c0_22 = arith.constant 0 : index
    %c0_23 = arith.constant 0 : index
    %33 = vector.load %arg8[%c0_21, %c0_22, %c0_23] : memref<8x16x128xbf16, #tpu.memory_space<vmem>>, vector<1x16x128xbf16>
    %34 = vector.shape_cast %33 : vector<1x16x128xbf16> to vector<16x128xbf16>
    %cst_24 = arith.constant dense<0.000000e+00> : vector<16x128xf32>
    %35 = tpu.matmul %32, %34, %cst_24 {dimension_numbers = #tpu.dot_dimension_numbers<[1], [0], [0], [1], [0, 0, 1, 1], [], []>} : vector<16x16xbf16>, vector<16x128xbf16>, vector<16x128xf32> -> vector<16x128xf32>
    %36 = arith.addf %15, %35 : vector<16x128xf32>
    %37 = vector.extract_strided_slice %12 {offsets = [0, 16], sizes = [16, 16], strides = [1, 1]} : vector<16x128xbf16> to vector<16x16xbf16>
    %38 = vector.extract_strided_slice %13 {offsets = [0, 16], sizes = [16, 16], strides = [1, 1]} : vector<16x128xbf16> to vector<16x16xbf16>
    %39 = vector.extract_strided_slice %14 {offsets = [0, 16], sizes = [16, 16], strides = [1, 1]} : vector<16x128xbf16> to vector<16x16xbf16>
    %cst_25 = arith.constant dense<0.000000e+00> : vector<16x16xf32>
    %40 = tpu.matmul %37, %38, %cst_25 {dimension_numbers = #tpu.dot_dimension_numbers<[1], [1], [0], [0], [0, 0, 1, 0], [], []>} : vector<16x16xbf16>, vector<16x16xbf16>, vector<16x16xf32> -> vector<16x16xf32>
    %cst_26 = arith.constant dense<0xFF800000> : vector<16xf32>
    %41 = vector.multi_reduction <maximumf>, %40, %cst_26 [1] : vector<16x16xf32> to vector<16xf32>
    %42 = vector.shape_cast %41 : vector<16xf32> to vector<16x1xf32>
    %43 = vector.broadcast %42 : vector<16x1xf32> to vector<16x16xf32>
    %44 = arith.subf %40, %43 : vector<16x16xf32>
    %45 = math.exp %44 : vector<16x16xf32>
    %cst_27 = arith.constant dense<0.000000e+00> : vector<16xf32>
    %46 = vector.multi_reduction <add>, %45, %cst_27 [1] : vector<16x16xf32> to vector<16xf32>
    %47 = vector.shape_cast %46 : vector<16xf32> to vector<16x1xf32>
    %48 = tpu.reciprocal %47 {approx = true} : vector<16x1xf32> -> vector<16x1xf32>
    %49 = vector.broadcast %48 : vector<16x1xf32> to vector<16x16xf32>
    %50 = arith.mulf %45, %49 : vector<16x16xf32>
    %51 = arith.truncf %50 : vector<16x16xf32> to vector<16x16xbf16>
    %cst_28 = arith.constant dense<0.000000e+00> : vector<16x16xf32>
    %52 = tpu.matmul %51, %39, %cst_28 {dimension_numbers = #tpu.dot_dimension_numbers<[1], [0], [0], [1], [0, 0, 1, 1], [], []>} : vector<16x16xbf16>, vector<16x16xbf16>, vector<16x16xf32> -> vector<16x16xf32>
    %53 = arith.truncf %52 : vector<16x16xf32> to vector<16x16xbf16>
    %c1 = arith.constant 1 : index
    %c0_29 = arith.constant 0 : index
    %c0_30 = arith.constant 0 : index
    %54 = vector.load %arg8[%c1, %c0_29, %c0_30] : memref<8x16x128xbf16, #tpu.memory_space<vmem>>, vector<1x16x128xbf16>
    %55 = vector.shape_cast %54 : vector<1x16x128xbf16> to vector<16x128xbf16>
    %cst_31 = arith.constant dense<0.000000e+00> : vector<16x128xf32>
    %56 = tpu.matmul %53, %55, %cst_31 {dimension_numbers = #tpu.dot_dimension_numbers<[1], [0], [0], [1], [0, 0, 1, 1], [], []>} : vector<16x16xbf16>, vector<16x128xbf16>, vector<16x128xf32> -> vector<16x128xf32>
    %57 = arith.addf %36, %56 : vector<16x128xf32>
    %58 = vector.extract_strided_slice %12 {offsets = [0, 32], sizes = [16, 16], strides = [1, 1]} : vector<16x128xbf16> to vector<16x16xbf16>
    %59 = vector.extract_strided_slice %13 {offsets = [0, 32], sizes = [16, 16], strides = [1, 1]} : vector<16x128xbf16> to vector<16x16xbf16>
    %60 = vector.extract_strided_slice %14 {offsets = [0, 32], sizes = [16, 16], strides = [1, 1]} : vector<16x128xbf16> to vector<16x16xbf16>
    %cst_32 = arith.constant dense<0.000000e+00> : vector<16x16xf32>
    %61 = tpu.matmul %58, %59, %cst_32 {dimension_numbers = #tpu.dot_dimension_numbers<[1], [1], [0], [0], [0, 0, 1, 0], [], []>} : vector<16x16xbf16>, vector<16x16xbf16>, vector<16x16xf32> -> vector<16x16xf32>
    %cst_33 = arith.constant dense<0xFF800000> : vector<16xf32>
    %62 = vector.multi_reduction <maximumf>, %61, %cst_33 [1] : vector<16x16xf32> to vector<16xf32>
    %63 = vector.shape_cast %62 : vector<16xf32> to vector<16x1xf32>
    %64 = vector.broadcast %63 : vector<16x1xf32> to vector<16x16xf32>
    %65 = arith.subf %61, %64 : vector<16x16xf32>
    %66 = math.exp %65 : vector<16x16xf32>
    %cst_34 = arith.constant dense<0.000000e+00> : vector<16xf32>
    %67 = vector.multi_reduction <add>, %66, %cst_34 [1] : vector<16x16xf32> to vector<16xf32>
    %68 = vector.shape_cast %67 : vector<16xf32> to vector<16x1xf32>
    %69 = tpu.reciprocal %68 {approx = true} : vector<16x1xf32> -> vector<16x1xf32>
    %70 = vector.broadcast %69 : vector<16x1xf32> to vector<16x16xf32>
    %71 = arith.mulf %66, %70 : vector<16x16xf32>
    %72 = arith.truncf %71 : vector<16x16xf32> to vector<16x16xbf16>
    %cst_35 = arith.constant dense<0.000000e+00> : vector<16x16xf32>
    %73 = tpu.matmul %72, %60, %cst_35 {dimension_numbers = #tpu.dot_dimension_numbers<[1], [0], [0], [1], [0, 0, 1, 1], [], []>} : vector<16x16xbf16>, vector<16x16xbf16>, vector<16x16xf32> -> vector<16x16xf32>
    %74 = arith.truncf %73 : vector<16x16xf32> to vector<16x16xbf16>
    %c2 = arith.constant 2 : index
    %c0_36 = arith.constant 0 : index
    %c0_37 = arith.constant 0 : index
    %75 = vector.load %arg8[%c2, %c0_36, %c0_37] : memref<8x16x128xbf16, #tpu.memory_space<vmem>>, vector<1x16x128xbf16>
    %76 = vector.shape_cast %75 : vector<1x16x128xbf16> to vector<16x128xbf16>
    %cst_38 = arith.constant dense<0.000000e+00> : vector<16x128xf32>
    %77 = tpu.matmul %74, %76, %cst_38 {dimension_numbers = #tpu.dot_dimension_numbers<[1], [0], [0], [1], [0, 0, 1, 1], [], []>} : vector<16x16xbf16>, vector<16x128xbf16>, vector<16x128xf32> -> vector<16x128xf32>
    %78 = arith.addf %57, %77 : vector<16x128xf32>
    %79 = vector.extract_strided_slice %12 {offsets = [0, 48], sizes = [16, 16], strides = [1, 1]} : vector<16x128xbf16> to vector<16x16xbf16>
    %80 = vector.extract_strided_slice %13 {offsets = [0, 48], sizes = [16, 16], strides = [1, 1]} : vector<16x128xbf16> to vector<16x16xbf16>
    %81 = vector.extract_strided_slice %14 {offsets = [0, 48], sizes = [16, 16], strides = [1, 1]} : vector<16x128xbf16> to vector<16x16xbf16>
    %cst_39 = arith.constant dense<0.000000e+00> : vector<16x16xf32>
    %82 = tpu.matmul %79, %80, %cst_39 {dimension_numbers = #tpu.dot_dimension_numbers<[1], [1], [0], [0], [0, 0, 1, 0], [], []>} : vector<16x16xbf16>, vector<16x16xbf16>, vector<16x16xf32> -> vector<16x16xf32>
    %cst_40 = arith.constant dense<0xFF800000> : vector<16xf32>
    %83 = vector.multi_reduction <maximumf>, %82, %cst_40 [1] : vector<16x16xf32> to vector<16xf32>
    %84 = vector.shape_cast %83 : vector<16xf32> to vector<16x1xf32>
    %85 = vector.broadcast %84 : vector<16x1xf32> to vector<16x16xf32>
    %86 = arith.subf %82, %85 : vector<16x16xf32>
    %87 = math.exp %86 : vector<16x16xf32>
    %cst_41 = arith.constant dense<0.000000e+00> : vector<16xf32>
    %88 = vector.multi_reduction <add>, %87, %cst_41 [1] : vector<16x16xf32> to vector<16xf32>
    %89 = vector.shape_cast %88 : vector<16xf32> to vector<16x1xf32>
    %90 = tpu.reciprocal %89 {approx = true} : vector<16x1xf32> -> vector<16x1xf32>
    %91 = vector.broadcast %90 : vector<16x1xf32> to vector<16x16xf32>
    %92 = arith.mulf %87, %91 : vector<16x16xf32>
    %93 = arith.truncf %92 : vector<16x16xf32> to vector<16x16xbf16>
    %cst_42 = arith.constant dense<0.000000e+00> : vector<16x16xf32>
    %94 = tpu.matmul %93, %81, %cst_42 {dimension_numbers = #tpu.dot_dimension_numbers<[1], [0], [0], [1], [0, 0, 1, 1], [], []>} : vector<16x16xbf16>, vector<16x16xbf16>, vector<16x16xf32> -> vector<16x16xf32>
    %95 = arith.truncf %94 : vector<16x16xf32> to vector<16x16xbf16>
    %c3 = arith.constant 3 : index
    %c0_43 = arith.constant 0 : index
    %c0_44 = arith.constant 0 : index
    %96 = vector.load %arg8[%c3, %c0_43, %c0_44] : memref<8x16x128xbf16, #tpu.memory_space<vmem>>, vector<1x16x128xbf16>
    %97 = vector.shape_cast %96 : vector<1x16x128xbf16> to vector<16x128xbf16>
    %cst_45 = arith.constant dense<0.000000e+00> : vector<16x128xf32>
    %98 = tpu.matmul %95, %97, %cst_45 {dimension_numbers = #tpu.dot_dimension_numbers<[1], [0], [0], [1], [0, 0, 1, 1], [], []>} : vector<16x16xbf16>, vector<16x128xbf16>, vector<16x128xf32> -> vector<16x128xf32>
    %99 = arith.addf %78, %98 : vector<16x128xf32>
    %100 = vector.extract_strided_slice %12 {offsets = [0, 64], sizes = [16, 16], strides = [1, 1]} : vector<16x128xbf16> to vector<16x16xbf16>
    %101 = vector.extract_strided_slice %13 {offsets = [0, 64], sizes = [16, 16], strides = [1, 1]} : vector<16x128xbf16> to vector<16x16xbf16>
    %102 = vector.extract_strided_slice %14 {offsets = [0, 64], sizes = [16, 16], strides = [1, 1]} : vector<16x128xbf16> to vector<16x16xbf16>
    %cst_46 = arith.constant dense<0.000000e+00> : vector<16x16xf32>
    %103 = tpu.matmul %100, %101, %cst_46 {dimension_numbers = #tpu.dot_dimension_numbers<[1], [1], [0], [0], [0, 0, 1, 0], [], []>} : vector<16x16xbf16>, vector<16x16xbf16>, vector<16x16xf32> -> vector<16x16xf32>
    %cst_47 = arith.constant dense<0xFF800000> : vector<16xf32>
    %104 = vector.multi_reduction <maximumf>, %103, %cst_47 [1] : vector<16x16xf32> to vector<16xf32>
    %105 = vector.shape_cast %104 : vector<16xf32> to vector<16x1xf32>
    %106 = vector.broadcast %105 : vector<16x1xf32> to vector<16x16xf32>
    %107 = arith.subf %103, %106 : vector<16x16xf32>
    %108 = math.exp %107 : vector<16x16xf32>
    %cst_48 = arith.constant dense<0.000000e+00> : vector<16xf32>
    %109 = vector.multi_reduction <add>, %108, %cst_48 [1] : vector<16x16xf32> to vector<16xf32>
    %110 = vector.shape_cast %109 : vector<16xf32> to vector<16x1xf32>
    %111 = tpu.reciprocal %110 {approx = true} : vector<16x1xf32> -> vector<16x1xf32>
    %112 = vector.broadcast %111 : vector<16x1xf32> to vector<16x16xf32>
    %113 = arith.mulf %108, %112 : vector<16x16xf32>
    %114 = arith.truncf %113 : vector<16x16xf32> to vector<16x16xbf16>
    %cst_49 = arith.constant dense<0.000000e+00> : vector<16x16xf32>
    %115 = tpu.matmul %114, %102, %cst_49 {dimension_numbers = #tpu.dot_dimension_numbers<[1], [0], [0], [1], [0, 0, 1, 1], [], []>} : vector<16x16xbf16>, vector<16x16xbf16>, vector<16x16xf32> -> vector<16x16xf32>
    %116 = arith.truncf %115 : vector<16x16xf32> to vector<16x16xbf16>
    %c4 = arith.constant 4 : index
    %c0_50 = arith.constant 0 : index
    %c0_51 = arith.constant 0 : index
    %117 = vector.load %arg8[%c4, %c0_50, %c0_51] : memref<8x16x128xbf16, #tpu.memory_space<vmem>>, vector<1x16x128xbf16>
    %118 = vector.shape_cast %117 : vector<1x16x128xbf16> to vector<16x128xbf16>
    %cst_52 = arith.constant dense<0.000000e+00> : vector<16x128xf32>
    %119 = tpu.matmul %116, %118, %cst_52 {dimension_numbers = #tpu.dot_dimension_numbers<[1], [0], [0], [1], [0, 0, 1, 1], [], []>} : vector<16x16xbf16>, vector<16x128xbf16>, vector<16x128xf32> -> vector<16x128xf32>
    %120 = arith.addf %99, %119 : vector<16x128xf32>
    %121 = vector.extract_strided_slice %12 {offsets = [0, 80], sizes = [16, 16], strides = [1, 1]} : vector<16x128xbf16> to vector<16x16xbf16>
    %122 = vector.extract_strided_slice %13 {offsets = [0, 80], sizes = [16, 16], strides = [1, 1]} : vector<16x128xbf16> to vector<16x16xbf16>
    %123 = vector.extract_strided_slice %14 {offsets = [0, 80], sizes = [16, 16], strides = [1, 1]} : vector<16x128xbf16> to vector<16x16xbf16>
    %cst_53 = arith.constant dense<0.000000e+00> : vector<16x16xf32>
    %124 = tpu.matmul %121, %122, %cst_53 {dimension_numbers = #tpu.dot_dimension_numbers<[1], [1], [0], [0], [0, 0, 1, 0], [], []>} : vector<16x16xbf16>, vector<16x16xbf16>, vector<16x16xf32> -> vector<16x16xf32>
    %cst_54 = arith.constant dense<0xFF800000> : vector<16xf32>
    %125 = vector.multi_reduction <maximumf>, %124, %cst_54 [1] : vector<16x16xf32> to vector<16xf32>
    %126 = vector.shape_cast %125 : vector<16xf32> to vector<16x1xf32>
    %127 = vector.broadcast %126 : vector<16x1xf32> to vector<16x16xf32>
    %128 = arith.subf %124, %127 : vector<16x16xf32>
    %129 = math.exp %128 : vector<16x16xf32>
    %cst_55 = arith.constant dense<0.000000e+00> : vector<16xf32>
    %130 = vector.multi_reduction <add>, %129, %cst_55 [1] : vector<16x16xf32> to vector<16xf32>
    %131 = vector.shape_cast %130 : vector<16xf32> to vector<16x1xf32>
    %132 = tpu.reciprocal %131 {approx = true} : vector<16x1xf32> -> vector<16x1xf32>
    %133 = vector.broadcast %132 : vector<16x1xf32> to vector<16x16xf32>
    %134 = arith.mulf %129, %133 : vector<16x16xf32>
    %135 = arith.truncf %134 : vector<16x16xf32> to vector<16x16xbf16>
    %cst_56 = arith.constant dense<0.000000e+00> : vector<16x16xf32>
    %136 = tpu.matmul %135, %123, %cst_56 {dimension_numbers = #tpu.dot_dimension_numbers<[1], [0], [0], [1], [0, 0, 1, 1], [], []>} : vector<16x16xbf16>, vector<16x16xbf16>, vector<16x16xf32> -> vector<16x16xf32>
    %137 = arith.truncf %136 : vector<16x16xf32> to vector<16x16xbf16>
    %c5 = arith.constant 5 : index
    %c0_57 = arith.constant 0 : index
    %c0_58 = arith.constant 0 : index
    %138 = vector.load %arg8[%c5, %c0_57, %c0_58] : memref<8x16x128xbf16, #tpu.memory_space<vmem>>, vector<1x16x128xbf16>
    %139 = vector.shape_cast %138 : vector<1x16x128xbf16> to vector<16x128xbf16>
    %cst_59 = arith.constant dense<0.000000e+00> : vector<16x128xf32>
    %140 = tpu.matmul %137, %139, %cst_59 {dimension_numbers = #tpu.dot_dimension_numbers<[1], [0], [0], [1], [0, 0, 1, 1], [], []>} : vector<16x16xbf16>, vector<16x128xbf16>, vector<16x128xf32> -> vector<16x128xf32>
    %141 = arith.addf %120, %140 : vector<16x128xf32>
    %142 = vector.extract_strided_slice %12 {offsets = [0, 96], sizes = [16, 16], strides = [1, 1]} : vector<16x128xbf16> to vector<16x16xbf16>
    %143 = vector.extract_strided_slice %13 {offsets = [0, 96], sizes = [16, 16], strides = [1, 1]} : vector<16x128xbf16> to vector<16x16xbf16>
    %144 = vector.extract_strided_slice %14 {offsets = [0, 96], sizes = [16, 16], strides = [1, 1]} : vector<16x128xbf16> to vector<16x16xbf16>
    %cst_60 = arith.constant dense<0.000000e+00> : vector<16x16xf32>
    %145 = tpu.matmul %142, %143, %cst_60 {dimension_numbers = #tpu.dot_dimension_numbers<[1], [1], [0], [0], [0, 0, 1, 0], [], []>} : vector<16x16xbf16>, vector<16x16xbf16>, vector<16x16xf32> -> vector<16x16xf32>
    %cst_61 = arith.constant dense<0xFF800000> : vector<16xf32>
    %146 = vector.multi_reduction <maximumf>, %145, %cst_61 [1] : vector<16x16xf32> to vector<16xf32>
    %147 = vector.shape_cast %146 : vector<16xf32> to vector<16x1xf32>
    %148 = vector.broadcast %147 : vector<16x1xf32> to vector<16x16xf32>
    %149 = arith.subf %145, %148 : vector<16x16xf32>
    %150 = math.exp %149 : vector<16x16xf32>
    %cst_62 = arith.constant dense<0.000000e+00> : vector<16xf32>
    %151 = vector.multi_reduction <add>, %150, %cst_62 [1] : vector<16x16xf32> to vector<16xf32>
    %152 = vector.shape_cast %151 : vector<16xf32> to vector<16x1xf32>
    %153 = tpu.reciprocal %152 {approx = true} : vector<16x1xf32> -> vector<16x1xf32>
    %154 = vector.broadcast %153 : vector<16x1xf32> to vector<16x16xf32>
    %155 = arith.mulf %150, %154 : vector<16x16xf32>
    %156 = arith.truncf %155 : vector<16x16xf32> to vector<16x16xbf16>
    %cst_63 = arith.constant dense<0.000000e+00> : vector<16x16xf32>
    %157 = tpu.matmul %156, %144, %cst_63 {dimension_numbers = #tpu.dot_dimension_numbers<[1], [0], [0], [1], [0, 0, 1, 1], [], []>} : vector<16x16xbf16>, vector<16x16xbf16>, vector<16x16xf32> -> vector<16x16xf32>
    %158 = arith.truncf %157 : vector<16x16xf32> to vector<16x16xbf16>
    %c6 = arith.constant 6 : index
    %c0_64 = arith.constant 0 : index
    %c0_65 = arith.constant 0 : index
    %159 = vector.load %arg8[%c6, %c0_64, %c0_65] : memref<8x16x128xbf16, #tpu.memory_space<vmem>>, vector<1x16x128xbf16>
    %160 = vector.shape_cast %159 : vector<1x16x128xbf16> to vector<16x128xbf16>
    %cst_66 = arith.constant dense<0.000000e+00> : vector<16x128xf32>
    %161 = tpu.matmul %158, %160, %cst_66 {dimension_numbers = #tpu.dot_dimension_numbers<[1], [0], [0], [1], [0, 0, 1, 1], [], []>} : vector<16x16xbf16>, vector<16x128xbf16>, vector<16x128xf32> -> vector<16x128xf32>
    %162 = arith.addf %141, %161 : vector<16x128xf32>
    %163 = vector.extract_strided_slice %12 {offsets = [0, 112], sizes = [16, 16], strides = [1, 1]} : vector<16x128xbf16> to vector<16x16xbf16>
    %164 = vector.extract_strided_slice %13 {offsets = [0, 112], sizes = [16, 16], strides = [1, 1]} : vector<16x128xbf16> to vector<16x16xbf16>
    %165 = vector.extract_strided_slice %14 {offsets = [0, 112], sizes = [16, 16], strides = [1, 1]} : vector<16x128xbf16> to vector<16x16xbf16>
    %cst_67 = arith.constant dense<0.000000e+00> : vector<16x16xf32>
    %166 = tpu.matmul %163, %164, %cst_67 {dimension_numbers = #tpu.dot_dimension_numbers<[1], [1], [0], [0], [0, 0, 1, 0], [], []>} : vector<16x16xbf16>, vector<16x16xbf16>, vector<16x16xf32> -> vector<16x16xf32>
    %cst_68 = arith.constant dense<0xFF800000> : vector<16xf32>
    %167 = vector.multi_reduction <maximumf>, %166, %cst_68 [1] : vector<16x16xf32> to vector<16xf32>
    %168 = vector.shape_cast %167 : vector<16xf32> to vector<16x1xf32>
    %169 = vector.broadcast %168 : vector<16x1xf32> to vector<16x16xf32>
    %170 = arith.subf %166, %169 : vector<16x16xf32>
    %171 = math.exp %170 : vector<16x16xf32>
    %cst_69 = arith.constant dense<0.000000e+00> : vector<16xf32>
    %172 = vector.multi_reduction <add>, %171, %cst_69 [1] : vector<16x16xf32> to vector<16xf32>
    %173 = vector.shape_cast %172 : vector<16xf32> to vector<16x1xf32>
    %174 = tpu.reciprocal %173 {approx = true} : vector<16x1xf32> -> vector<16x1xf32>
    %175 = vector.broadcast %174 : vector<16x1xf32> to vector<16x16xf32>
    %176 = arith.mulf %171, %175 : vector<16x16xf32>
    %177 = arith.truncf %176 : vector<16x16xf32> to vector<16x16xbf16>
    %cst_70 = arith.constant dense<0.000000e+00> : vector<16x16xf32>
    %178 = tpu.matmul %177, %165, %cst_70 {dimension_numbers = #tpu.dot_dimension_numbers<[1], [0], [0], [1], [0, 0, 1, 1], [], []>} : vector<16x16xbf16>, vector<16x16xbf16>, vector<16x16xf32> -> vector<16x16xf32>
    %179 = arith.truncf %178 : vector<16x16xf32> to vector<16x16xbf16>
    %c7 = arith.constant 7 : index
    %c0_71 = arith.constant 0 : index
    %c0_72 = arith.constant 0 : index
    %180 = vector.load %arg8[%c7, %c0_71, %c0_72] : memref<8x16x128xbf16, #tpu.memory_space<vmem>>, vector<1x16x128xbf16>
    %181 = vector.shape_cast %180 : vector<1x16x128xbf16> to vector<16x128xbf16>
    %cst_73 = arith.constant dense<0.000000e+00> : vector<16x128xf32>
    %182 = tpu.matmul %179, %181, %cst_73 {dimension_numbers = #tpu.dot_dimension_numbers<[1], [0], [0], [1], [0, 0, 1, 1], [], []>} : vector<16x16xbf16>, vector<16x128xbf16>, vector<16x128xf32> -> vector<16x128xf32>
    %183 = arith.addf %162, %182 : vector<16x128xf32>
    %c0_74 = arith.constant 0 : index
    %c0_75 = arith.constant 0 : index
    %184 = vector.load %arg9[%c0_74, %c0_75] : memref<1x128xf32, #tpu.memory_space<vmem>>, vector<1x128xf32>
    %185 = vector.broadcast %184 : vector<1x128xf32> to vector<16x128xf32>
    %186 = arith.addf %183, %185 : vector<16x128xf32>
    %c0_76 = arith.constant 0 : index
    %c0_77 = arith.constant 0 : index
    %c0_78 = arith.constant 0 : index
    %187 = vector.load %arg10[%c0_76, %c0_77, %c0_78] : memref<1x16x128xf32, #tpu.memory_space<vmem>>, vector<1x16x128xf32>
    %188 = vector.shape_cast %187 : vector<1x16x128xf32> to vector<16x128xf32>
    %189 = vector.shape_cast %186 : vector<16x128xf32> to vector<1x16x128xf32>
    tpu.vector_store %arg10[%c0_76, %c0_77, %c0_78], %189 {strides = array<i32>} : memref<1x16x128xf32, #tpu.memory_space<vmem>>, vector<1x16x128xf32>,
    return
  }
  func.func @transform_0(%arg0: i32, %arg1: i32) -> (i32, i32, i32) {
    %c0_i32 = arith.constant 0 : i32
    %c0_i32_0 = arith.constant 0 : i32
    return %arg0, %arg1, %c0_i32 : i32, i32, i32
  }
  func.func @transform_1(%arg0: i32, %arg1: i32) -> (i32, i32, i32) {
    %c0_i32 = arith.constant 0 : i32
    %c0_i32_0 = arith.constant 0 : i32
    %c0_i32_1 = arith.constant 0 : i32
    return %arg0, %c0_i32, %c0_i32_0 : i32, i32, i32
  }
  func.func @transform_2(%arg0: i32, %arg1: i32) -> (i32, i32, i32) {
    %c0_i32 = arith.constant 0 : i32
    %c0_i32_0 = arith.constant 0 : i32
    %c0_i32_1 = arith.constant 0 : i32
    return %arg0, %c0_i32, %c0_i32_0 : i32, i32, i32
  }
  func.func @transform_3(%arg0: i32, %arg1: i32) -> (i32, i32) {
    %c0_i32 = arith.constant 0 : i32
    %c0_i32_0 = arith.constant 0 : i32
    %c0_i32_1 = arith.constant 0 : i32
    return %c0_i32, %c0_i32_0 : i32, i32
  }
  func.func @transform_4(%arg0: i32, %arg1: i32) -> (i32, i32) {
    %c0_i32 = arith.constant 0 : i32
    %c0_i32_0 = arith.constant 0 : i32
    %c0_i32_1 = arith.constant 0 : i32
    return %c0_i32, %c0_i32_0 : i32, i32
  }
  func.func @transform_5(%arg0: i32, %arg1: i32) -> (i32, i32) {
    %c0_i32 = arith.constant 0 : i32
    %c0_i32_0 = arith.constant 0 : i32
    %c0_i32_1 = arith.constant 0 : i32
    return %c0_i32, %c0_i32_0 : i32, i32
  }
  func.func @transform_6(%arg0: i32, %arg1: i32) -> (i32, i32, i32) {
    %c0_i32 = arith.constant 0 : i32
    %c0_i32_0 = arith.constant 0 : i32
    %c0_i32_1 = arith.constant 0 : i32
    %c0_i32_2 = arith.constant 0 : i32
    return %c0_i32, %c0_i32_0, %c0_i32_1 : i32, i32, i32
  }
  func.func @transform_7(%arg0: i32, %arg1: i32) -> (i32, i32) {
    %c0_i32 = arith.constant 0 : i32
    %c0_i32_0 = arith.constant 0 : i32
    %c0_i32_1 = arith.constant 0 : i32
    return %c0_i32, %c0_i32_0 : i32, i32
  }
  func.func @transform_8(%arg0: i32, %arg1: i32) -> (i32, i32, i32) {
    %c0_i32 = arith.constant 0 : i32
    %c0_i32_0 = arith.constant 0 : i32
    return %arg0, %arg1, %c0_i32 : i32, i32, i32
  }
}

</mosaic_0001>

<llo_original>
// kernel: tpu_custom_call.1
$region0: #{tpu_custom_call.1}
  #allocation0 [shape = 'u32[]', space=smem, size = 0x4, offset = 0x4, fixed_abs, tag = 'smem constant byte address 0x4 - core index']
  #allocation1 [shape = 'u32[144,128]{1,0:T(1,128)}', space=vmem, size = 0x12000, scoped, tag = 'internal scratch']
  %s0 = inlined_call_operand.hbm [shape: bf16[2,32,128], index: 0, kind: input, shape index: {}]
  %s1 = inlined_call_operand.hbm [shape: bf16[2,16,128], index: 1, kind: input, shape index: {}]
  %s2 = inlined_call_operand.hbm [shape: bf16[2,16,128], index: 2, kind: input, shape index: {}]
  %s3 = inlined_call_operand.hbm [shape: bf16[128,128], index: 3, kind: input, shape index: {}]
  %s4 = inlined_call_operand.hbm [shape: bf16[128,128], index: 4, kind: input, shape index: {}]
  %s5 = inlined_call_operand.hbm [shape: bf16[128,128], index: 5, kind: input, shape index: {}]
  %s6 = inlined_call_operand.hbm [shape: bf16[8,16,128], index: 6, kind: input, shape index: {}]
  %s7 = inlined_call_operand.vmem [shape: f32[1,128], index: 7, kind: input, shape index: {}]
  %s8 = inlined_call_operand.hbm [shape: f32[2,32,128], index: 8, kind: output, shape index: {}]
  %s9 = sld [smem:[#allocation0]]
  $region93: #{tpu_custom_call.1} parent=0
    _
  %s11 = ssub.s32 1, %s9
  %s12 = scalar_select 0, %s11, %s9
  $region1: #{tpu_custom_call.1} parent=0
    #allocation2 [shape = 'u8[8192]{0}', space=vmem, size = 0x2000, scoped, tag = 'input window, operand 0']
    #allocation3 [shape = 's32[2]{0}', space=sflag, size = 0x8, scoped, tag = 'scoped memory for tpu_custom_call.1']
    #allocation4 [shape = 's32[2]{0}', space=sflag, size = 0x8, scoped, tag = 'scoped memory for tpu_custom_call.1']
    #allocation5 [shape = 'u8[8192]{0}', space=vmem, size = 0x2000, scoped, tag = 'input window, operand 1']
    #allocation6 [shape = 's32[2]{0}', space=sflag, size = 0x8, scoped, tag = 'scoped memory for tpu_custom_call.1']
    #allocation7 [shape = 'u8[8192]{0}', space=vmem, size = 0x2000, scoped, tag = 'input window, operand 2']
    #allocation8 [shape = 'u8[32768]{0}', space=vmem, size = 0x8000, scoped, tag = 'input window, operand 3, single buffered']
    #allocation9 [shape = 's32[1]{0}', space=sflag, size = 0x4, scoped, tag = 'scoped memory for tpu_custom_call.1']
    #allocation10 [shape = 'u8[32768]{0}', space=vmem, size = 0x8000, scoped, tag = 'input window, operand 4, single buffered']
    #allocation11 [shape = 'u8[32768]{0}', space=vmem, size = 0x8000, scoped, tag = 'input window, operand 5, single buffered']
    #allocation12 [shape = 's32[1]{0}', space=sflag, size = 0x4, scoped, tag = 'scoped memory for tpu_custom_call.1']
    #allocation13 [shape = 'u8[32768]{0}', space=vmem, size = 0x8000, scoped, tag = 'input window, operand 6, single buffered']
    #allocation14 [shape = 'u8[16384]{0}', space=vmem, size = 0x4000, scoped, tag = 'output window, operand 0']
    %13 = vsyncpa [#allocation3], 0
    %s14 = scalar_lea.sflag [#allocation3], 1
    %15 = vsyncpa %s14, 0
    %16 = vsyncpa [#allocation6], 0
    %s17 = scalar_lea.sflag [#allocation6], 1
    %18 = vsyncpa %s17, 0
    %19 = vsyncpa [#allocation9], 0
    %20 = vsyncpa [#allocation12], 0
    %21 = vsyncpa [#allocation4], 0
    %s22 = scalar_lea.sflag [#allocation4], 1
    %23 = vsyncpa %s22, 0
    loop: start=0, step=1, limit=6
    $region2: #{tpu_custom_call.1} parent=1 // loop_pre_header
      _
    $region3: #{tpu_custom_call.1} parent=1 // loop_header
      %s25 = sphi 0, %s29
      %p26 = scmp.ge.s32.totalorder %s25, 6
      %s32 = sphi 0, %s44
      %s33 = sphi 0, %s40
      %s34 = sphi 0, %s32
      %s35 = sphi 0, %s33
      %s36 = sphi 0, %s34
      %s37 = sphi 0, %s35
      %s49 = sphi 0, %s51
      %s52 = sphi 0, %s49
      %s53 = sphi 0, %s52
      %s69 = sphi 0, %s53
      %s75 = sphi 0, %s77
      %s78 = sphi 0, %s75
      %s79 = sphi 0, %s78
      %s95 = sphi 0, %s79
      %s101 = sphi 0, %s103
      %s104 = sphi 0, %s101
      %s105 = sphi 0, %s104
      %s121 = sphi 0, %s105
      %s125 = sphi 0, %s125
      %s127 = sphi 0, %s125
      %s128 = sphi 0, %s127
      %s142 = sphi 0, %s128
      %s146 = sphi 0, %s146
      %s148 = sphi 0, %s146
      %s149 = sphi 0, %s148
      %s163 = sphi 0, %s149
      %s167 = sphi 0, %s167
      %s169 = sphi 0, %s167
      %s170 = sphi 0, %s169
      %s184 = sphi 0, %s170
      %s188 = sphi 0, %s188
      %s190 = sphi 0, %s188
      %s191 = sphi 0, %s190
      %s205 = sphi 0, %s191
      %s209 = sphi 0, %s209
      %s211 = sphi 0, %s209
      %s212 = sphi 0, %s211
      %s226 = sphi 0, %s212
      %s234 = sphi 0, %s236
      %s237 = sphi 0, %s234
      %s238 = sphi 0, %s237
      %s254 = sphi 0, %s238
    $region4: #{tpu_custom_call.1} parent=1 // loop_header_branch
      %28 = sbr.rel (%p26) target = $region8
    $region5: #{tpu_custom_call.1} parent=1 // loop_body
      %s30 = ssub.s32 %s25, 1
      %s31 = ssub.s32 %s25, 2
      %s38 = sadd.s32 1, %s33
      %p39 = scmp.ge.s32.totalorder %s38, 2
      %s40 = scalar_select %p39, 0, %s38
      %s41 = sadd.s32 1, %s32
      %s42 = scalar_select %p39, %s41, %s32
      %p43 = scmp.ge.s32.totalorder %s42, 2
      %s44 = scalar_select %p43, 0, %s42
      %s45 = ssub.s32 %s32, %s44
      %s46 = ssub.s32 %s33, %s40
      %s47 = sor.u32 %s45, %s46
      %p48 = scmp.eq.s32.totalorder %s47, 0
      %s50 = sadd.s32 %s49, 1
      %s51 = scalar_select %p48, %s49, %s50
      %p54 = pneg %p48
      %p55 = scmp.eq.s32.totalorder %s25, 3
      %p56 = por %p54, %p55
      %p57 = scmp.ne.s32.totalorder %s49, %s52
      %p58 = scmp.eq.s32.totalorder %s25, 0
      %p59 = por %p57, %p58
      %p60 = scmp.ne.s32.totalorder %s49, %s52
      %p61 = scmp.eq.s32.totalorder %s30, 3
      %p62 = por %p60, %p61
      %p63 = scmp.ne.s32.totalorder %s52, %s53
      %p64 = scmp.eq.s32.totalorder %s30, 0
      %p65 = por %p63, %p64
      %p66 = scmp.ne.s32.totalorder %s52, %s53
      %p67 = scmp.eq.s32.totalorder %s31, 3
      %p68 = por %p66, %p67
      %p70 = scmp.ne.s32.totalorder %s53, %s69
      %p71 = scmp.eq.s32.totalorder %s31, 0
      %p72 = por %p70, %p71
      %s73 = ssub.s32 %s32, %s44
      %p74 = scmp.eq.s32.totalorder %s73, 0
      %s76 = sadd.s32 %s75, 1
      %s77 = scalar_select %p74, %s75, %s76
      %p80 = pneg %p74
      %p81 = scmp.eq.s32.totalorder %s25, 3
      %p82 = por %p80, %p81
      %p83 = scmp.ne.s32.totalorder %s75, %s78
      %p84 = scmp.eq.s32.totalorder %s25, 0
      %p85 = por %p83, %p84
      %p86 = scmp.ne.s32.totalorder %s75, %s78
      %p87 = scmp.eq.s32.totalorder %s30, 3
      %p88 = por %p86, %p87
      %p89 = scmp.ne.s32.totalorder %s78, %s79
      %p90 = scmp.eq.s32.totalorder %s30, 0
      %p91 = por %p89, %p90
      %p92 = scmp.ne.s32.totalorder %s78, %s79
      %p93 = scmp.eq.s32.totalorder %s31, 3
      %p94 = por %p92, %p93
      %p96 = scmp.ne.s32.totalorder %s79, %s95
      %p97 = scmp.eq.s32.totalorder %s31, 0
      %p98 = por %p96, %p97
      %s99 = ssub.s32 %s32, %s44
      %p100 = scmp.eq.s32.totalorder %s99, 0
      %s102 = sadd.s32 %s101, 1
      %s103 = scalar_select %p100, %s101, %s102
      %p106 = pneg %p100
      %p107 = scmp.eq.s32.totalorder %s25, 3
      %p108 = por %p106, %p107
      %p109 = scmp.ne.s32.totalorder %s101, %s104
      %p110 = scmp.eq.s32.totalorder %s25, 0
      %p111 = por %p109, %p110
      %p112 = scmp.ne.s32.totalorder %s101, %s104
      %p113 = scmp.eq.s32.totalorder %s30, 3
      %p114 = por %p112, %p113
      %p115 = scmp.ne.s32.totalorder %s104, %s105
      %p116 = scmp.eq.s32.totalorder %s30, 0
      %p117 = por %p115, %p116
      %p118 = scmp.ne.s32.totalorder %s104, %s105
      %p119 = scmp.eq.s32.totalorder %s31, 3
      %p120 = por %p118, %p119
      %p122 = scmp.ne.s32.totalorder %s105, %s121
      %p123 = scmp.eq.s32.totalorder %s31, 0
      %p124 = por %p122, %p123
      %s126 = sadd.s32 %s125, 1
      %p129 = scmp.eq.s32.totalorder %s25, 3
      %p130 = scmp.ne.s32.totalorder %s125, %s127
      %p131 = scmp.eq.s32.totalorder %s25, 0
      %p132 = por %p130, %p131
      %p133 = scmp.ne.s32.totalorder %s125, %s127
      %p134 = scmp.eq.s32.totalorder %s30, 3
      %p135 = por %p133, %p134
      %p136 = scmp.ne.s32.totalorder %s127, %s128
      %p137 = scmp.eq.s32.totalorder %s30, 0
      %p138 = por %p136, %p137
      %p139 = scmp.ne.s32.totalorder %s127, %s128
      %p140 = scmp.eq.s32.totalorder %s31, 3
      %p141 = por %p139, %p140
      %p143 = scmp.ne.s32.totalorder %s128, %s142
      %p144 = scmp.eq.s32.totalorder %s31, 0
      %p145 = por %p143, %p144
      %s147 = sadd.s32 %s146, 1
      %p150 = scmp.eq.s32.totalorder %s25, 3
      %p151 = scmp.ne.s32.totalorder %s146, %s148
      %p152 = scmp.eq.s32.totalorder %s25, 0
      %p153 = por %p151, %p152
      %p154 = scmp.ne.s32.totalorder %s146, %s148
      %p155 = scmp.eq.s32.totalorder %s30, 3
      %p156 = por %p154, %p155
      %p157 = scmp.ne.s32.totalorder %s148, %s149
      %p158 = scmp.eq.s32.totalorder %s30, 0
      %p159 = por %p157, %p158
      %p160 = scmp.ne.s32.totalorder %s148, %s149
      %p161 = scmp.eq.s32.totalorder %s31, 3
      %p162 = por %p160, %p161
      %p164 = scmp.ne.s32.totalorder %s149, %s163
      %p165 = scmp.eq.s32.totalorder %s31, 0
      %p166 = por %p164, %p165
      %s168 = sadd.s32 %s167, 1
      %p171 = scmp.eq.s32.totalorder %s25, 3
      %p172 = scmp.ne.s32.totalorder %s167, %s169
      %p173 = scmp.eq.s32.totalorder %s25, 0
      %p174 = por %p172, %p173
      %p175 = scmp.ne.s32.totalorder %s167, %s169
      %p176 = scmp.eq.s32.totalorder %s30, 3
      %p177 = por %p175, %p176
      %p178 = scmp.ne.s32.totalorder %s169, %s170
      %p179 = scmp.eq.s32.totalorder %s30, 0
      %p180 = por %p178, %p179
      %p181 = scmp.ne.s32.totalorder %s169, %s170
      %p182 = scmp.eq.s32.totalorder %s31, 3
      %p183 = por %p181, %p182
      %p185 = scmp.ne.s32.totalorder %s170, %s184
      %p186 = scmp.eq.s32.totalorder %s31, 0
      %p187 = por %p185, %p186
      %s189 = sadd.s32 %s188, 1
      %p192 = scmp.eq.s32.totalorder %s25, 3
      %p193 = scmp.ne.s32.totalorder %s188, %s190
      %p194 = scmp.eq.s32.totalorder %s25, 0
      %p195 = por %p193, %p194
      %p196 = scmp.ne.s32.totalorder %s188, %s190
      %p197 = scmp.eq.s32.totalorder %s30, 3
      %p198 = por %p196, %p197
      %p199 = scmp.ne.s32.totalorder %s190, %s191
      %p200 = scmp.eq.s32.totalorder %s30, 0
      %p201 = por %p199, %p200
      %p202 = scmp.ne.s32.totalorder %s190, %s191
      %p203 = scmp.eq.s32.totalorder %s31, 3
      %p204 = por %p202, %p203
      %p206 = scmp.ne.s32.totalorder %s191, %s205
      %p207 = scmp.eq.s32.totalorder %s31, 0
      %p208 = por %p206, %p207
      %s210 = sadd.s32 %s209, 1
      %p213 = scmp.eq.s32.totalorder %s25, 3
      %p214 = scmp.ne.s32.totalorder %s209, %s211
      %p215 = scmp.eq.s32.totalorder %s25, 0
      %p216 = por %p214, %p215
      %p217 = scmp.ne.s32.totalorder %s209, %s211
      %p218 = scmp.eq.s32.totalorder %s30, 3
      %p219 = por %p217, %p218
      %p220 = scmp.ne.s32.totalorder %s211, %s212
      %p221 = scmp.eq.s32.totalorder %s30, 0
      %p222 = por %p220, %p221
      %p223 = scmp.ne.s32.totalorder %s211, %s212
      %p224 = scmp.eq.s32.totalorder %s31, 3
      %p225 = por %p223, %p224
      %p227 = scmp.ne.s32.totalorder %s212, %s226
      %p228 = scmp.eq.s32.totalorder %s31, 0
      %p229 = por %p227, %p228
      %s230 = ssub.s32 %s32, %s44
      %s231 = ssub.s32 %s33, %s40
      %s232 = sor.u32 %s230, %s231
      %p233 = scmp.eq.s32.totalorder %s232, 0
      %s235 = sadd.s32 %s234, 1
      %s236 = scalar_select %p233, %s234, %s235
      %p239 = pneg %p233
      %p240 = scmp.eq.s32.totalorder %s25, 3
      %p241 = por %p239, %p240
      %p242 = scmp.ne.s32.totalorder %s234, %s237
      %p243 = scmp.eq.s32.totalorder %s25, 0
      %p244 = por %p242, %p243
      %p245 = scmp.ne.s32.totalorder %s234, %s237
      %p246 = scmp.eq.s32.totalorder %s30, 3
      %p247 = por %p245, %p246
      %p248 = scmp.ne.s32.totalorder %s237, %s238
      %p249 = scmp.eq.s32.totalorder %s30, 0
      %p250 = por %p248, %p249
      %p251 = scmp.ne.s32.totalorder %s237, %s238
      %p252 = scmp.eq.s32.totalorder %s31, 3
      %p253 = por %p251, %p252
      %p255 = scmp.ne.s32.totalorder %s238, %s254
      %p256 = scmp.eq.s32.totalorder %s31, 0
      %p257 = por %p255, %p256
      %p258 = scmp.le.s32.totalorder 1, %s25
      %p259 = scmp.lt.s32.totalorder %s25, 5
      %p260 = pnand %p258, %p259
      %p261 = pneg %p260
      // Predicated region
      $region9: #{tpu_custom_call.1} parent=5 // pred_check
        _
      $region10: #{tpu_custom_call.1} parent=5 // pred_check_branch
        %263 = sbr.rel (%p260) target = $region12
      $region11: #{tpu_custom_call.1} parent=5 // pred_region
        %s264 = ssub.s32 %s25, 1
        // Predicated region
        $region13: #{tpu_custom_call.1} parent=11 // pred_check
          %p265 = pneg %p138
        $region14: #{tpu_custom_call.1} parent=11 // pred_check_branch
          %267 = sbr.rel (%p265) target = $region16
        $region15: #{tpu_custom_call.1} parent=11 // pred_region
          %s269 = ssub.s32 1024, 1024
          %270 = vsyncadd [#allocation9], %s269
          %s271 = sshll.u32 [#allocation8], 4
          %s272 = int_to_ptr.vmem [resolvable:$true] %s271
          %277 = dma.hbm_to_vmem [thread:$0]  %s3, 1024, %s272, [#allocation9], 64, 64, 4
        $region16: #{tpu_custom_call.1} parent=11 // pred_fallthru
          _
        // Predicated region
        $region17: #{tpu_custom_call.1} parent=11 // pred_check
          %p278 = pneg %p159
        $region18: #{tpu_custom_call.1} parent=11 // pred_check_branch
          %280 = sbr.rel (%p278) target = $region20
        $region19: #{tpu_custom_call.1} parent=11 // pred_region
          %s282 = ssub.s32 1024, 1024
          %283 = vsyncadd [#allocation9], %s282
          %s284 = sshll.u32 [#allocation10], 4
          %s285 = int_to_ptr.vmem [resolvable:$true] %s284
          %290 = dma.hbm_to_vmem [thread:$0]  %s4, 1024, %s285, [#allocation9], 64, 64, 4
        $region20: #{tpu_custom_call.1} parent=11 // pred_fallthru
          _
        // Predicated region
        $region21: #{tpu_custom_call.1} parent=11 // pred_check
          %p291 = pneg %p180
        $region22: #{tpu_custom_call.1} parent=11 // pred_check_branch
          %293 = sbr.rel (%p291) target = $region24
        $region23: #{tpu_custom_call.1} parent=11 // pred_region
          %s295 = ssub.s32 1024, 1024
          %296 = vsyncadd [#allocation12], %s295
          %s297 = sshll.u32 [#allocation11], 4
          %s298 = int_to_ptr.vmem [resolvable:$true] %s297
          %303 = dma.hbm_to_vmem [thread:$0]  %s5, 1024, %s298, [#allocation12], 64, 64, 4
        $region24: #{tpu_custom_call.1} parent=11 // pred_fallthru
          _
        // Predicated region
        $region25: #{tpu_custom_call.1} parent=11 // pred_check
          %p304 = pneg %p201
        $region26: #{tpu_custom_call.1} parent=11 // pred_check_branch
          %306 = sbr.rel (%p304) target = $region28
        $region27: #{tpu_custom_call.1} parent=11 // pred_region
          %s308 = ssub.s32 1024, 1024
          %309 = vsyncadd [#allocation12], %s308
          %s310 = sshll.u32 [#allocation13], 4
          %s311 = int_to_ptr.vmem [resolvable:$true] %s310
          %316 = dma.hbm_to_vmem [thread:$0]  %s6, 1024, %s311, [#allocation12], 64, 64, 4
        $region28: #{tpu_custom_call.1} parent=11 // pred_fallthru
          _
        // Predicated region
        $region29: #{tpu_custom_call.1} parent=11 // pred_check
          %p317 = pneg %p222
        $region30: #{tpu_custom_call.1} parent=11 // pred_check_branch
          %319 = sbr.rel (%p317) target = $region32
        $region31: #{tpu_custom_call.1} parent=11 // pred_region
          _
        $region32: #{tpu_custom_call.1} parent=11 // pred_fallthru
          _
      $region12: #{tpu_custom_call.1} parent=5 // pred_fallthru
        _
      %p320 = scmp.lt.s32.totalorder %s25, 4
      // Predicated region
      $region33: #{tpu_custom_call.1} parent=5 // pred_check
        %p321 = pneg %p320
      $region34: #{tpu_custom_call.1} parent=5 // pred_check_branch
        %323 = sbr.rel (%p321) target = $region36
      $region35: #{tpu_custom_call.1} parent=5 // pred_region
        // Predicated region
        $region37: #{tpu_custom_call.1} parent=35 // pred_check
          %p324 = pneg %p59
        $region38: #{tpu_custom_call.1} parent=35 // pred_check_branch
          %326 = sbr.rel (%p324) target = $region40
        $region39: #{tpu_custom_call.1} parent=35 // pred_region
          %s327 = sand.u32 %s49, 1
          %s328 = scalar_lea.sflag [#allocation3], %s327
          %s329 = sand.u32 %s49, 1
          %s330 = smul.addr %s329, 8
          %s331 = scalar_lea.vmem [#allocation2], %s330
          %s332 = smul.u32 2, %s33
          %s334 = ssub.s32 128, 128
          %335 = vsyncadd %s328, %s334
          %s336 = smul.addr %s32, 4
          %s337 = sadd.s32 %s332, %s336
          %s338 = smul.addr %s337, 64
          %s339 = scalar_lea.hbm %s0, %s338
          %s340 = sshll.u32 %s331, 4
          %s341 = int_to_ptr.vmem [resolvable:$true] %s340
          %346 = dma.hbm_to_vmem [thread:$0]  %s339, 128, %s341, %s328, 64, 64, 4
        $region40: #{tpu_custom_call.1} parent=35 // pred_fallthru
          _
        // Predicated region
        $region41: #{tpu_custom_call.1} parent=35 // pred_check
          %p347 = pneg %p85
        $region42: #{tpu_custom_call.1} parent=35 // pred_check_branch
          %349 = sbr.rel (%p347) target = $region44
        $region43: #{tpu_custom_call.1} parent=35 // pred_region
          %s350 = sand.u32 %s25, 1
          %s351 = scalar_lea.sflag [#allocation6], %s350
          %s352 = sand.u32 %s75, 1
          %s353 = smul.addr %s352, 8
          %s354 = scalar_lea.vmem [#allocation5], %s353
          %s356 = ssub.s32 128, 128
          %357 = vsyncadd %s351, %s356
          %s358 = smul.addr %s32, 2
          %s359 = smul.addr %s358, 64
          %s360 = scalar_lea.hbm %s1, %s359
          %s361 = sshll.u32 %s354, 4
          %s362 = int_to_ptr.vmem [resolvable:$true] %s361
          %367 = dma.hbm_to_vmem [thread:$0]  %s360, 128, %s362, %s351, 64, 64, 4
        $region44: #{tpu_custom_call.1} parent=35 // pred_fallthru
          _
        // Predicated region
        $region45: #{tpu_custom_call.1} parent=35 // pred_check
          %p368 = pneg %p111
        $region46: #{tpu_custom_call.1} parent=35 // pred_check_branch
          %370 = sbr.rel (%p368) target = $region48
        $region47: #{tpu_custom_call.1} parent=35 // pred_region
          %s371 = sand.u32 %s25, 1
          %s372 = scalar_lea.sflag [#allocation6], %s371
          %s373 = sand.u32 %s101, 1
          %s374 = smul.addr %s373, 8
          %s375 = scalar_lea.vmem [#allocation7], %s374
          %s377 = ssub.s32 128, 128
          %378 = vsyncadd %s372, %s377
          %s379 = smul.addr %s32, 2
          %s380 = smul.addr %s379, 64
          %s381 = scalar_lea.hbm %s2, %s380
          %s382 = sshll.u32 %s375, 4
          %s383 = int_to_ptr.vmem [resolvable:$true] %s382
          %388 = dma.hbm_to_vmem [thread:$0]  %s381, 128, %s383, %s372, 64, 64, 4
        $region48: #{tpu_custom_call.1} parent=35 // pred_fallthru
          _
      $region36: #{tpu_custom_call.1} parent=5 // pred_fallthru
        _
      %p389 = scmp.le.s32.totalorder 1, %s25
      %p390 = scmp.lt.s32.totalorder %s25, 5
      %p391 = pnand %p389, %p390
      %p392 = pneg %p391
      // Predicated region
      $region49: #{tpu_custom_call.1} parent=5 // pred_check
        _
      $region50: #{tpu_custom_call.1} parent=5 // pred_check_branch
        %394 = sbr.rel (%p391) target = $region52
      $region51: #{tpu_custom_call.1} parent=5 // pred_region
        %s395 = ssub.s32 %s25, 1
        %s396 = sand.u32 %s52, 1
        %s397 = scalar_lea.sflag [#allocation3], %s396
        %s398 = sand.u32 %s52, 1
        %s399 = smul.addr %s398, 8
        %s400 = scalar_lea.vmem [#allocation2], %s399
        // Predicated region
        $region53: #{tpu_custom_call.1} parent=51 // pred_check
          %p401 = pneg %p65
        $region54: #{tpu_custom_call.1} parent=51 // pred_check_branch
          %403 = sbr.rel (%p401) target = $region56
        $region55: #{tpu_custom_call.1} parent=51 // pred_region
          %404 = dma.done %s397, 128
        $region56: #{tpu_custom_call.1} parent=51 // pred_fallthru
          _
        %s405 = sand.u32 %s30, 1
        %s406 = scalar_lea.sflag [#allocation6], %s405
        %s407 = sand.u32 %s78, 1
        %s408 = smul.addr %s407, 8
        %s409 = scalar_lea.vmem [#allocation5], %s408
        // Predicated region
        $region57: #{tpu_custom_call.1} parent=51 // pred_check
          %p410 = pneg %p91
        $region58: #{tpu_custom_call.1} parent=51 // pred_check_branch
          %412 = sbr.rel (%p410) target = $region60
        $region59: #{tpu_custom_call.1} parent=51 // pred_region
          %413 = dma.done %s406, 128
        $region60: #{tpu_custom_call.1} parent=51 // pred_fallthru
          _
        %s414 = sand.u32 %s30, 1
        %s415 = scalar_lea.sflag [#allocation6], %s414
        %s416 = sand.u32 %s104, 1
        %s417 = smul.addr %s416, 8
        %s418 = scalar_lea.vmem [#allocation7], %s417
        // Predicated region
        $region61: #{tpu_custom_call.1} parent=51 // pred_check
          %p419 = pneg %p117
        $region62: #{tpu_custom_call.1} parent=51 // pred_check_branch
          %421 = sbr.rel (%p419) target = $region64
        $region63: #{tpu_custom_call.1} parent=51 // pred_region
          %422 = dma.done %s415, 128
        $region64: #{tpu_custom_call.1} parent=51 // pred_fallthru
          _
        // Predicated region
        $region65: #{tpu_custom_call.1} parent=51 // pred_check
          %p423 = pneg %p138
        $region66: #{tpu_custom_call.1} parent=51 // pred_check_branch
          %425 = sbr.rel (%p423) target = $region68
        $region67: #{tpu_custom_call.1} parent=51 // pred_region
          %426 = dma.done [#allocation9], 1024
        $region68: #{tpu_custom_call.1} parent=51 // pred_fallthru
          _
        // Predicated region
        $region69: #{tpu_custom_call.1} parent=51 // pred_check
          %p427 = pneg %p159
        $region70: #{tpu_custom_call.1} parent=51 // pred_check_branch
          %429 = sbr.rel (%p427) target = $region72
        $region71: #{tpu_custom_call.1} parent=51 // pred_region
          %430 = dma.done [#allocation9], 1024
        $region72: #{tpu_custom_call.1} parent=51 // pred_fallthru
          _
        // Predicated region
        $region73: #{tpu_custom_call.1} parent=51 // pred_check
          %p431 = pneg %p180
        $region74: #{tpu_custom_call.1} parent=51 // pred_check_branch
          %433 = sbr.rel (%p431) target = $region76
        $region75: #{tpu_custom_call.1} parent=51 // pred_region
          %434 = dma.done [#allocation12], 1024
        $region76: #{tpu_custom_call.1} parent=51 // pred_fallthru
          _
        // Predicated region
        $region77: #{tpu_custom_call.1} parent=51 // pred_check
          %p435 = pneg %p201
        $region78: #{tpu_custom_call.1} parent=51 // pred_check_branch
          %437 = sbr.rel (%p435) target = $region80
        $region79: #{tpu_custom_call.1} parent=51 // pred_region
          %438 = dma.done [#allocation12], 1024
        $region80: #{tpu_custom_call.1} parent=51 // pred_fallthru
          _
        %s439 = sand.u32 %s52, 1
        %s440 = scalar_lea.sflag [#allocation3], %s439
        %s441 = sand.u32 %s52, 1
        %s442 = smul.addr %s441, 8
        %s443 = scalar_lea.vmem [#allocation2], %s442
        %p444 = pneg %p65
        %p445 = pneg %p62
        %s446 = sand.u32 %s30, 1
        %s447 = scalar_lea.sflag [#allocation6], %s446
        %s448 = sand.u32 %s78, 1
        %s449 = smul.addr %s448, 8
        %s450 = scalar_lea.vmem [#allocation5], %s449
        %p451 = pneg %p91
        %p452 = pneg %p88
        %s453 = sand.u32 %s30, 1
        %s454 = scalar_lea.sflag [#allocation6], %s453
        %s455 = sand.u32 %s104, 1
        %s456 = smul.addr %s455, 8
        %s457 = scalar_lea.vmem [#allocation7], %s456
        %p458 = pneg %p117
        %p459 = pneg %p114
        %p460 = pneg %p138
        %p461 = pneg %p135
        %p462 = pneg %p159
        %p463 = pneg %p156
        %p464 = pneg %p180
        %p465 = pneg %p177
        %p466 = pneg %p201
        %p467 = pneg %p198
        %p468 = pneg %p222
        %p469 = pneg %p219
        %p470 = pneg %p250
        %p471 = pneg %p247
        %s472 = sand.u32 %s237, 1
        %s473 = scalar_lea.sflag [#allocation4], %s472
        %s474 = sand.u32 %s237, 1
        %s475 = smul.addr %s474, 16
        %s476 = scalar_lea.vmem [#allocation14], %s475
        %s477 = smul.u32 2, %s35
        %s478 = smul.u32 2, %s35
        %v480 = vld [vmem:[%s400] sm:$0xf]
        %v481 = vld [vmem:[%s400 + $0x4] sm:$0xf]
        %v482 = vld [vmem:[%s409] sm:$0xf]
        %v483 = vld [vmem:[%s409 + $0x4] sm:$0xf]
        %v484 = vld [vmem:[%s418] sm:$0xf]
        %v485 = vld [vmem:[%s418 + $0x4] sm:$0xf]
        %v486 = vld [vmem:[#allocation8] sm:$0xf]
        %v487 = vld [vmem:[#allocation8 + $0x4] sm:$0xf]
        %v488 = vld [vmem:[#allocation8 + $0x8] sm:$0xf]
        %v489 = vld [vmem:[#allocation8 + $0xc] sm:$0xf]
        %v490 = vld [vmem:[#allocation8 + $0x10] sm:$0xf]
        %v491 = vld [vmem:[#allocation8 + $0x14] sm:$0xf]
        %v492 = vld [vmem:[#allocation8 + $0x18] sm:$0xf]
        %v493 = vld [vmem:[#allocation8 + $0x1c] sm:$0xf]
        %v494 = vld [vmem:[#allocation8 + $0x20] sm:$0xf]
        %v495 = vld [vmem:[#allocation8 + $0x24] sm:$0xf]
        %v496 = vld [vmem:[#allocation8 + $0x28] sm:$0xf]
        %v497 = vld [vmem:[#allocation8 + $0x2c] sm:$0xf]
        %v498 = vld [vmem:[#allocation8 + $0x30] sm:$0xf]
        %v499 = vld [vmem:[#allocation8 + $0x34] sm:$0xf]
        %v500 = vld [vmem:[#allocation8 + $0x38] sm:$0xf]
        %v501 = vld [vmem:[#allocation8 + $0x3c] sm:$0xf]
        %v504 = vunpack.c.l.b16 %v480
        %v505 = vunpack.c.l.b16 %v481
        %v506 = vpack.c.b16 %v505, %v504
        %v524 = vunpack.c.l.b16 %v486
        %v525 = vunpack.c.l.b16 %v487
        %v526 = vunpack.c.l.b16 %v488
        %v527 = vunpack.c.l.b16 %v489
        %v528 = vunpack.c.l.b16 %v490
        %v529 = vunpack.c.l.b16 %v491
        %v530 = vunpack.c.l.b16 %v492
        %v531 = vunpack.c.l.b16 %v493
        %v532 = vunpack.c.l.b16 %v494
        %v533 = vunpack.c.l.b16 %v495
        %v534 = vunpack.c.l.b16 %v496
        %v535 = vunpack.c.l.b16 %v497
        %v536 = vunpack.c.l.b16 %v498
        %v537 = vunpack.c.l.b16 %v499
        %v538 = vunpack.c.l.b16 %v500
        %v539 = vunpack.c.l.b16 %v501
        %v540 = vpack.c.b16 %v525, %v524
        %v541 = vpack.c.b16 %v527, %v526
        %v542 = vpack.c.b16 %v529, %v528
        %v543 = vpack.c.b16 %v531, %v530
        %v544 = vpack.c.b16 %v533, %v532
        %v545 = vpack.c.b16 %v535, %v534
        %v546 = vpack.c.b16 %v537, %v536
        %v547 = vpack.c.b16 %v539, %v538
        %556 = vmatprep.subr.bf16.mxu0 0
        %557 = vmatpush1.bf16.msra.mxu0 %v540
        %558 = vmatprep.subr.bf16.mxu0 0
        %559 = vmatpush1.bf16.msra.mxu0 %v541
        %560 = vmatprep.subr.bf16.mxu0 0
        %561 = vmatpush1.bf16.msra.mxu0 %v542
        %562 = vmatprep.subr.bf16.mxu0 0
        %563 = vmatpush1.bf16.msra.mxu0 %v543
        %564 = vmatprep.subr.bf16.mxu0 0
        %565 = vmatpush1.bf16.msra.mxu0 %v544
        %566 = vmatprep.subr.bf16.mxu0 0
        %567 = vmatpush1.bf16.msra.mxu0 %v545
        %568 = vmatprep.subr.bf16.mxu0 0
        %569 = vmatpush1.bf16.msra.mxu0 %v546
        %570 = vmatprep.subr.bf16.mxu0 0
        %571 = vmatpush1.bf16.msra.mxu0 %v547
        %572 = vmatprep.subr.bf16.mxu0 0
        %573 = vmatpush1.bf16.msra.mxu0 0
        %574 = vmatprep.subr.bf16.mxu0 0
        %575 = vmatpush1.bf16.msra.mxu0 0
        %576 = vmatprep.subr.bf16.mxu0 0
        %577 = vmatpush1.bf16.msra.mxu0 0
        %578 = vmatprep.subr.bf16.mxu0 0
        %579 = vmatpush1.bf16.msra.mxu0 0
        %580 = vmatprep.subr.bf16.mxu0 0
        %581 = vmatpush1.bf16.msra.mxu0 0
        %582 = vmatprep.subr.bf16.mxu0 0
        %583 = vmatpush1.bf16.msra.mxu0 0
        %584 = vmatprep.subr.bf16.mxu0 0
        %585 = vmatpush1.bf16.msra.mxu0 0
        %586 = vmatprep.subr.bf16.mxu0 0
        %587 = vmatpush1.bf16.msra.mxu0 0
        %588 = vmatprep.mubr.bf16.mxu0 0
        %589 = vmatmul.mubr.bf16.gmra.mrb[0].mxu0 %v506
        %v590 = vpop.f32.mrb[0].mxu0
        %v591 = vadd.f32 0.0, %v590
        %v592 = vpop.f32.mrb[0].mxu0
        %v593 = vpop.f32.mrb[0].mxu0
        %v594 = vadd.f32 0.0, %v593
        %v595 = vpop.f32.mrb[0].mxu0
        %596 = vdwg.mxu0
        %v597 = vld [vmem:[#allocation10] sm:$0xf]
        %v598 = vld [vmem:[#allocation10 + $0x4] sm:$0xf]
        %v599 = vld [vmem:[#allocation10 + $0x8] sm:$0xf]
        %v600 = vld [vmem:[#allocation10 + $0xc] sm:$0xf]
        %v601 = vld [vmem:[#allocation10 + $0x10] sm:$0xf]
        %v602 = vld [vmem:[#allocation10 + $0x14] sm:$0xf]
        %v603 = vld [vmem:[#allocation10 + $0x18] sm:$0xf]
        %v604 = vld [vmem:[#allocation10 + $0x1c] sm:$0xf]
        %v605 = vld [vmem:[#allocation10 + $0x20] sm:$0xf]
        %v606 = vld [vmem:[#allocation10 + $0x24] sm:$0xf]
        %v607 = vld [vmem:[#allocation10 + $0x28] sm:$0xf]
        %v608 = vld [vmem:[#allocation10 + $0x2c] sm:$0xf]
        %v609 = vld [vmem:[#allocation10 + $0x30] sm:$0xf]
        %v610 = vld [vmem:[#allocation10 + $0x34] sm:$0xf]
        %v611 = vld [vmem:[#allocation10 + $0x38] sm:$0xf]
        %v612 = vld [vmem:[#allocation10 + $0x3c] sm:$0xf]
        %v615 = vunpack.c.l.b16 %v482
        %v616 = vunpack.c.l.b16 %v483
        %v617 = vpack.c.b16 %v616, %v615
        %v635 = vunpack.c.l.b16 %v597
        %v636 = vunpack.c.l.b16 %v598
        %v637 = vunpack.c.l.b16 %v599
        %v638 = vunpack.c.l.b16 %v600
        %v639 = vunpack.c.l.b16 %v601
        %v640 = vunpack.c.l.b16 %v602
        %v641 = vunpack.c.l.b16 %v603
        %v642 = vunpack.c.l.b16 %v604
        %v643 = vunpack.c.l.b16 %v605
        %v644 = vunpack.c.l.b16 %v606
        %v645 = vunpack.c.l.b16 %v607
        %v646 = vunpack.c.l.b16 %v608
        %v647 = vunpack.c.l.b16 %v609
        %v648 = vunpack.c.l.b16 %v610
        %v649 = vunpack.c.l.b16 %v611
        %v650 = vunpack.c.l.b16 %v612
        %v651 = vpack.c.b16 %v636, %v635
        %v652 = vpack.c.b16 %v638, %v637
        %v653 = vpack.c.b16 %v640, %v639
        %v654 = vpack.c.b16 %v642, %v641
        %v655 = vpack.c.b16 %v644, %v643
        %v656 = vpack.c.b16 %v646, %v645
        %v657 = vpack.c.b16 %v648, %v647
        %v658 = vpack.c.b16 %v650, %v649
        %667 = vmatprep.subr.bf16.mxu0 0
        %668 = vmatpush1.bf16.msra.mxu0 %v651
        %669 = vmatprep.subr.bf16.mxu0 0
        %670 = vmatpush1.bf16.msra.mxu0 %v652
        %671 = vmatprep.subr.bf16.mxu0 0
        %672 = vmatpush1.bf16.msra.mxu0 %v653
        %673 = vmatprep.subr.bf16.mxu0 0
        %674 = vmatpush1.bf16.msra.mxu0 %v654
        %675 = vmatprep.subr.bf16.mxu0 0
        %676 = vmatpush1.bf16.msra.mxu0 %v655
        %677 = vmatprep.subr.bf16.mxu0 0
        %678 = vmatpush1.bf16.msra.mxu0 %v656
        %679 = vmatprep.subr.bf16.mxu0 0
        %680 = vmatpush1.bf16.msra.mxu0 %v657
        %681 = vmatprep.subr.bf16.mxu0 0
        %682 = vmatpush1.bf16.msra.mxu0 %v658
        %683 = vmatprep.subr.bf16.mxu0 0
        %684 = vmatpush1.bf16.msra.mxu0 0
        %685 = vmatprep.subr.bf16.mxu0 0
        %686 = vmatpush1.bf16.msra.mxu0 0
        %687 = vmatprep.subr.bf16.mxu0 0
        %688 = vmatpush1.bf16.msra.mxu0 0
        %689 = vmatprep.subr.bf16.mxu0 0
        %690 = vmatpush1.bf16.msra.mxu0 0
        %691 = vmatprep.subr.bf16.mxu0 0
        %692 = vmatpush1.bf16.msra.mxu0 0
        %693 = vmatprep.subr.bf16.mxu0 0
        %694 = vmatpush1.bf16.msra.mxu0 0
        %695 = vmatprep.subr.bf16.mxu0 0
        %696 = vmatpush1.bf16.msra.mxu0 0
        %697 = vmatprep.subr.bf16.mxu0 0
        %698 = vmatpush1.bf16.msra.mxu0 0
        %699 = vmatprep.mubr.bf16.mxu0 0
        %700 = vmatmul.mubr.bf16.gmra.mrb[0].mxu0 %v617
        %v701 = vpop.f32.mrb[0].mxu0
        %v702 = vadd.f32 0.0, %v701
        %v703 = vpop.f32.mrb[0].mxu0
        %v704 = vpop.f32.mrb[0].mxu0
        %v705 = vadd.f32 0.0, %v704
        %v706 = vpop.f32.mrb[0].mxu0
        %707 = vdwg.mxu0
        %v708 = vld [vmem:[#allocation11] sm:$0xf]
        %v709 = vld [vmem:[#allocation11 + $0x4] sm:$0xf]
        %v710 = vld [vmem:[#allocation11 + $0x8] sm:$0xf]
        %v711 = vld [vmem:[#allocation11 + $0xc] sm:$0xf]
        %v712 = vld [vmem:[#allocation11 + $0x10] sm:$0xf]
        %v713 = vld [vmem:[#allocation11 + $0x14] sm:$0xf]
        %v714 = vld [vmem:[#allocation11 + $0x18] sm:$0xf]
        %v715 = vld [vmem:[#allocation11 + $0x1c] sm:$0xf]
        %v716 = vld [vmem:[#allocation11 + $0x20] sm:$0xf]
        %v717 = vld [vmem:[#allocation11 + $0x24] sm:$0xf]
        %v718 = vld [vmem:[#allocation11 + $0x28] sm:$0xf]
        %v719 = vld [vmem:[#allocation11 + $0x2c] sm:$0xf]
        %v720 = vld [vmem:[#allocation11 + $0x30] sm:$0xf]
        %v721 = vld [vmem:[#allocation11 + $0x34] sm:$0xf]
        %v722 = vld [vmem:[#allocation11 + $0x38] sm:$0xf]
        %v723 = vld [vmem:[#allocation11 + $0x3c] sm:$0xf]
        %v726 = vunpack.c.l.b16 %v484
        %v727 = vunpack.c.l.b16 %v485
        %v728 = vpack.c.b16 %v727, %v726
        %v746 = vunpack.c.l.b16 %v708
        %v747 = vunpack.c.l.b16 %v709
        %v748 = vunpack.c.l.b16 %v710
        %v749 = vunpack.c.l.b16 %v711
        %v750 = vunpack.c.l.b16 %v712
        %v751 = vunpack.c.l.b16 %v713
        %v752 = vunpack.c.l.b16 %v714
        %v753 = vunpack.c.l.b16 %v715
        %v754 = vunpack.c.l.b16 %v716
        %v755 = vunpack.c.l.b16 %v717
        %v756 = vunpack.c.l.b16 %v718
        %v757 = vunpack.c.l.b16 %v719
        %v758 = vunpack.c.l.b16 %v720
        %v759 = vunpack.c.l.b16 %v721
        %v760 = vunpack.c.l.b16 %v722
        %v761 = vunpack.c.l.b16 %v723
        %v762 = vpack.c.b16 %v747, %v746
        %v763 = vpack.c.b16 %v749, %v748
        %v764 = vpack.c.b16 %v751, %v750
        %v765 = vpack.c.b16 %v753, %v752
        %v766 = vpack.c.b16 %v755, %v754
        %v767 = vpack.c.b16 %v757, %v756
        %v768 = vpack.c.b16 %v759, %v758
        %v769 = vpack.c.b16 %v761, %v760
        %778 = vmatprep.subr.bf16.mxu0 0
        %779 = vmatpush1.bf16.msra.mxu0 %v762
        %780 = vmatprep.subr.bf16.mxu0 0
        %781 = vmatpush1.bf16.msra.mxu0 %v763
        %782 = vmatprep.subr.bf16.mxu0 0
        %783 = vmatpush1.bf16.msra.mxu0 %v764
        %784 = vmatprep.subr.bf16.mxu0 0
        %785 = vmatpush1.bf16.msra.mxu0 %v765
        %786 = vmatprep.subr.bf16.mxu0 0
        %787 = vmatpush1.bf16.msra.mxu0 %v766
        %788 = vmatprep.subr.bf16.mxu0 0
        %789 = vmatpush1.bf16.msra.mxu0 %v767
        %790 = vmatprep.subr.bf16.mxu0 0
        %791 = vmatpush1.bf16.msra.mxu0 %v768
        %792 = vmatprep.subr.bf16.mxu0 0
        %793 = vmatpush1.bf16.msra.mxu0 %v769
        %794 = vmatprep.subr.bf16.mxu0 0
        %795 = vmatpush1.bf16.msra.mxu0 0
        %796 = vmatprep.subr.bf16.mxu0 0
        %797 = vmatpush1.bf16.msra.mxu0 0
        %798 = vmatprep.subr.bf16.mxu0 0
        %799 = vmatpush1.bf16.msra.mxu0 0
        %800 = vmatprep.subr.bf16.mxu0 0
        %801 = vmatpush1.bf16.msra.mxu0 0
        %802 = vmatprep.subr.bf16.mxu0 0
        %803 = vmatpush1.bf16.msra.mxu0 0
        %804 = vmatprep.subr.bf16.mxu0 0
        %805 = vmatpush1.bf16.msra.mxu0 0
        %806 = vmatprep.subr.bf16.mxu0 0
        %807 = vmatpush1.bf16.msra.mxu0 0
        %808 = vmatprep.subr.bf16.mxu0 0
        %809 = vmatpush1.bf16.msra.mxu0 0
        %810 = vmatprep.mubr.bf16.mxu0 0
        %811 = vmatmul.mubr.bf16.gmra.mrb[0].mxu0 %v728
        %v812 = vpop.f32.mrb[0].mxu0
        %v813 = vadd.f32 0.0, %v812
        %v814 = vpop.f32.mrb[0].mxu0
        %v815 = vpop.f32.mrb[0].mxu0
        %v816 = vadd.f32 0.0, %v815
        %v817 = vpop.f32.mrb[0].mxu0
        %818 = vdwg.mxu0
        %v819 = vpack.c.bf16 %v594, %v591
        %v820 = vpack.c.bf16 %v705, %v702
        %v821 = vpack.c.bf16 %v816, %v813
        %vm822 = vcmask 130048
        %v824 = vsel %vm822, %v819, 0
        %v827 = vsel %vm822, %v820, 0
        %829 = vmatprep.subr.bf16.mxu0 0
        %830 = vmatpush1.bf16.xpose.msra.mxu0 %v827
        %831 = vmatprep.subr.bf16.mxu0 0
        %832 = vmatpush1.bf16.xpose.msra.mxu0 0
        %833 = vmatprep.subr.bf16.mxu0 0
        %834 = vmatpush1.bf16.xpose.msra.mxu0 0
        %835 = vmatprep.subr.bf16.mxu0 0
        %836 = vmatpush1.bf16.xpose.msra.mxu0 0
        %837 = vmatprep.subr.bf16.mxu0 0
        %838 = vmatpush1.bf16.xpose.msra.mxu0 0
        %839 = vmatprep.subr.bf16.mxu0 0
        %840 = vmatpush1.bf16.xpose.msra.mxu0 0
        %841 = vmatprep.subr.bf16.mxu0 0
        %842 = vmatpush1.bf16.xpose.msra.mxu0 0
        %843 = vmatprep.subr.bf16.mxu0 0
        %844 = vmatpush1.bf16.xpose.msra.mxu0 0
        %845 = vmatprep.subr.bf16.mxu0 0
        %846 = vmatpush1.bf16.xpose.msra.mxu0 0
        %847 = vmatprep.subr.bf16.mxu0 0
        %848 = vmatpush1.bf16.xpose.msra.mxu0 0
        %849 = vmatprep.subr.bf16.mxu0 0
        %850 = vmatpush1.bf16.xpose.msra.mxu0 0
        %851 = vmatprep.subr.bf16.mxu0 0
        %852 = vmatpush1.bf16.xpose.msra.mxu0 0
        %853 = vmatprep.subr.bf16.mxu0 0
        %854 = vmatpush1.bf16.xpose.msra.mxu0 0
        %855 = vmatprep.subr.bf16.mxu0 0
        %856 = vmatpush1.bf16.xpose.msra.mxu0 0
        %857 = vmatprep.subr.bf16.mxu0 0
        %858 = vmatpush1.bf16.xpose.msra.mxu0 0
        %859 = vmatprep.subr.bf16.mxu0 0
        %860 = vmatpush1.bf16.xpose.msra.mxu0 0
        %861 = vmatprep.mubr.bf16.mxu0 0
        %862 = vmatmul.mubr.bf16.gmra.mrb[0].mxu0 %v824
        %v863 = vpop.f32.mrb[0].mxu0
        %v864 = vadd.f32 0.0, %v863
        %v865 = vpop.f32.mrb[0].mxu0
        %v866 = vpop.f32.mrb[0].mxu0
        %v867 = vadd.f32 0.0, %v866
        %v868 = vpop.f32.mrb[0].mxu0
        %869 = vdwg.mxu0
        %v870 = vsel %vm822, %v864, -inf
        %871 = vmax.xlane.f32.xlu0 %v870
        %v872 = vpop.xlane.xlu0 %871
        %v873 = vsel %vm822, %v867, -inf
        %874 = vmax.xlane.f32.xlu0 %v873
        %v875 = vpop.xlane.xlu0 %874
        %v876 = vsub.f32 %v864, %v872
        %v877 = vsub.f32 %v867, %v875
        %v878 = vmul.f32 %v876, 1.442695
        %v879 = vpow.pop %v878
        %v880 = vmul.f32 %v877, 1.442695
        %v881 = vpow.pop %v880
        %v882 = vsel %vm822, %v879, 0.0
        %883 = vadd.xlane.f32.xlu0 %v882
        %v884 = vpop.xlane.xlu0 %883
        %v885 = vsel %vm822, %v881, 0.0
        %886 = vadd.xlane.f32.xlu0 %v885
        %v887 = vpop.xlane.xlu0 %886
        %v888 = vrcp.pop %v884
        %v889 = vrcp.pop %v887
        %v890 = vmul.f32 %v879, %v888
        %v891 = vmul.f32 %v881, %v889
        %v892 = vpack.c.bf16 %v891, %v890
        %v894 = vsel %vm822, %v892, 0
        %896 = vmatprep.subr.bf16.mxu0 0
        %897 = vmatpush1.bf16.msra.mxu0 %v821
        %898 = vmatprep.subr.bf16.mxu0 0
        %899 = vmatpush1.bf16.msra.mxu0 0
        %900 = vmatprep.subr.bf16.mxu0 0
        %901 = vmatpush1.bf16.msra.mxu0 0
        %902 = vmatprep.subr.bf16.mxu0 0
        %903 = vmatpush1.bf16.msra.mxu0 0
        %904 = vmatprep.subr.bf16.mxu0 0
        %905 = vmatpush1.bf16.msra.mxu0 0
        %906 = vmatprep.subr.bf16.mxu0 0
        %907 = vmatpush1.bf16.msra.mxu0 0
        %908 = vmatprep.subr.bf16.mxu0 0
        %909 = vmatpush1.bf16.msra.mxu0 0
        %910 = vmatprep.subr.bf16.mxu0 0
        %911 = vmatpush1.bf16.msra.mxu0 0
        %912 = vmatprep.subr.bf16.mxu0 0
        %913 = vmatpush1.bf16.msra.mxu0 0
        %914 = vmatprep.subr.bf16.mxu0 0
        %915 = vmatpush1.bf16.msra.mxu0 0
        %916 = vmatprep.subr.bf16.mxu0 0
        %917 = vmatpush1.bf16.msra.mxu0 0
        %918 = vmatprep.subr.bf16.mxu0 0
        %919 = vmatpush1.bf16.msra.mxu0 0
        %920 = vmatprep.subr.bf16.mxu0 0
        %921 = vmatpush1.bf16.msra.mxu0 0
        %922 = vmatprep.subr.bf16.mxu0 0
        %923 = vmatpush1.bf16.msra.mxu0 0
        %924 = vmatprep.subr.bf16.mxu0 0
        %925 = vmatpush1.bf16.msra.mxu0 0
        %926 = vmatprep.subr.bf16.mxu0 0
        %927 = vmatpush1.bf16.msra.mxu0 0
        %928 = vmatprep.mubr.bf16.mxu0 0
        %929 = vmatmul.mubr.bf16.gmra.mrb[0].mxu0 %v894
        %v930 = vpop.f32.mrb[0].mxu0
        %v931 = vadd.f32 0.0, %v930
        %v932 = vpop.f32.mrb[0].mxu0
        %v933 = vpop.f32.mrb[0].mxu0
        %v934 = vadd.f32 0.0, %v933
        %v935 = vpop.f32.mrb[0].mxu0
        %936 = vdwg.mxu0
        %v937 = vpack.c.bf16 %v934, %v931
        %v938 = vld [vmem:[#allocation13] sm:$0xf]
        %v939 = vld [vmem:[#allocation13 + $0x4] sm:$0xf]
        %941 = vrot.lane.b32.xlu0 %v819, 112
        %v942 = vpop.permute.xlu0 %941
        %944 = vrot.lane.b32.xlu0 %v820, 112
        %v945 = vpop.permute.xlu0 %944
        %v947 = vsel %vm822, %v942, 0
        %v950 = vsel %vm822, %v945, 0
        %952 = vmatprep.subr.bf16.mxu0 0
        %953 = vmatpush1.bf16.xpose.msra.mxu0 %v950
        %954 = vmatprep.subr.bf16.mxu0 0
        %955 = vmatpush1.bf16.xpose.msra.mxu0 0
        %956 = vmatprep.subr.bf16.mxu0 0
        %957 = vmatpush1.bf16.xpose.msra.mxu0 0
        %958 = vmatprep.subr.bf16.mxu0 0
        %959 = vmatpush1.bf16.xpose.msra.mxu0 0
        %960 = vmatprep.subr.bf16.mxu0 0
        %961 = vmatpush1.bf16.xpose.msra.mxu0 0
        %962 = vmatprep.subr.bf16.mxu0 0
        %963 = vmatpush1.bf16.xpose.msra.mxu0 0
        %964 = vmatprep.subr.bf16.mxu0 0
        %965 = vmatpush1.bf16.xpose.msra.mxu0 0
        %966 = vmatprep.subr.bf16.mxu0 0
        %967 = vmatpush1.bf16.xpose.msra.mxu0 0
        %968 = vmatprep.subr.bf16.mxu0 0
        %969 = vmatpush1.bf16.xpose.msra.mxu0 0
        %970 = vmatprep.subr.bf16.mxu0 0
        %971 = vmatpush1.bf16.xpose.msra.mxu0 0
        %972 = vmatprep.subr.bf16.mxu0 0
        %973 = vmatpush1.bf16.xpose.msra.mxu0 0
        %974 = vmatprep.subr.bf16.mxu0 0
        %975 = vmatpush1.bf16.xpose.msra.mxu0 0
        %976 = vmatprep.subr.bf16.mxu0 0
        %977 = vmatpush1.bf16.xpose.msra.mxu0 0
        %978 = vmatprep.subr.bf16.mxu0 0
        %979 = vmatpush1.bf16.xpose.msra.mxu0 0
        %980 = vmatprep.subr.bf16.mxu0 0
        %981 = vmatpush1.bf16.xpose.msra.mxu0 0
        %982 = vmatprep.subr.bf16.mxu0 0
        %983 = vmatpush1.bf16.xpose.msra.mxu0 0
        %984 = vmatprep.mubr.bf16.mxu0 0
        %985 = vmatmul.mubr.bf16.gmra.mrb[0].mxu0 %v947
        %v986 = vpop.f32.mrb[0].mxu0
        %v987 = vadd.f32 0.0, %v986
        %v988 = vpop.f32.mrb[0].mxu0
        %v989 = vpop.f32.mrb[0].mxu0
        %v990 = vadd.f32 0.0, %v989
        %v991 = vpop.f32.mrb[0].mxu0
        %992 = vdwg.mxu0
        %v993 = vsel %vm822, %v987, -inf
        %994 = vmax.xlane.f32.xlu0 %v993
        %v995 = vpop.xlane.xlu0 %994
        %v996 = vsel %vm822, %v990, -inf
        %997 = vmax.xlane.f32.xlu0 %v996
        %v998 = vpop.xlane.xlu0 %997
        %v999 = vsub.f32 %v987, %v995
        %v1000 = vsub.f32 %v990, %v998
        %v1001 = vmul.f32 %v999, 1.442695
        %v1002 = vpow.pop %v1001
        %v1003 = vmul.f32 %v1000, 1.442695
        %v1004 = vpow.pop %v1003
        %v1005 = vsel %vm822, %v1002, 0.0
        %1006 = vadd.xlane.f32.xlu0 %v1005
        %v1007 = vpop.xlane.xlu0 %1006
        %v1008 = vsel %vm822, %v1004, 0.0
        %1009 = vadd.xlane.f32.xlu0 %v1008
        %v1010 = vpop.xlane.xlu0 %1009
        %v1011 = vrcp.pop %v1007
        %v1012 = vrcp.pop %v1010
        %v1013 = vmul.f32 %v1002, %v1011
        %v1014 = vmul.f32 %v1004, %v1012
        %v1015 = vpack.c.bf16 %v1014, %v1013
        %1017 = vrot.lane.b32.xlu0 %v821, 112
        %v1018 = vpop.permute.xlu0 %1017
        %v1021 = vsel %vm822, %v1015, 0
        %1023 = vmatprep.subr.bf16.mxu0 0
        %1024 = vmatpush1.bf16.msra.mxu0 %v1018
        %1025 = vmatprep.subr.bf16.mxu0 0
        %1026 = vmatpush1.bf16.msra.mxu0 0
        %1027 = vmatprep.subr.bf16.mxu0 0
        %1028 = vmatpush1.bf16.msra.mxu0 0
        %1029 = vmatprep.subr.bf16.mxu0 0
        %1030 = vmatpush1.bf16.msra.mxu0 0
        %1031 = vmatprep.subr.bf16.mxu0 0
        %1032 = vmatpush1.bf16.msra.mxu0 0
        %1033 = vmatprep.subr.bf16.mxu0 0
        %1034 = vmatpush1.bf16.msra.mxu0 0
        %1035 = vmatprep.subr.bf16.mxu0 0
        %1036 = vmatpush1.bf16.msra.mxu0 0
        %1037 = vmatprep.subr.bf16.mxu0 0
        %1038 = vmatpush1.bf16.msra.mxu0 0
        %1039 = vmatprep.subr.bf16.mxu0 0
        %1040 = vmatpush1.bf16.msra.mxu0 0
        %1041 = vmatprep.subr.bf16.mxu0 0
        %1042 = vmatpush1.bf16.msra.mxu0 0
        %1043 = vmatprep.subr.bf16.mxu0 0
        %1044 = vmatpush1.bf16.msra.mxu0 0
        %1045 = vmatprep.subr.bf16.mxu0 0
        %1046 = vmatpush1.bf16.msra.mxu0 0
        %1047 = vmatprep.subr.bf16.mxu0 0
        %1048 = vmatpush1.bf16.msra.mxu0 0
        %1049 = vmatprep.subr.bf16.mxu0 0
        %1050 = vmatpush1.bf16.msra.mxu0 0
        %1051 = vmatprep.subr.bf16.mxu0 0
        %1052 = vmatpush1.bf16.msra.mxu0 0
        %1053 = vmatprep.subr.bf16.mxu0 0
        %1054 = vmatpush1.bf16.msra.mxu0 0
        %1055 = vmatprep.mubr.bf16.mxu0 0
        %1056 = vmatmul.mubr.bf16.gmra.mrb[0].mxu0 %v1021
        %v1057 = vpop.f32.mrb[0].mxu0
        %v1058 = vadd.f32 0.0, %v1057
        %v1059 = vpop.f32.mrb[0].mxu0
        %v1060 = vpop.f32.mrb[0].mxu0
        %v1061 = vadd.f32 0.0, %v1060
        %v1062 = vpop.f32.mrb[0].mxu0
        %1063 = vdwg.mxu0
        %v1064 = vpack.c.bf16 %v1061, %v1058
        %s1065 = scalar_lea.vmem [#allocation13], 8
        %v1066 = vld [vmem:[%s1065] sm:$0xf]
        %v1067 = vld [vmem:[%s1065 + $0x4] sm:$0xf]
        %v1070 = vunpack.c.l.b16 %v1066
        %v1071 = vunpack.c.l.b16 %v1067
        %v1072 = vpack.c.b16 %v1071, %v1070
        %v1075 = vsel %vm822, %v1064, 0
        %1077 = vmatprep.subr.bf16.mxu0 0
        %1078 = vmatpush1.bf16.msra.mxu0 %v1072
        %1079 = vmatprep.subr.bf16.mxu0 0
        %1080 = vmatpush1.bf16.msra.mxu0 0
        %1081 = vmatprep.subr.bf16.mxu0 0
        %1082 = vmatpush1.bf16.msra.mxu0 0
        %1083 = vmatprep.subr.bf16.mxu0 0
        %1084 = vmatpush1.bf16.msra.mxu0 0
        %1085 = vmatprep.subr.bf16.mxu0 0
        %1086 = vmatpush1.bf16.msra.mxu0 0
        %1087 = vmatprep.subr.bf16.mxu0 0
        %1088 = vmatpush1.bf16.msra.mxu0 0
        %1089 = vmatprep.subr.bf16.mxu0 0
        %1090 = vmatpush1.bf16.msra.mxu0 0
        %1091 = vmatprep.subr.bf16.mxu0 0
        %1092 = vmatpush1.bf16.msra.mxu0 0
        %1093 = vmatprep.subr.bf16.mxu0 0
        %1094 = vmatpush1.bf16.msra.mxu0 0
        %1095 = vmatprep.subr.bf16.mxu0 0
        %1096 = vmatpush1.bf16.msra.mxu0 0
        %1097 = vmatprep.subr.bf16.mxu0 0
        %1098 = vmatpush1.bf16.msra.mxu0 0
        %1099 = vmatprep.subr.bf16.mxu0 0
        %1100 = vmatpush1.bf16.msra.mxu0 0
        %1101 = vmatprep.subr.bf16.mxu0 0
        %1102 = vmatpush1.bf16.msra.mxu0 0
        %1103 = vmatprep.subr.bf16.mxu0 0
        %1104 = vmatpush1.bf16.msra.mxu0 0
        %1105 = vmatprep.subr.bf16.mxu0 0
        %1106 = vmatpush1.bf16.msra.mxu0 0
        %1107 = vmatprep.subr.bf16.mxu0 0
        %1108 = vmatpush1.bf16.msra.mxu0 0
        %1109 = vmatprep.mubr.bf16.mxu0 0
        %1110 = vmatmul.mubr.bf16.gmra.mrb[0].mxu0 %v1075
        %v1111 = vpop.f32.mrb[0].mxu0
        %v1112 = vadd.f32 0.0, %v1111
        %v1113 = vpop.f32.mrb[0].mxu0
        %v1114 = vpop.f32.mrb[0].mxu0
        %v1115 = vadd.f32 0.0, %v1114
        %v1116 = vpop.f32.mrb[0].mxu0
        %1117 = vdwg.mxu0
        %v1120 = vunpack.c.l.b16 %v938
        %v1121 = vunpack.c.l.b16 %v939
        %v1122 = vpack.c.b16 %v1121, %v1120
        %v1125 = vsel %vm822, %v937, 0
        %1127 = vmatprep.subr.bf16.mxu0 0
        %1128 = vmatpush1.bf16.msra.mxu0 %v1122
        %1129 = vmatprep.subr.bf16.mxu0 0
        %1130 = vmatpush1.bf16.msra.mxu0 0
        %1131 = vmatprep.subr.bf16.mxu0 0
        %1132 = vmatpush1.bf16.msra.mxu0 0
        %1133 = vmatprep.subr.bf16.mxu0 0
        %1134 = vmatpush1.bf16.msra.mxu0 0
        %1135 = vmatprep.subr.bf16.mxu0 0
        %1136 = vmatpush1.bf16.msra.mxu0 0
        %1137 = vmatprep.subr.bf16.mxu0 0
        %1138 = vmatpush1.bf16.msra.mxu0 0
        %1139 = vmatprep.subr.bf16.mxu0 0
        %1140 = vmatpush1.bf16.msra.mxu0 0
        %1141 = vmatprep.subr.bf16.mxu0 0
        %1142 = vmatpush1.bf16.msra.mxu0 0
        %1143 = vmatprep.subr.bf16.mxu0 0
        %1144 = vmatpush1.bf16.msra.mxu0 0
        %1145 = vmatprep.subr.bf16.mxu0 0
        %1146 = vmatpush1.bf16.msra.mxu0 0
        %1147 = vmatprep.subr.bf16.mxu0 0
        %1148 = vmatpush1.bf16.msra.mxu0 0
        %1149 = vmatprep.subr.bf16.mxu0 0
        %1150 = vmatpush1.bf16.msra.mxu0 0
        %1151 = vmatprep.subr.bf16.mxu0 0
        %1152 = vmatpush1.bf16.msra.mxu0 0
        %1153 = vmatprep.subr.bf16.mxu0 0
        %1154 = vmatpush1.bf16.msra.mxu0 0
        %1155 = vmatprep.subr.bf16.mxu0 0
        %1156 = vmatpush1.bf16.msra.mxu0 0
        %1157 = vmatprep.subr.bf16.mxu0 0
        %1158 = vmatpush1.bf16.msra.mxu0 0
        %1159 = vmatprep.mubr.bf16.mxu0 0
        %1160 = vmatmul.mubr.bf16.gmra.mrb[0].mxu0 %v1125
        %v1161 = vpop.f32.mrb[0].mxu0
        %v1162 = vadd.f32 %v1112, %v1161
        %v1163 = vpop.f32.mrb[0].mxu0
        %v1164 = vpop.f32.mrb[0].mxu0
        %v1165 = vadd.f32 %v1115, %v1164
        %v1166 = vpop.f32.mrb[0].mxu0
        %1167 = vdwg.mxu0
        %1168 = vrot.lane.b32.xlu0 %v819, 96
        %v1169 = vpop.permute.xlu0 %1168
        %1170 = vrot.lane.b32.xlu0 %v820, 96
        %v1171 = vpop.permute.xlu0 %1170
        %v1173 = vsel %vm822, %v1169, 0
        %v1176 = vsel %vm822, %v1171, 0
        %1178 = vmatprep.subr.bf16.mxu0 0
        %1179 = vmatpush1.bf16.xpose.msra.mxu0 %v1176
        %1180 = vmatprep.subr.bf16.mxu0 0
        %1181 = vmatpush1.bf16.xpose.msra.mxu0 0
        %1182 = vmatprep.subr.bf16.mxu0 0
        %1183 = vmatpush1.bf16.xpose.msra.mxu0 0
        %1184 = vmatprep.subr.bf16.mxu0 0
        %1185 = vmatpush1.bf16.xpose.msra.mxu0 0
        %1186 = vmatprep.subr.bf16.mxu0 0
        %1187 = vmatpush1.bf16.xpose.msra.mxu0 0
        %1188 = vmatprep.subr.bf16.mxu0 0
        %1189 = vmatpush1.bf16.xpose.msra.mxu0 0
        %1190 = vmatprep.subr.bf16.mxu0 0
        %1191 = vmatpush1.bf16.xpose.msra.mxu0 0
        %1192 = vmatprep.subr.bf16.mxu0 0
        %1193 = vmatpush1.bf16.xpose.msra.mxu0 0
        %1194 = vmatprep.subr.bf16.mxu0 0
        %1195 = vmatpush1.bf16.xpose.msra.mxu0 0
        %1196 = vmatprep.subr.bf16.mxu0 0
        %1197 = vmatpush1.bf16.xpose.msra.mxu0 0
        %1198 = vmatprep.subr.bf16.mxu0 0
        %1199 = vmatpush1.bf16.xpose.msra.mxu0 0
        %1200 = vmatprep.subr.bf16.mxu0 0
        %1201 = vmatpush1.bf16.xpose.msra.mxu0 0
        %1202 = vmatprep.subr.bf16.mxu0 0
        %1203 = vmatpush1.bf16.xpose.msra.mxu0 0
        %1204 = vmatprep.subr.bf16.mxu0 0
        %1205 = vmatpush1.bf16.xpose.msra.mxu0 0
        %1206 = vmatprep.subr.bf16.mxu0 0
        %1207 = vmatpush1.bf16.xpose.msra.mxu0 0
        %1208 = vmatprep.subr.bf16.mxu0 0
        %1209 = vmatpush1.bf16.xpose.msra.mxu0 0
        %1210 = vmatprep.mubr.bf16.mxu0 0
        %1211 = vmatmul.mubr.bf16.gmra.mrb[0].mxu0 %v1173
        %v1212 = vpop.f32.mrb[0].mxu0
        %v1213 = vadd.f32 0.0, %v1212
        %v1214 = vpop.f32.mrb[0].mxu0
        %v1215 = vpop.f32.mrb[0].mxu0
        %v1216 = vadd.f32 0.0, %v1215
        %v1217 = vpop.f32.mrb[0].mxu0
        %1218 = vdwg.mxu0
        %v1219 = vsel %vm822, %v1213, -inf
        %1220 = vmax.xlane.f32.xlu0 %v1219
        %v1221 = vpop.xlane.xlu0 %1220
        %v1222 = vsel %vm822, %v1216, -inf
        %1223 = vmax.xlane.f32.xlu0 %v1222
        %v1224 = vpop.xlane.xlu0 %1223
        %v1225 = vsub.f32 %v1213, %v1221
        %v1226 = vsub.f32 %v1216, %v1224
        %v1227 = vmul.f32 %v1225, 1.442695
        %v1228 = vpow.pop %v1227
        %v1229 = vmul.f32 %v1226, 1.442695
        %v1230 = vpow.pop %v1229
        %v1231 = vsel %vm822, %v1228, 0.0
        %1232 = vadd.xlane.f32.xlu0 %v1231
        %v1233 = vpop.xlane.xlu0 %1232
        %v1234 = vsel %vm822, %v1230, 0.0
        %1235 = vadd.xlane.f32.xlu0 %v1234
        %v1236 = vpop.xlane.xlu0 %1235
        %v1237 = vrcp.pop %v1233
        %v1238 = vrcp.pop %v1236
        %v1239 = vmul.f32 %v1228, %v1237
        %v1240 = vmul.f32 %v1230, %v1238
        %v1241 = vpack.c.bf16 %v1240, %v1239
        %1242 = vrot.lane.b32.xlu0 %v821, 96
        %v1243 = vpop.permute.xlu0 %1242
        %v1246 = vsel %vm822, %v1241, 0
        %1248 = vmatprep.subr.bf16.mxu0 0
        %1249 = vmatpush1.bf16.msra.mxu0 %v1243
        %1250 = vmatprep.subr.bf16.mxu0 0
        %1251 = vmatpush1.bf16.msra.mxu0 0
        %1252 = vmatprep.subr.bf16.mxu0 0
        %1253 = vmatpush1.bf16.msra.mxu0 0
        %1254 = vmatprep.subr.bf16.mxu0 0
        %1255 = vmatpush1.bf16.msra.mxu0 0
        %1256 = vmatprep.subr.bf16.mxu0 0
        %1257 = vmatpush1.bf16.msra.mxu0 0
        %1258 = vmatprep.subr.bf16.mxu0 0
        %1259 = vmatpush1.bf16.msra.mxu0 0
        %1260 = vmatprep.subr.bf16.mxu0 0
        %1261 = vmatpush1.bf16.msra.mxu0 0
        %1262 = vmatprep.subr.bf16.mxu0 0
        %1263 = vmatpush1.bf16.msra.mxu0 0
        %1264 = vmatprep.subr.bf16.mxu0 0
        %1265 = vmatpush1.bf16.msra.mxu0 0
        %1266 = vmatprep.subr.bf16.mxu0 0
        %1267 = vmatpush1.bf16.msra.mxu0 0
        %1268 = vmatprep.subr.bf16.mxu0 0
        %1269 = vmatpush1.bf16.msra.mxu0 0
        %1270 = vmatprep.subr.bf16.mxu0 0
        %1271 = vmatpush1.bf16.msra.mxu0 0
        %1272 = vmatprep.subr.bf16.mxu0 0
        %1273 = vmatpush1.bf16.msra.mxu0 0
        %1274 = vmatprep.subr.bf16.mxu0 0
        %1275 = vmatpush1.bf16.msra.mxu0 0
        %1276 = vmatprep.subr.bf16.mxu0 0
        %1277 = vmatpush1.bf16.msra.mxu0 0
        %1278 = vmatprep.subr.bf16.mxu0 0
        %1279 = vmatpush1.bf16.msra.mxu0 0
        %1280 = vmatprep.mubr.bf16.mxu0 0
        %1281 = vmatmul.mubr.bf16.gmra.mrb[0].mxu0 %v1246
        %v1282 = vpop.f32.mrb[0].mxu0
        %v1283 = vadd.f32 0.0, %v1282
        %v1284 = vpop.f32.mrb[0].mxu0
        %v1285 = vpop.f32.mrb[0].mxu0
        %v1286 = vadd.f32 0.0, %v1285
        %v1287 = vpop.f32.mrb[0].mxu0
        %1288 = vdwg.mxu0
        %v1289 = vpack.c.bf16 %v1286, %v1283
        %s1290 = scalar_lea.vmem [#allocation13], 16
        %v1291 = vld [vmem:[%s1290] sm:$0xf]
        %v1292 = vld [vmem:[%s1290 + $0x4] sm:$0xf]
        %v1295 = vunpack.c.l.b16 %v1291
        %v1296 = vunpack.c.l.b16 %v1292
        %v1297 = vpack.c.b16 %v1296, %v1295
        %v1300 = vsel %vm822, %v1289, 0
        %1302 = vmatprep.subr.bf16.mxu0 0
        %1303 = vmatpush1.bf16.msra.mxu0 %v1297
        %1304 = vmatprep.subr.bf16.mxu0 0
        %1305 = vmatpush1.bf16.msra.mxu0 0
        %1306 = vmatprep.subr.bf16.mxu0 0
        %1307 = vmatpush1.bf16.msra.mxu0 0
        %1308 = vmatprep.subr.bf16.mxu0 0
        %1309 = vmatpush1.bf16.msra.mxu0 0
        %1310 = vmatprep.subr.bf16.mxu0 0
        %1311 = vmatpush1.bf16.msra.mxu0 0
        %1312 = vmatprep.subr.bf16.mxu0 0
        %1313 = vmatpush1.bf16.msra.mxu0 0
        %1314 = vmatprep.subr.bf16.mxu0 0
        %1315 = vmatpush1.bf16.msra.mxu0 0
        %1316 = vmatprep.subr.bf16.mxu0 0
        %1317 = vmatpush1.bf16.msra.mxu0 0
        %1318 = vmatprep.subr.bf16.mxu0 0
        %1319 = vmatpush1.bf16.msra.mxu0 0
        %1320 = vmatprep.subr.bf16.mxu0 0
        %1321 = vmatpush1.bf16.msra.mxu0 0
        %1322 = vmatprep.subr.bf16.mxu0 0
        %1323 = vmatpush1.bf16.msra.mxu0 0
        %1324 = vmatprep.subr.bf16.mxu0 0
        %1325 = vmatpush1.bf16.msra.mxu0 0
        %1326 = vmatprep.subr.bf16.mxu0 0
        %1327 = vmatpush1.bf16.msra.mxu0 0
        %1328 = vmatprep.subr.bf16.mxu0 0
        %1329 = vmatpush1.bf16.msra.mxu0 0
        %1330 = vmatprep.subr.bf16.mxu0 0
        %1331 = vmatpush1.bf16.msra.mxu0 0
        %1332 = vmatprep.subr.bf16.mxu0 0
        %1333 = vmatpush1.bf16.msra.mxu0 0
        %1334 = vmatprep.mubr.bf16.mxu0 0
        %1335 = vmatmul.mubr.bf16.gmra.mrb[0].mxu0 %v1300
        %v1336 = vpop.f32.mrb[0].mxu0
        %v1337 = vadd.f32 0.0, %v1336
        %v1338 = vpop.f32.mrb[0].mxu0
        %v1339 = vpop.f32.mrb[0].mxu0
        %v1340 = vadd.f32 0.0, %v1339
        %v1341 = vpop.f32.mrb[0].mxu0
        %1342 = vdwg.mxu0
        %v1343 = vadd.f32 %v1162, %v1337
        %v1344 = vadd.f32 %v1165, %v1340
        %1345 = vrot.lane.b32.xlu0 %v819, 80
        %v1346 = vpop.permute.xlu0 %1345
        %1347 = vrot.lane.b32.xlu0 %v820, 80
        %v1348 = vpop.permute.xlu0 %1347
        %v1350 = vsel %vm822, %v1346, 0
        %v1353 = vsel %vm822, %v1348, 0
        %1355 = vmatprep.subr.bf16.mxu0 0
        %1356 = vmatpush1.bf16.xpose.msra.mxu0 %v1353
        %1357 = vmatprep.subr.bf16.mxu0 0
        %1358 = vmatpush1.bf16.xpose.msra.mxu0 0
        %1359 = vmatprep.subr.bf16.mxu0 0
        %1360 = vmatpush1.bf16.xpose.msra.mxu0 0
        %1361 = vmatprep.subr.bf16.mxu0 0
        %1362 = vmatpush1.bf16.xpose.msra.mxu0 0
        %1363 = vmatprep.subr.bf16.mxu0 0
        %1364 = vmatpush1.bf16.xpose.msra.mxu0 0
        %1365 = vmatprep.subr.bf16.mxu0 0
        %1366 = vmatpush1.bf16.xpose.msra.mxu0 0
        %1367 = vmatprep.subr.bf16.mxu0 0
        %1368 = vmatpush1.bf16.xpose.msra.mxu0 0
        %1369 = vmatprep.subr.bf16.mxu0 0
        %1370 = vmatpush1.bf16.xpose.msra.mxu0 0
        %1371 = vmatprep.subr.bf16.mxu0 0
        %1372 = vmatpush1.bf16.xpose.msra.mxu0 0
        %1373 = vmatprep.subr.bf16.mxu0 0
        %1374 = vmatpush1.bf16.xpose.msra.mxu0 0
        %1375 = vmatprep.subr.bf16.mxu0 0
        %1376 = vmatpush1.bf16.xpose.msra.mxu0 0
        %1377 = vmatprep.subr.bf16.mxu0 0
        %1378 = vmatpush1.bf16.xpose.msra.mxu0 0
        %1379 = vmatprep.subr.bf16.mxu0 0
        %1380 = vmatpush1.bf16.xpose.msra.mxu0 0
        %1381 = vmatprep.subr.bf16.mxu0 0
        %1382 = vmatpush1.bf16.xpose.msra.mxu0 0
        %1383 = vmatprep.subr.bf16.mxu0 0
        %1384 = vmatpush1.bf16.xpose.msra.mxu0 0
        %1385 = vmatprep.subr.bf16.mxu0 0
        %1386 = vmatpush1.bf16.xpose.msra.mxu0 0
        %1387 = vmatprep.mubr.bf16.mxu0 0
        %1388 = vmatmul.mubr.bf16.gmra.mrb[0].mxu0 %v1350
        %v1389 = vpop.f32.mrb[0].mxu0
        %v1390 = vadd.f32 0.0, %v1389
        %v1391 = vpop.f32.mrb[0].mxu0
        %v1392 = vpop.f32.mrb[0].mxu0
        %v1393 = vadd.f32 0.0, %v1392
        %v1394 = vpop.f32.mrb[0].mxu0
        %1395 = vdwg.mxu0
        %v1396 = vsel %vm822, %v1390, -inf
        %1397 = vmax.xlane.f32.xlu0 %v1396
        %v1398 = vpop.xlane.xlu0 %1397
        %v1399 = vsel %vm822, %v1393, -inf
        %1400 = vmax.xlane.f32.xlu0 %v1399
        %v1401 = vpop.xlane.xlu0 %1400
        %v1402 = vsub.f32 %v1390, %v1398
        %v1403 = vsub.f32 %v1393, %v1401
        %v1404 = vmul.f32 %v1402, 1.442695
        %v1405 = vpow.pop %v1404
        %v1406 = vmul.f32 %v1403, 1.442695
        %v1407 = vpow.pop %v1406
        %v1408 = vsel %vm822, %v1405, 0.0
        %1409 = vadd.xlane.f32.xlu0 %v1408
        %v1410 = vpop.xlane.xlu0 %1409
        %v1411 = vsel %vm822, %v1407, 0.0
        %1412 = vadd.xlane.f32.xlu0 %v1411
        %v1413 = vpop.xlane.xlu0 %1412
        %v1414 = vrcp.pop %v1410
        %v1415 = vrcp.pop %v1413
        %v1416 = vmul.f32 %v1405, %v1414
        %v1417 = vmul.f32 %v1407, %v1415
        %v1418 = vpack.c.bf16 %v1417, %v1416
        %1419 = vrot.lane.b32.xlu0 %v821, 80
        %v1420 = vpop.permute.xlu0 %1419
        %v1423 = vsel %vm822, %v1418, 0
        %1425 = vmatprep.subr.bf16.mxu0 0
        %1426 = vmatpush1.bf16.msra.mxu0 %v1420
        %1427 = vmatprep.subr.bf16.mxu0 0
        %1428 = vmatpush1.bf16.msra.mxu0 0
        %1429 = vmatprep.subr.bf16.mxu0 0
        %1430 = vmatpush1.bf16.msra.mxu0 0
        %1431 = vmatprep.subr.bf16.mxu0 0
        %1432 = vmatpush1.bf16.msra.mxu0 0
        %1433 = vmatprep.subr.bf16.mxu0 0
        %1434 = vmatpush1.bf16.msra.mxu0 0
        %1435 = vmatprep.subr.bf16.mxu0 0
        %1436 = vmatpush1.bf16.msra.mxu0 0
        %1437 = vmatprep.subr.bf16.mxu0 0
        %1438 = vmatpush1.bf16.msra.mxu0 0
        %1439 = vmatprep.subr.bf16.mxu0 0
        %1440 = vmatpush1.bf16.msra.mxu0 0
        %1441 = vmatprep.subr.bf16.mxu0 0
        %1442 = vmatpush1.bf16.msra.mxu0 0
        %1443 = vmatprep.subr.bf16.mxu0 0
        %1444 = vmatpush1.bf16.msra.mxu0 0
        %1445 = vmatprep.subr.bf16.mxu0 0
        %1446 = vmatpush1.bf16.msra.mxu0 0
        %1447 = vmatprep.subr.bf16.mxu0 0
        %1448 = vmatpush1.bf16.msra.mxu0 0
        %1449 = vmatprep.subr.bf16.mxu0 0
        %1450 = vmatpush1.bf16.msra.mxu0 0
        %1451 = vmatprep.subr.bf16.mxu0 0
        %1452 = vmatpush1.bf16.msra.mxu0 0
        %1453 = vmatprep.subr.bf16.mxu0 0
        %1454 = vmatpush1.bf16.msra.mxu0 0
        %1455 = vmatprep.subr.bf16.mxu0 0
        %1456 = vmatpush1.bf16.msra.mxu0 0
        %1457 = vmatprep.mubr.bf16.mxu0 0
        %1458 = vmatmul.mubr.bf16.gmra.mrb[0].mxu0 %v1423
        %v1459 = vpop.f32.mrb[0].mxu0
        %v1460 = vadd.f32 0.0, %v1459
        %v1461 = vpop.f32.mrb[0].mxu0
        %v1462 = vpop.f32.mrb[0].mxu0
        %v1463 = vadd.f32 0.0, %v1462
        %v1464 = vpop.f32.mrb[0].mxu0
        %1465 = vdwg.mxu0
        %v1466 = vpack.c.bf16 %v1463, %v1460
        %s1467 = scalar_lea.vmem [#allocation13], 24
        %v1468 = vld [vmem:[%s1467] sm:$0xf]
        %v1469 = vld [vmem:[%s1467 + $0x4] sm:$0xf]
        %v1472 = vunpack.c.l.b16 %v1468
        %v1473 = vunpack.c.l.b16 %v1469
        %v1474 = vpack.c.b16 %v1473, %v1472
        %v1477 = vsel %vm822, %v1466, 0
        %1479 = vmatprep.subr.bf16.mxu0 0
        %1480 = vmatpush1.bf16.msra.mxu0 %v1474
        %1481 = vmatprep.subr.bf16.mxu0 0
        %1482 = vmatpush1.bf16.msra.mxu0 0
        %1483 = vmatprep.subr.bf16.mxu0 0
        %1484 = vmatpush1.bf16.msra.mxu0 0
        %1485 = vmatprep.subr.bf16.mxu0 0
        %1486 = vmatpush1.bf16.msra.mxu0 0
        %1487 = vmatprep.subr.bf16.mxu0 0
        %1488 = vmatpush1.bf16.msra.mxu0 0
        %1489 = vmatprep.subr.bf16.mxu0 0
        %1490 = vmatpush1.bf16.msra.mxu0 0
        %1491 = vmatprep.subr.bf16.mxu0 0
        %1492 = vmatpush1.bf16.msra.mxu0 0
        %1493 = vmatprep.subr.bf16.mxu0 0
        %1494 = vmatpush1.bf16.msra.mxu0 0
        %1495 = vmatprep.subr.bf16.mxu0 0
        %1496 = vmatpush1.bf16.msra.mxu0 0
        %1497 = vmatprep.subr.bf16.mxu0 0
        %1498 = vmatpush1.bf16.msra.mxu0 0
        %1499 = vmatprep.subr.bf16.mxu0 0
        %1500 = vmatpush1.bf16.msra.mxu0 0
        %1501 = vmatprep.subr.bf16.mxu0 0
        %1502 = vmatpush1.bf16.msra.mxu0 0
        %1503 = vmatprep.subr.bf16.mxu0 0
        %1504 = vmatpush1.bf16.msra.mxu0 0
        %1505 = vmatprep.subr.bf16.mxu0 0
        %1506 = vmatpush1.bf16.msra.mxu0 0
        %1507 = vmatprep.subr.bf16.mxu0 0
        %1508 = vmatpush1.bf16.msra.mxu0 0
        %1509 = vmatprep.subr.bf16.mxu0 0
        %1510 = vmatpush1.bf16.msra.mxu0 0
        %1511 = vmatprep.mubr.bf16.mxu0 0
        %1512 = vmatmul.mubr.bf16.gmra.mrb[0].mxu0 %v1477
        %v1513 = vpop.f32.mrb[0].mxu0
        %v1514 = vadd.f32 0.0, %v1513
        %v1515 = vpop.f32.mrb[0].mxu0
        %v1516 = vpop.f32.mrb[0].mxu0
        %v1517 = vadd.f32 0.0, %v1516
        %v1518 = vpop.f32.mrb[0].mxu0
        %1519 = vdwg.mxu0
        %v1520 = vadd.f32 %v1343, %v1514
        %v1521 = vadd.f32 %v1344, %v1517
        %1522 = vrot.lane.b32.xlu0 %v819, 64
        %v1523 = vpop.permute.xlu0 %1522
        %1524 = vrot.lane.b32.xlu0 %v820, 64
        %v1525 = vpop.permute.xlu0 %1524
        %v1527 = vsel %vm822, %v1523, 0
        %v1530 = vsel %vm822, %v1525, 0
        %1532 = vmatprep.subr.bf16.mxu0 0
        %1533 = vmatpush1.bf16.xpose.msra.mxu0 %v1530
        %1534 = vmatprep.subr.bf16.mxu0 0
        %1535 = vmatpush1.bf16.xpose.msra.mxu0 0
        %1536 = vmatprep.subr.bf16.mxu0 0
        %1537 = vmatpush1.bf16.xpose.msra.mxu0 0
        %1538 = vmatprep.subr.bf16.mxu0 0
        %1539 = vmatpush1.bf16.xpose.msra.mxu0 0
        %1540 = vmatprep.subr.bf16.mxu0 0
        %1541 = vmatpush1.bf16.xpose.msra.mxu0 0
        %1542 = vmatprep.subr.bf16.mxu0 0
        %1543 = vmatpush1.bf16.xpose.msra.mxu0 0
        %1544 = vmatprep.subr.bf16.mxu0 0
        %1545 = vmatpush1.bf16.xpose.msra.mxu0 0
        %1546 = vmatprep.subr.bf16.mxu0 0
        %1547 = vmatpush1.bf16.xpose.msra.mxu0 0
        %1548 = vmatprep.subr.bf16.mxu0 0
        %1549 = vmatpush1.bf16.xpose.msra.mxu0 0
        %1550 = vmatprep.subr.bf16.mxu0 0
        %1551 = vmatpush1.bf16.xpose.msra.mxu0 0
        %1552 = vmatprep.subr.bf16.mxu0 0
        %1553 = vmatpush1.bf16.xpose.msra.mxu0 0
        %1554 = vmatprep.subr.bf16.mxu0 0
        %1555 = vmatpush1.bf16.xpose.msra.mxu0 0
        %1556 = vmatprep.subr.bf16.mxu0 0
        %1557 = vmatpush1.bf16.xpose.msra.mxu0 0
        %1558 = vmatprep.subr.bf16.mxu0 0
        %1559 = vmatpush1.bf16.xpose.msra.mxu0 0
        %1560 = vmatprep.subr.bf16.mxu0 0
        %1561 = vmatpush1.bf16.xpose.msra.mxu0 0
        %1562 = vmatprep.subr.bf16.mxu0 0
        %1563 = vmatpush1.bf16.xpose.msra.mxu0 0
        %1564 = vmatprep.mubr.bf16.mxu0 0
        %1565 = vmatmul.mubr.bf16.gmra.mrb[0].mxu0 %v1527
        %v1566 = vpop.f32.mrb[0].mxu0
        %v1567 = vadd.f32 0.0, %v1566
        %v1568 = vpop.f32.mrb[0].mxu0
        %v1569 = vpop.f32.mrb[0].mxu0
        %v1570 = vadd.f32 0.0, %v1569
        %v1571 = vpop.f32.mrb[0].mxu0
        %1572 = vdwg.mxu0
        %v1573 = vsel %vm822, %v1567, -inf
        %1574 = vmax.xlane.f32.xlu0 %v1573
        %v1575 = vpop.xlane.xlu0 %1574
        %v1576 = vsel %vm822, %v1570, -inf
        %1577 = vmax.xlane.f32.xlu0 %v1576
        %v1578 = vpop.xlane.xlu0 %1577
        %v1579 = vsub.f32 %v1567, %v1575
        %v1580 = vsub.f32 %v1570, %v1578
        %v1581 = vmul.f32 %v1579, 1.442695
        %v1582 = vpow.pop %v1581
        %v1583 = vmul.f32 %v1580, 1.442695
        %v1584 = vpow.pop %v1583
        %v1585 = vsel %vm822, %v1582, 0.0
        %1586 = vadd.xlane.f32.xlu0 %v1585
        %v1587 = vpop.xlane.xlu0 %1586
        %v1588 = vsel %vm822, %v1584, 0.0
        %1589 = vadd.xlane.f32.xlu0 %v1588
        %v1590 = vpop.xlane.xlu0 %1589
        %v1591 = vrcp.pop %v1587
        %v1592 = vrcp.pop %v1590
        %v1593 = vmul.f32 %v1582, %v1591
        %v1594 = vmul.f32 %v1584, %v1592
        %v1595 = vpack.c.bf16 %v1594, %v1593
        %1596 = vrot.lane.b32.xlu0 %v821, 64
        %v1597 = vpop.permute.xlu0 %1596
        %v1600 = vsel %vm822, %v1595, 0
        %1602 = vmatprep.subr.bf16.mxu0 0
        %1603 = vmatpush1.bf16.msra.mxu0 %v1597
        %1604 = vmatprep.subr.bf16.mxu0 0
        %1605 = vmatpush1.bf16.msra.mxu0 0
        %1606 = vmatprep.subr.bf16.mxu0 0
        %1607 = vmatpush1.bf16.msra.mxu0 0
        %1608 = vmatprep.subr.bf16.mxu0 0
        %1609 = vmatpush1.bf16.msra.mxu0 0
        %1610 = vmatprep.subr.bf16.mxu0 0
        %1611 = vmatpush1.bf16.msra.mxu0 0
        %1612 = vmatprep.subr.bf16.mxu0 0
        %1613 = vmatpush1.bf16.msra.mxu0 0
        %1614 = vmatprep.subr.bf16.mxu0 0
        %1615 = vmatpush1.bf16.msra.mxu0 0
        %1616 = vmatprep.subr.bf16.mxu0 0
        %1617 = vmatpush1.bf16.msra.mxu0 0
        %1618 = vmatprep.subr.bf16.mxu0 0
        %1619 = vmatpush1.bf16.msra.mxu0 0
        %1620 = vmatprep.subr.bf16.mxu0 0
        %1621 = vmatpush1.bf16.msra.mxu0 0
        %1622 = vmatprep.subr.bf16.mxu0 0
        %1623 = vmatpush1.bf16.msra.mxu0 0
        %1624 = vmatprep.subr.bf16.mxu0 0
        %1625 = vmatpush1.bf16.msra.mxu0 0
        %1626 = vmatprep.subr.bf16.mxu0 0
        %1627 = vmatpush1.bf16.msra.mxu0 0
        %1628 = vmatprep.subr.bf16.mxu0 0
        %1629 = vmatpush1.bf16.msra.mxu0 0
        %1630 = vmatprep.subr.bf16.mxu0 0
        %1631 = vmatpush1.bf16.msra.mxu0 0
        %1632 = vmatprep.subr.bf16.mxu0 0
        %1633 = vmatpush1.bf16.msra.mxu0 0
        %1634 = vmatprep.mubr.bf16.mxu0 0
        %1635 = vmatmul.mubr.bf16.gmra.mrb[0].mxu0 %v1600
        %v1636 = vpop.f32.mrb[0].mxu0
        %v1637 = vadd.f32 0.0, %v1636
        %v1638 = vpop.f32.mrb[0].mxu0
        %v1639 = vpop.f32.mrb[0].mxu0
        %v1640 = vadd.f32 0.0, %v1639
        %v1641 = vpop.f32.mrb[0].mxu0
        %1642 = vdwg.mxu0
        %v1643 = vpack.c.bf16 %v1640, %v1637
        %s1644 = scalar_lea.vmem [#allocation13], 32
        %v1645 = vld [vmem:[%s1644] sm:$0xf]
        %v1646 = vld [vmem:[%s1644 + $0x4] sm:$0xf]
        %v1649 = vunpack.c.l.b16 %v1645
        %v1650 = vunpack.c.l.b16 %v1646
        %v1651 = vpack.c.b16 %v1650, %v1649
        %v1654 = vsel %vm822, %v1643, 0
        %1656 = vmatprep.subr.bf16.mxu0 0
        %1657 = vmatpush1.bf16.msra.mxu0 %v1651
        %1658 = vmatprep.subr.bf16.mxu0 0
        %1659 = vmatpush1.bf16.msra.mxu0 0
        %1660 = vmatprep.subr.bf16.mxu0 0
        %1661 = vmatpush1.bf16.msra.mxu0 0
        %1662 = vmatprep.subr.bf16.mxu0 0
        %1663 = vmatpush1.bf16.msra.mxu0 0
        %1664 = vmatprep.subr.bf16.mxu0 0
        %1665 = vmatpush1.bf16.msra.mxu0 0
        %1666 = vmatprep.subr.bf16.mxu0 0
        %1667 = vmatpush1.bf16.msra.mxu0 0
        %1668 = vmatprep.subr.bf16.mxu0 0
        %1669 = vmatpush1.bf16.msra.mxu0 0
        %1670 = vmatprep.subr.bf16.mxu0 0
        %1671 = vmatpush1.bf16.msra.mxu0 0
        %1672 = vmatprep.subr.bf16.mxu0 0
        %1673 = vmatpush1.bf16.msra.mxu0 0
        %1674 = vmatprep.subr.bf16.mxu0 0
        %1675 = vmatpush1.bf16.msra.mxu0 0
        %1676 = vmatprep.subr.bf16.mxu0 0
        %1677 = vmatpush1.bf16.msra.mxu0 0
        %1678 = vmatprep.subr.bf16.mxu0 0
        %1679 = vmatpush1.bf16.msra.mxu0 0
        %1680 = vmatprep.subr.bf16.mxu0 0
        %1681 = vmatpush1.bf16.msra.mxu0 0
        %1682 = vmatprep.subr.bf16.mxu0 0
        %1683 = vmatpush1.bf16.msra.mxu0 0
        %1684 = vmatprep.subr.bf16.mxu0 0
        %1685 = vmatpush1.bf16.msra.mxu0 0
        %1686 = vmatprep.subr.bf16.mxu0 0
        %1687 = vmatpush1.bf16.msra.mxu0 0
        %1688 = vmatprep.mubr.bf16.mxu0 0
        %1689 = vmatmul.mubr.bf16.gmra.mrb[0].mxu0 %v1654
        %v1690 = vpop.f32.mrb[0].mxu0
        %v1691 = vadd.f32 0.0, %v1690
        %v1692 = vpop.f32.mrb[0].mxu0
        %v1693 = vpop.f32.mrb[0].mxu0
        %v1694 = vadd.f32 0.0, %v1693
        %v1695 = vpop.f32.mrb[0].mxu0
        %1696 = vdwg.mxu0
        %v1697 = vadd.f32 %v1520, %v1691
        %v1698 = vadd.f32 %v1521, %v1694
        %1699 = vrot.lane.b32.xlu0 %v819, 48
        %v1700 = vpop.permute.xlu0 %1699
        %1701 = vrot.lane.b32.xlu0 %v820, 48
        %v1702 = vpop.permute.xlu0 %1701
        %v1704 = vsel %vm822, %v1700, 0
        %v1707 = vsel %vm822, %v1702, 0
        %1709 = vmatprep.subr.bf16.mxu0 0
        %1710 = vmatpush1.bf16.xpose.msra.mxu0 %v1707
        %1711 = vmatprep.subr.bf16.mxu0 0
        %1712 = vmatpush1.bf16.xpose.msra.mxu0 0
        %1713 = vmatprep.subr.bf16.mxu0 0
        %1714 = vmatpush1.bf16.xpose.msra.mxu0 0
        %1715 = vmatprep.subr.bf16.mxu0 0
        %1716 = vmatpush1.bf16.xpose.msra.mxu0 0
        %1717 = vmatprep.subr.bf16.mxu0 0
        %1718 = vmatpush1.bf16.xpose.msra.mxu0 0
        %1719 = vmatprep.subr.bf16.mxu0 0
        %1720 = vmatpush1.bf16.xpose.msra.mxu0 0
        %1721 = vmatprep.subr.bf16.mxu0 0
        %1722 = vmatpush1.bf16.xpose.msra.mxu0 0
        %1723 = vmatprep.subr.bf16.mxu0 0
        %1724 = vmatpush1.bf16.xpose.msra.mxu0 0
        %1725 = vmatprep.subr.bf16.mxu0 0
        %1726 = vmatpush1.bf16.xpose.msra.mxu0 0
        %1727 = vmatprep.subr.bf16.mxu0 0
        %1728 = vmatpush1.bf16.xpose.msra.mxu0 0
        %1729 = vmatprep.subr.bf16.mxu0 0
        %1730 = vmatpush1.bf16.xpose.msra.mxu0 0
        %1731 = vmatprep.subr.bf16.mxu0 0
        %1732 = vmatpush1.bf16.xpose.msra.mxu0 0
        %1733 = vmatprep.subr.bf16.mxu0 0
        %1734 = vmatpush1.bf16.xpose.msra.mxu0 0
        %1735 = vmatprep.subr.bf16.mxu0 0
        %1736 = vmatpush1.bf16.xpose.msra.mxu0 0
        %1737 = vmatprep.subr.bf16.mxu0 0
        %1738 = vmatpush1.bf16.xpose.msra.mxu0 0
        %1739 = vmatprep.subr.bf16.mxu0 0
        %1740 = vmatpush1.bf16.xpose.msra.mxu0 0
        %1741 = vmatprep.mubr.bf16.mxu0 0
        %1742 = vmatmul.mubr.bf16.gmra.mrb[0].mxu0 %v1704
        %v1743 = vpop.f32.mrb[0].mxu0
        %v1744 = vadd.f32 0.0, %v1743
        %v1745 = vpop.f32.mrb[0].mxu0
        %v1746 = vpop.f32.mrb[0].mxu0
        %v1747 = vadd.f32 0.0, %v1746
        %v1748 = vpop.f32.mrb[0].mxu0
        %1749 = vdwg.mxu0
        %v1750 = vsel %vm822, %v1744, -inf
        %1751 = vmax.xlane.f32.xlu0 %v1750
        %v1752 = vpop.xlane.xlu0 %1751
        %v1753 = vsel %vm822, %v1747, -inf
        %1754 = vmax.xlane.f32.xlu0 %v1753
        %v1755 = vpop.xlane.xlu0 %1754
        %v1756 = vsub.f32 %v1744, %v1752
        %v1757 = vsub.f32 %v1747, %v1755
        %v1758 = vmul.f32 %v1756, 1.442695
        %v1759 = vpow.pop %v1758
        %v1760 = vmul.f32 %v1757, 1.442695
        %v1761 = vpow.pop %v1760
        %v1762 = vsel %vm822, %v1759, 0.0
        %1763 = vadd.xlane.f32.xlu0 %v1762
        %v1764 = vpop.xlane.xlu0 %1763
        %v1765 = vsel %vm822, %v1761, 0.0
        %1766 = vadd.xlane.f32.xlu0 %v1765
        %v1767 = vpop.xlane.xlu0 %1766
        %v1768 = vrcp.pop %v1764
        %v1769 = vrcp.pop %v1767
        %v1770 = vmul.f32 %v1759, %v1768
        %v1771 = vmul.f32 %v1761, %v1769
        %v1772 = vpack.c.bf16 %v1771, %v1770
        %1773 = vrot.lane.b32.xlu0 %v821, 48
        %v1774 = vpop.permute.xlu0 %1773
        %v1777 = vsel %vm822, %v1772, 0
        %1779 = vmatprep.subr.bf16.mxu0 0
        %1780 = vmatpush1.bf16.msra.mxu0 %v1774
        %1781 = vmatprep.subr.bf16.mxu0 0
        %1782 = vmatpush1.bf16.msra.mxu0 0
        %1783 = vmatprep.subr.bf16.mxu0 0
        %1784 = vmatpush1.bf16.msra.mxu0 0
        %1785 = vmatprep.subr.bf16.mxu0 0
        %1786 = vmatpush1.bf16.msra.mxu0 0
        %1787 = vmatprep.subr.bf16.mxu0 0
        %1788 = vmatpush1.bf16.msra.mxu0 0
        %1789 = vmatprep.subr.bf16.mxu0 0
        %1790 = vmatpush1.bf16.msra.mxu0 0
        %1791 = vmatprep.subr.bf16.mxu0 0
        %1792 = vmatpush1.bf16.msra.mxu0 0
        %1793 = vmatprep.subr.bf16.mxu0 0
        %1794 = vmatpush1.bf16.msra.mxu0 0
        %1795 = vmatprep.subr.bf16.mxu0 0
        %1796 = vmatpush1.bf16.msra.mxu0 0
        %1797 = vmatprep.subr.bf16.mxu0 0
        %1798 = vmatpush1.bf16.msra.mxu0 0
        %1799 = vmatprep.subr.bf16.mxu0 0
        %1800 = vmatpush1.bf16.msra.mxu0 0
        %1801 = vmatprep.subr.bf16.mxu0 0
        %1802 = vmatpush1.bf16.msra.mxu0 0
        %1803 = vmatprep.subr.bf16.mxu0 0
        %1804 = vmatpush1.bf16.msra.mxu0 0
        %1805 = vmatprep.subr.bf16.mxu0 0
        %1806 = vmatpush1.bf16.msra.mxu0 0
        %1807 = vmatprep.subr.bf16.mxu0 0
        %1808 = vmatpush1.bf16.msra.mxu0 0
        %1809 = vmatprep.subr.bf16.mxu0 0
        %1810 = vmatpush1.bf16.msra.mxu0 0
        %1811 = vmatprep.mubr.bf16.mxu0 0
        %1812 = vmatmul.mubr.bf16.gmra.mrb[0].mxu0 %v1777
        %v1813 = vpop.f32.mrb[0].mxu0
        %v1814 = vadd.f32 0.0, %v1813
        %v1815 = vpop.f32.mrb[0].mxu0
        %v1816 = vpop.f32.mrb[0].mxu0
        %v1817 = vadd.f32 0.0, %v1816
        %v1818 = vpop.f32.mrb[0].mxu0
        %1819 = vdwg.mxu0
        %v1820 = vpack.c.bf16 %v1817, %v1814
        %s1821 = scalar_lea.vmem [#allocation13], 40
        %v1822 = vld [vmem:[%s1821] sm:$0xf]
        %v1823 = vld [vmem:[%s1821 + $0x4] sm:$0xf]
        %v1826 = vunpack.c.l.b16 %v1822
        %v1827 = vunpack.c.l.b16 %v1823
        %v1828 = vpack.c.b16 %v1827, %v1826
        %v1831 = vsel %vm822, %v1820, 0
        %1833 = vmatprep.subr.bf16.mxu0 0
        %1834 = vmatpush1.bf16.msra.mxu0 %v1828
        %1835 = vmatprep.subr.bf16.mxu0 0
        %1836 = vmatpush1.bf16.msra.mxu0 0
        %1837 = vmatprep.subr.bf16.mxu0 0
        %1838 = vmatpush1.bf16.msra.mxu0 0
        %1839 = vmatprep.subr.bf16.mxu0 0
        %1840 = vmatpush1.bf16.msra.mxu0 0
        %1841 = vmatprep.subr.bf16.mxu0 0
        %1842 = vmatpush1.bf16.msra.mxu0 0
        %1843 = vmatprep.subr.bf16.mxu0 0
        %1844 = vmatpush1.bf16.msra.mxu0 0
        %1845 = vmatprep.subr.bf16.mxu0 0
        %1846 = vmatpush1.bf16.msra.mxu0 0
        %1847 = vmatprep.subr.bf16.mxu0 0
        %1848 = vmatpush1.bf16.msra.mxu0 0
        %1849 = vmatprep.subr.bf16.mxu0 0
        %1850 = vmatpush1.bf16.msra.mxu0 0
        %1851 = vmatprep.subr.bf16.mxu0 0
        %1852 = vmatpush1.bf16.msra.mxu0 0
        %1853 = vmatprep.subr.bf16.mxu0 0
        %1854 = vmatpush1.bf16.msra.mxu0 0
        %1855 = vmatprep.subr.bf16.mxu0 0
        %1856 = vmatpush1.bf16.msra.mxu0 0
        %1857 = vmatprep.subr.bf16.mxu0 0
        %1858 = vmatpush1.bf16.msra.mxu0 0
        %1859 = vmatprep.subr.bf16.mxu0 0
        %1860 = vmatpush1.bf16.msra.mxu0 0
        %1861 = vmatprep.subr.bf16.mxu0 0
        %1862 = vmatpush1.bf16.msra.mxu0 0
        %1863 = vmatprep.subr.bf16.mxu0 0
        %1864 = vmatpush1.bf16.msra.mxu0 0
        %1865 = vmatprep.mubr.bf16.mxu0 0
        %1866 = vmatmul.mubr.bf16.gmra.mrb[0].mxu0 %v1831
        %v1867 = vpop.f32.mrb[0].mxu0
        %v1868 = vadd.f32 0.0, %v1867
        %v1869 = vpop.f32.mrb[0].mxu0
        %v1870 = vpop.f32.mrb[0].mxu0
        %v1871 = vadd.f32 0.0, %v1870
        %v1872 = vpop.f32.mrb[0].mxu0
        %1873 = vdwg.mxu0
        %v1874 = vadd.f32 %v1697, %v1868
        %v1875 = vadd.f32 %v1698, %v1871
        %1876 = vrot.lane.b32.xlu0 %v819, 32
        %v1877 = vpop.permute.xlu0 %1876
        %1878 = vrot.lane.b32.xlu0 %v820, 32
        %v1879 = vpop.permute.xlu0 %1878
        %v1881 = vsel %vm822, %v1877, 0
        %v1884 = vsel %vm822, %v1879, 0
        %1886 = vmatprep.subr.bf16.mxu0 0
        %1887 = vmatpush1.bf16.xpose.msra.mxu0 %v1884
        %1888 = vmatprep.subr.bf16.mxu0 0
        %1889 = vmatpush1.bf16.xpose.msra.mxu0 0
        %1890 = vmatprep.subr.bf16.mxu0 0
        %1891 = vmatpush1.bf16.xpose.msra.mxu0 0
        %1892 = vmatprep.subr.bf16.mxu0 0
        %1893 = vmatpush1.bf16.xpose.msra.mxu0 0
        %1894 = vmatprep.subr.bf16.mxu0 0
        %1895 = vmatpush1.bf16.xpose.msra.mxu0 0
        %1896 = vmatprep.subr.bf16.mxu0 0
        %1897 = vmatpush1.bf16.xpose.msra.mxu0 0
        %1898 = vmatprep.subr.bf16.mxu0 0
        %1899 = vmatpush1.bf16.xpose.msra.mxu0 0
        %1900 = vmatprep.subr.bf16.mxu0 0
        %1901 = vmatpush1.bf16.xpose.msra.mxu0 0
        %1902 = vmatprep.subr.bf16.mxu0 0
        %1903 = vmatpush1.bf16.xpose.msra.mxu0 0
        %1904 = vmatprep.subr.bf16.mxu0 0
        %1905 = vmatpush1.bf16.xpose.msra.mxu0 0
        %1906 = vmatprep.subr.bf16.mxu0 0
        %1907 = vmatpush1.bf16.xpose.msra.mxu0 0
        %1908 = vmatprep.subr.bf16.mxu0 0
        %1909 = vmatpush1.bf16.xpose.msra.mxu0 0
        %1910 = vmatprep.subr.bf16.mxu0 0
        %1911 = vmatpush1.bf16.xpose.msra.mxu0 0
        %1912 = vmatprep.subr.bf16.mxu0 0
        %1913 = vmatpush1.bf16.xpose.msra.mxu0 0
        %1914 = vmatprep.subr.bf16.mxu0 0
        %1915 = vmatpush1.bf16.xpose.msra.mxu0 0
        %1916 = vmatprep.subr.bf16.mxu0 0
        %1917 = vmatpush1.bf16.xpose.msra.mxu0 0
        %1918 = vmatprep.mubr.bf16.mxu0 0
        %1919 = vmatmul.mubr.bf16.gmra.mrb[0].mxu0 %v1881
        %v1920 = vpop.f32.mrb[0].mxu0
        %v1921 = vadd.f32 0.0, %v1920
        %v1922 = vpop.f32.mrb[0].mxu0
        %v1923 = vpop.f32.mrb[0].mxu0
        %v1924 = vadd.f32 0.0, %v1923
        %v1925 = vpop.f32.mrb[0].mxu0
        %1926 = vdwg.mxu0
        %v1927 = vsel %vm822, %v1921, -inf
        %1928 = vmax.xlane.f32.xlu0 %v1927
        %v1929 = vpop.xlane.xlu0 %1928
        %v1930 = vsel %vm822, %v1924, -inf
        %1931 = vmax.xlane.f32.xlu0 %v1930
        %v1932 = vpop.xlane.xlu0 %1931
        %v1933 = vsub.f32 %v1921, %v1929
        %v1934 = vsub.f32 %v1924, %v1932
        %v1935 = vmul.f32 %v1933, 1.442695
        %v1936 = vpow.pop %v1935
        %v1937 = vmul.f32 %v1934, 1.442695
        %v1938 = vpow.pop %v1937
        %v1939 = vsel %vm822, %v1936, 0.0
        %1940 = vadd.xlane.f32.xlu0 %v1939
        %v1941 = vpop.xlane.xlu0 %1940
        %v1942 = vsel %vm822, %v1938, 0.0
        %1943 = vadd.xlane.f32.xlu0 %v1942
        %v1944 = vpop.xlane.xlu0 %1943
        %v1945 = vrcp.pop %v1941
        %v1946 = vrcp.pop %v1944
        %v1947 = vmul.f32 %v1936, %v1945
        %v1948 = vmul.f32 %v1938, %v1946
        %v1949 = vpack.c.bf16 %v1948, %v1947
        %1950 = vrot.lane.b32.xlu0 %v821, 32
        %v1951 = vpop.permute.xlu0 %1950
        %v1954 = vsel %vm822, %v1949, 0
        %1956 = vmatprep.subr.bf16.mxu0 0
        %1957 = vmatpush1.bf16.msra.mxu0 %v1951
        %1958 = vmatprep.subr.bf16.mxu0 0
        %1959 = vmatpush1.bf16.msra.mxu0 0
        %1960 = vmatprep.subr.bf16.mxu0 0
        %1961 = vmatpush1.bf16.msra.mxu0 0
        %1962 = vmatprep.subr.bf16.mxu0 0
        %1963 = vmatpush1.bf16.msra.mxu0 0
        %1964 = vmatprep.subr.bf16.mxu0 0
        %1965 = vmatpush1.bf16.msra.mxu0 0
        %1966 = vmatprep.subr.bf16.mxu0 0
        %1967 = vmatpush1.bf16.msra.mxu0 0
        %1968 = vmatprep.subr.bf16.mxu0 0
        %1969 = vmatpush1.bf16.msra.mxu0 0
        %1970 = vmatprep.subr.bf16.mxu0 0
        %1971 = vmatpush1.bf16.msra.mxu0 0
        %1972 = vmatprep.subr.bf16.mxu0 0
        %1973 = vmatpush1.bf16.msra.mxu0 0
        %1974 = vmatprep.subr.bf16.mxu0 0
        %1975 = vmatpush1.bf16.msra.mxu0 0
        %1976 = vmatprep.subr.bf16.mxu0 0
        %1977 = vmatpush1.bf16.msra.mxu0 0
        %1978 = vmatprep.subr.bf16.mxu0 0
        %1979 = vmatpush1.bf16.msra.mxu0 0
        %1980 = vmatprep.subr.bf16.mxu0 0
        %1981 = vmatpush1.bf16.msra.mxu0 0
        %1982 = vmatprep.subr.bf16.mxu0 0
        %1983 = vmatpush1.bf16.msra.mxu0 0
        %1984 = vmatprep.subr.bf16.mxu0 0
        %1985 = vmatpush1.bf16.msra.mxu0 0
        %1986 = vmatprep.subr.bf16.mxu0 0
        %1987 = vmatpush1.bf16.msra.mxu0 0
        %1988 = vmatprep.mubr.bf16.mxu0 0
        %1989 = vmatmul.mubr.bf16.gmra.mrb[0].mxu0 %v1954
        %v1990 = vpop.f32.mrb[0].mxu0
        %v1991 = vadd.f32 0.0, %v1990
        %v1992 = vpop.f32.mrb[0].mxu0
        %v1993 = vpop.f32.mrb[0].mxu0
        %v1994 = vadd.f32 0.0, %v1993
        %v1995 = vpop.f32.mrb[0].mxu0
        %1996 = vdwg.mxu0
        %v1997 = vpack.c.bf16 %v1994, %v1991
        %s1998 = scalar_lea.vmem [#allocation13], 48
        %v1999 = vld [vmem:[%s1998] sm:$0xf]
        %v2000 = vld [vmem:[%s1998 + $0x4] sm:$0xf]
        %v2003 = vunpack.c.l.b16 %v1999
        %v2004 = vunpack.c.l.b16 %v2000
        %v2005 = vpack.c.b16 %v2004, %v2003
        %v2008 = vsel %vm822, %v1997, 0
        %2010 = vmatprep.subr.bf16.mxu0 0
        %2011 = vmatpush1.bf16.msra.mxu0 %v2005
        %2012 = vmatprep.subr.bf16.mxu0 0
        %2013 = vmatpush1.bf16.msra.mxu0 0
        %2014 = vmatprep.subr.bf16.mxu0 0
        %2015 = vmatpush1.bf16.msra.mxu0 0
        %2016 = vmatprep.subr.bf16.mxu0 0
        %2017 = vmatpush1.bf16.msra.mxu0 0
        %2018 = vmatprep.subr.bf16.mxu0 0
        %2019 = vmatpush1.bf16.msra.mxu0 0
        %2020 = vmatprep.subr.bf16.mxu0 0
        %2021 = vmatpush1.bf16.msra.mxu0 0
        %2022 = vmatprep.subr.bf16.mxu0 0
        %2023 = vmatpush1.bf16.msra.mxu0 0
        %2024 = vmatprep.subr.bf16.mxu0 0
        %2025 = vmatpush1.bf16.msra.mxu0 0
        %2026 = vmatprep.subr.bf16.mxu0 0
        %2027 = vmatpush1.bf16.msra.mxu0 0
        %2028 = vmatprep.subr.bf16.mxu0 0
        %2029 = vmatpush1.bf16.msra.mxu0 0
        %2030 = vmatprep.subr.bf16.mxu0 0
        %2031 = vmatpush1.bf16.msra.mxu0 0
        %2032 = vmatprep.subr.bf16.mxu0 0
        %2033 = vmatpush1.bf16.msra.mxu0 0
        %2034 = vmatprep.subr.bf16.mxu0 0
        %2035 = vmatpush1.bf16.msra.mxu0 0
        %2036 = vmatprep.subr.bf16.mxu0 0
        %2037 = vmatpush1.bf16.msra.mxu0 0
        %2038 = vmatprep.subr.bf16.mxu0 0
        %2039 = vmatpush1.bf16.msra.mxu0 0
        %2040 = vmatprep.subr.bf16.mxu0 0
        %2041 = vmatpush1.bf16.msra.mxu0 0
        %2042 = vmatprep.mubr.bf16.mxu0 0
        %2043 = vmatmul.mubr.bf16.gmra.mrb[0].mxu0 %v2008
        %v2044 = vpop.f32.mrb[0].mxu0
        %v2045 = vadd.f32 0.0, %v2044
        %v2046 = vpop.f32.mrb[0].mxu0
        %v2047 = vpop.f32.mrb[0].mxu0
        %v2048 = vadd.f32 0.0, %v2047
        %v2049 = vpop.f32.mrb[0].mxu0
        %2050 = vdwg.mxu0
        %v2051 = vadd.f32 %v1874, %v2045
        %v2052 = vadd.f32 %v1875, %v2048
        %2053 = vrot.lane.b32.xlu0 %v819, 16
        %v2054 = vpop.permute.xlu0 %2053
        %2055 = vrot.lane.b32.xlu0 %v820, 16
        %v2056 = vpop.permute.xlu0 %2055
        %v2058 = vsel %vm822, %v2054, 0
        %v2061 = vsel %vm822, %v2056, 0
        %2063 = vmatprep.subr.bf16.mxu0 0
        %2064 = vmatpush1.bf16.xpose.msra.mxu0 %v2061
        %2065 = vmatprep.subr.bf16.mxu0 0
        %2066 = vmatpush1.bf16.xpose.msra.mxu0 0
        %2067 = vmatprep.subr.bf16.mxu0 0
        %2068 = vmatpush1.bf16.xpose.msra.mxu0 0
        %2069 = vmatprep.subr.bf16.mxu0 0
        %2070 = vmatpush1.bf16.xpose.msra.mxu0 0
        %2071 = vmatprep.subr.bf16.mxu0 0
        %2072 = vmatpush1.bf16.xpose.msra.mxu0 0
        %2073 = vmatprep.subr.bf16.mxu0 0
        %2074 = vmatpush1.bf16.xpose.msra.mxu0 0
        %2075 = vmatprep.subr.bf16.mxu0 0
        %2076 = vmatpush1.bf16.xpose.msra.mxu0 0
        %2077 = vmatprep.subr.bf16.mxu0 0
        %2078 = vmatpush1.bf16.xpose.msra.mxu0 0
        %2079 = vmatprep.subr.bf16.mxu0 0
        %2080 = vmatpush1.bf16.xpose.msra.mxu0 0
        %2081 = vmatprep.subr.bf16.mxu0 0
        %2082 = vmatpush1.bf16.xpose.msra.mxu0 0
        %2083 = vmatprep.subr.bf16.mxu0 0
        %2084 = vmatpush1.bf16.xpose.msra.mxu0 0
        %2085 = vmatprep.subr.bf16.mxu0 0
        %2086 = vmatpush1.bf16.xpose.msra.mxu0 0
        %2087 = vmatprep.subr.bf16.mxu0 0
        %2088 = vmatpush1.bf16.xpose.msra.mxu0 0
        %2089 = vmatprep.subr.bf16.mxu0 0
        %2090 = vmatpush1.bf16.xpose.msra.mxu0 0
        %2091 = vmatprep.subr.bf16.mxu0 0
        %2092 = vmatpush1.bf16.xpose.msra.mxu0 0
        %2093 = vmatprep.subr.bf16.mxu0 0
        %2094 = vmatpush1.bf16.xpose.msra.mxu0 0
        %2095 = vmatprep.mubr.bf16.mxu0 0
        %2096 = vmatmul.mubr.bf16.gmra.mrb[0].mxu0 %v2058
        %v2097 = vpop.f32.mrb[0].mxu0
        %v2098 = vadd.f32 0.0, %v2097
        %v2099 = vpop.f32.mrb[0].mxu0
        %v2100 = vpop.f32.mrb[0].mxu0
        %v2101 = vadd.f32 0.0, %v2100
        %v2102 = vpop.f32.mrb[0].mxu0
        %2103 = vdwg.mxu0
        %v2104 = vsel %vm822, %v2098, -inf
        %2105 = vmax.xlane.f32.xlu0 %v2104
        %v2106 = vpop.xlane.xlu0 %2105
        %v2107 = vsel %vm822, %v2101, -inf
        %2108 = vmax.xlane.f32.xlu0 %v2107
        %v2109 = vpop.xlane.xlu0 %2108
        %v2110 = vsub.f32 %v2098, %v2106
        %v2111 = vsub.f32 %v2101, %v2109
        %v2112 = vmul.f32 %v2110, 1.442695
        %v2113 = vpow.pop %v2112
        %v2114 = vmul.f32 %v2111, 1.442695
        %v2115 = vpow.pop %v2114
        %v2116 = vsel %vm822, %v2113, 0.0
        %2117 = vadd.xlane.f32.xlu0 %v2116
        %v2118 = vpop.xlane.xlu0 %2117
        %v2119 = vsel %vm822, %v2115, 0.0
        %2120 = vadd.xlane.f32.xlu0 %v2119
        %v2121 = vpop.xlane.xlu0 %2120
        %v2122 = vrcp.pop %v2118
        %v2123 = vrcp.pop %v2121
        %v2124 = vmul.f32 %v2113, %v2122
        %v2125 = vmul.f32 %v2115, %v2123
        %v2126 = vpack.c.bf16 %v2125, %v2124
        %2127 = vrot.lane.b32.xlu0 %v821, 16
        %v2128 = vpop.permute.xlu0 %2127
        %v2131 = vsel %vm822, %v2126, 0
        %2133 = vmatprep.subr.bf16.mxu0 0
        %2134 = vmatpush1.bf16.msra.mxu0 %v2128
        %2135 = vmatprep.subr.bf16.mxu0 0
        %2136 = vmatpush1.bf16.msra.mxu0 0
        %2137 = vmatprep.subr.bf16.mxu0 0
        %2138 = vmatpush1.bf16.msra.mxu0 0
        %2139 = vmatprep.subr.bf16.mxu0 0
        %2140 = vmatpush1.bf16.msra.mxu0 0
        %2141 = vmatprep.subr.bf16.mxu0 0
        %2142 = vmatpush1.bf16.msra.mxu0 0
        %2143 = vmatprep.subr.bf16.mxu0 0
        %2144 = vmatpush1.bf16.msra.mxu0 0
        %2145 = vmatprep.subr.bf16.mxu0 0
        %2146 = vmatpush1.bf16.msra.mxu0 0
        %2147 = vmatprep.subr.bf16.mxu0 0
        %2148 = vmatpush1.bf16.msra.mxu0 0
        %2149 = vmatprep.subr.bf16.mxu0 0
        %2150 = vmatpush1.bf16.msra.mxu0 0
        %2151 = vmatprep.subr.bf16.mxu0 0
        %2152 = vmatpush1.bf16.msra.mxu0 0
        %2153 = vmatprep.subr.bf16.mxu0 0
        %2154 = vmatpush1.bf16.msra.mxu0 0
        %2155 = vmatprep.subr.bf16.mxu0 0
        %2156 = vmatpush1.bf16.msra.mxu0 0
        %2157 = vmatprep.subr.bf16.mxu0 0
        %2158 = vmatpush1.bf16.msra.mxu0 0
        %2159 = vmatprep.subr.bf16.mxu0 0
        %2160 = vmatpush1.bf16.msra.mxu0 0
        %2161 = vmatprep.subr.bf16.mxu0 0
        %2162 = vmatpush1.bf16.msra.mxu0 0
        %2163 = vmatprep.subr.bf16.mxu0 0
        %2164 = vmatpush1.bf16.msra.mxu0 0
        %2165 = vmatprep.mubr.bf16.mxu0 0
        %2166 = vmatmul.mubr.bf16.gmra.mrb[0].mxu0 %v2131
        %v2167 = vpop.f32.mrb[0].mxu0
        %v2168 = vadd.f32 0.0, %v2167
        %v2169 = vpop.f32.mrb[0].mxu0
        %v2170 = vpop.f32.mrb[0].mxu0
        %v2171 = vadd.f32 0.0, %v2170
        %v2172 = vpop.f32.mrb[0].mxu0
        %2173 = vdwg.mxu0
        %v2174 = vpack.c.bf16 %v2171, %v2168
        %s2175 = scalar_lea.vmem [#allocation13], 56
        %v2176 = vld [vmem:[%s2175] sm:$0xf]
        %v2177 = vld [vmem:[%s2175 + $0x4] sm:$0xf]
        %v2180 = vunpack.c.l.b16 %v2176
        %v2181 = vunpack.c.l.b16 %v2177
        %v2182 = vpack.c.b16 %v2181, %v2180
        %v2185 = vsel %vm822, %v2174, 0
        %2187 = vmatprep.subr.bf16.mxu0 0
        %2188 = vmatpush1.bf16.msra.mxu0 %v2182
        %2189 = vmatprep.subr.bf16.mxu0 0
        %2190 = vmatpush1.bf16.msra.mxu0 0
        %2191 = vmatprep.subr.bf16.mxu0 0
        %2192 = vmatpush1.bf16.msra.mxu0 0
        %2193 = vmatprep.subr.bf16.mxu0 0
        %2194 = vmatpush1.bf16.msra.mxu0 0
        %2195 = vmatprep.subr.bf16.mxu0 0
        %2196 = vmatpush1.bf16.msra.mxu0 0
        %2197 = vmatprep.subr.bf16.mxu0 0
        %2198 = vmatpush1.bf16.msra.mxu0 0
        %2199 = vmatprep.subr.bf16.mxu0 0
        %2200 = vmatpush1.bf16.msra.mxu0 0
        %2201 = vmatprep.subr.bf16.mxu0 0
        %2202 = vmatpush1.bf16.msra.mxu0 0
        %2203 = vmatprep.subr.bf16.mxu0 0
        %2204 = vmatpush1.bf16.msra.mxu0 0
        %2205 = vmatprep.subr.bf16.mxu0 0
        %2206 = vmatpush1.bf16.msra.mxu0 0
        %2207 = vmatprep.subr.bf16.mxu0 0
        %2208 = vmatpush1.bf16.msra.mxu0 0
        %2209 = vmatprep.subr.bf16.mxu0 0
        %2210 = vmatpush1.bf16.msra.mxu0 0
        %2211 = vmatprep.subr.bf16.mxu0 0
        %2212 = vmatpush1.bf16.msra.mxu0 0
        %2213 = vmatprep.subr.bf16.mxu0 0
        %2214 = vmatpush1.bf16.msra.mxu0 0
        %2215 = vmatprep.subr.bf16.mxu0 0
        %2216 = vmatpush1.bf16.msra.mxu0 0
        %2217 = vmatprep.subr.bf16.mxu0 0
        %2218 = vmatpush1.bf16.msra.mxu0 0
        %2219 = vmatprep.mubr.bf16.mxu0 0
        %2220 = vmatmul.mubr.bf16.gmra.mrb[0].mxu0 %v2185
        %v2221 = vpop.f32.mrb[0].mxu0
        %v2222 = vadd.f32 0.0, %v2221
        %v2223 = vpop.f32.mrb[0].mxu0
        %v2224 = vpop.f32.mrb[0].mxu0
        %v2225 = vadd.f32 0.0, %v2224
        %v2226 = vpop.f32.mrb[0].mxu0
        %2227 = vdwg.mxu0
        %v2228 = vadd.f32 %v2051, %v2222
        %v2229 = vadd.f32 %v2052, %v2225
        %v2230 = vld [vmem:[%s7] sm:$0x1]
        %v2232 = vlaneseq
        %v2233 = vshrl.u32 %v2232, 7
        %v2234 = vsub.s32 0, %v2233
        %v2235 = vrot.slane %v2230, %v2234
        %v2237 = vadd.f32 %v2228, %v2235
        %v2238 = vadd.f32 %v2229, %v2235
        %2239 = vst [vmem:[%s476] sm:$0xff] %v2237
        %2240 = vst [vmem:[%s476 + $0x8] sm:$0xff] %v2238
        %s2241 = sand.u32 %s237, 1
        %s2242 = scalar_lea.sflag [#allocation4], %s2241
        %s2243 = sand.u32 %s237, 1
        %s2244 = smul.addr %s2243, 16
        %s2245 = scalar_lea.vmem [#allocation14], %s2244
        // Predicated region
        $region81: #{tpu_custom_call.1} parent=51 // pred_check
          %p2246 = pneg %p247
        $region82: #{tpu_custom_call.1} parent=51 // pred_check_branch
          %2248 = sbr.rel (%p2246) target = $region84
        $region83: #{tpu_custom_call.1} parent=51 // pred_region
          %s2249 = smul.u32 2, %s35
          %s2251 = ssub.s32 256, 256
          %2252 = vsyncadd %s2242, %s2251
          %s2253 = smul.addr %s34, 4
          %s2254 = sadd.s32 %s2249, %s2253
          %s2255 = smul.addr %s2254, 128
          %s2256 = scalar_lea.hbm %s8, %s2255
          %s2257 = sshll.u32 %s2245, 4
          %s2258 = int_to_ptr.vmem [resolvable:$true] %s2257
          %2263 = dma.vmem_to_hbm [thread:$0]  %s2258, 256, %s2256, %s2242, 128, 128, 8
        $region84: #{tpu_custom_call.1} parent=51 // pred_fallthru
          _
      $region52: #{tpu_custom_call.1} parent=5 // pred_fallthru
        _
      %p2264 = scmp.le.s32.totalorder 2, %s25
      // Predicated region
      $region85: #{tpu_custom_call.1} parent=5 // pred_check
        %p2265 = pneg %p2264
      $region86: #{tpu_custom_call.1} parent=5 // pred_check_branch
        %2267 = sbr.rel (%p2265) target = $region88
      $region87: #{tpu_custom_call.1} parent=5 // pred_region
        %s2268 = ssub.s32 %s25, 2
        // Predicated region
        $region89: #{tpu_custom_call.1} parent=87 // pred_check
          %p2269 = pneg %p253
        $region90: #{tpu_custom_call.1} parent=87 // pred_check_branch
          %2271 = sbr.rel (%p2269) target = $region92
        $region91: #{tpu_custom_call.1} parent=87 // pred_region
          %s2272 = sand.u32 %s238, 1
          %s2273 = scalar_lea.sflag [#allocation4], %s2272
          %s2274 = sand.u32 %s238, 1
          %s2275 = smul.addr %s2274, 16
          %s2276 = scalar_lea.vmem [#allocation14], %s2275
          %2277 = dma.done %s2273, 256
        $region92: #{tpu_custom_call.1} parent=87 // pred_fallthru
          _
      $region88: #{tpu_custom_call.1} parent=5 // pred_fallthru
        _
    $region6: #{tpu_custom_call.1} parent=1 // loop_footer
      %s29 = sadd.s32 1, %s25
    $region7: #{tpu_custom_call.1} parent=1 // loop_footer_branch
      %24 = sbr.rel target = $region3
    $region8: #{tpu_custom_call.1} parent=1 // loop_exit
      _
    %2278 = vsyncpa [#allocation3], 1
    %s2279 = scalar_lea.sflag [#allocation3], 1
    %2280 = vsyncpa %s2279, 1
    %2281 = vsyncpa [#allocation6], 1
    %s2282 = scalar_lea.sflag [#allocation6], 1
    %2283 = vsyncpa %s2282, 1
    %2284 = vsyncpa [#allocation9], 1
    %2285 = vsyncpa [#allocation12], 1
    %2286 = vsyncpa [#allocation4], 1
    %s2287 = scalar_lea.sflag [#allocation4], 1
    %2288 = vsyncpa %s2287, 1

// kernel: tpu_custom_call.1
$region0: #{tpu_custom_call.1}
  #allocation0 [shape = 'u32[]', space=smem, size = 0x4, offset = 0x4, fixed_abs, tag = 'smem constant byte address 0x4 - core index']
  #allocation1 [shape = 'u32[144,128]{1,0:T(1,128)}', space=vmem, size = 0x12000, scoped, tag = 'internal scratch']
  %s0 = inlined_call_operand.hbm [shape: bf16[2,32,128], index: 0, kind: input, shape index: {}]
  %s1 = inlined_call_operand.hbm [shape: bf16[2,16,128], index: 1, kind: input, shape index: {}]
  %s2 = inlined_call_operand.hbm [shape: bf16[2,16,128], index: 2, kind: input, shape index: {}]
  %s3 = inlined_call_operand.hbm [shape: bf16[128,128], index: 3, kind: input, shape index: {}]
  %s4 = inlined_call_operand.hbm [shape: bf16[128,128], index: 4, kind: input, shape index: {}]
  %s5 = inlined_call_operand.hbm [shape: bf16[128,128], index: 5, kind: input, shape index: {}]
  %s6 = inlined_call_operand.hbm [shape: bf16[8,16,128], index: 6, kind: input, shape index: {}]
  %s7 = inlined_call_operand.vmem [shape: f32[1,128], index: 7, kind: input, shape index: {}]
  %s8 = inlined_call_operand.hbm [shape: f32[2,32,128], index: 8, kind: output, shape index: {}]
  %s9 = sld [smem:[#allocation0]]
  $region93: #{tpu_custom_call.1} parent=0
    _
  %s11 = ssub.s32 1, %s9
  %s12 = scalar_select 0, %s11, %s9
  $region1: #{tpu_custom_call.1} parent=0
    #allocation2 [shape = 'u8[8192]{0}', space=vmem, size = 0x2000, scoped, tag = 'input window, operand 0']
    #allocation3 [shape = 's32[2]{0}', space=sflag, size = 0x8, scoped, tag = 'scoped memory for tpu_custom_call.1']
    #allocation4 [shape = 's32[2]{0}', space=sflag, size = 0x8, scoped, tag = 'scoped memory for tpu_custom_call.1']
    #allocation5 [shape = 'u8[8192]{0}', space=vmem, size = 0x2000, scoped, tag = 'input window, operand 1']
    #allocation6 [shape = 's32[2]{0}', space=sflag, size = 0x8, scoped, tag = 'scoped memory for tpu_custom_call.1']
    #allocation7 [shape = 'u8[8192]{0}', space=vmem, size = 0x2000, scoped, tag = 'input window, operand 2']
    #allocation8 [shape = 'u8[32768]{0}', space=vmem, size = 0x8000, scoped, tag = 'input window, operand 3, single buffered']
    #allocation9 [shape = 's32[1]{0}', space=sflag, size = 0x4, scoped, tag = 'scoped memory for tpu_custom_call.1']
    #allocation10 [shape = 'u8[32768]{0}', space=vmem, size = 0x8000, scoped, tag = 'input window, operand 4, single buffered']
    #allocation11 [shape = 'u8[32768]{0}', space=vmem, size = 0x8000, scoped, tag = 'input window, operand 5, single buffered']
    #allocation12 [shape = 's32[1]{0}', space=sflag, size = 0x4, scoped, tag = 'scoped memory for tpu_custom_call.1']
    #allocation13 [shape = 'u8[32768]{0}', space=vmem, size = 0x8000, scoped, tag = 'input window, operand 6, single buffered']
    #allocation14 [shape = 'u8[16384]{0}', space=vmem, size = 0x4000, scoped, tag = 'output window, operand 0']
    %13 = vsyncpa [#allocation3], 0
    %s14 = scalar_lea.sflag [#allocation3], 1
    %15 = vsyncpa %s14, 0
    %16 = vsyncpa [#allocation6], 0
    %s17 = scalar_lea.sflag [#allocation6], 1
    %18 = vsyncpa %s17, 0
    %19 = vsyncpa [#allocation9], 0
    %20 = vsyncpa [#allocation12], 0
    %21 = vsyncpa [#allocation4], 0
    %s22 = scalar_lea.sflag [#allocation4], 1
    %23 = vsyncpa %s22, 0
    loop: start=0, step=1, limit=6
    $region2: #{tpu_custom_call.1} parent=1 // loop_pre_header
      _
    $region3: #{tpu_custom_call.1} parent=1 // loop_header
      %s25 = sphi 0, %s29
      %p26 = scmp.ge.s32.totalorder %s25, 6
      %s32 = sphi 0, %s44
      %s33 = sphi 0, %s40
      %s34 = sphi 0, %s32
      %s35 = sphi 0, %s33
      %s36 = sphi 0, %s34
      %s37 = sphi 0, %s35
      %s49 = sphi 0, %s51
      %s52 = sphi 0, %s49
      %s53 = sphi 0, %s52
      %s69 = sphi 0, %s53
      %s75 = sphi 0, %s77
      %s78 = sphi 0, %s75
      %s79 = sphi 0, %s78
      %s95 = sphi 0, %s79
      %s101 = sphi 0, %s103
      %s104 = sphi 0, %s101
      %s105 = sphi 0, %s104
      %s121 = sphi 0, %s105
      %s125 = sphi 0, %s125
      %s127 = sphi 0, %s125
      %s128 = sphi 0, %s127
      %s142 = sphi 0, %s128
      %s146 = sphi 0, %s146
      %s148 = sphi 0, %s146
      %s149 = sphi 0, %s148
      %s163 = sphi 0, %s149
      %s167 = sphi 0, %s167
      %s169 = sphi 0, %s167
      %s170 = sphi 0, %s169
      %s184 = sphi 0, %s170
      %s188 = sphi 0, %s188
      %s190 = sphi 0, %s188
      %s191 = sphi 0, %s190
      %s205 = sphi 0, %s191
      %s209 = sphi 0, %s209
      %s211 = sphi 0, %s209
      %s212 = sphi 0, %s211
      %s226 = sphi 0, %s212
      %s234 = sphi 0, %s236
      %s237 = sphi 0, %s234
      %s238 = sphi 0, %s237
      %s254 = sphi 0, %s238
    $region4: #{tpu_custom_call.1} parent=1 // loop_header_branch
      %28 = sbr.rel (%p26) target = $region8
    $region5: #{tpu_custom_call.1} parent=1 // loop_body
      %s30 = ssub.s32 %s25, 1
      %s31 = ssub.s32 %s25, 2
      %s38 = sadd.s32 1, %s33
      %p39 = scmp.ge.s32.totalorder %s38, 2
      %s40 = scalar_select %p39, 0, %s38
      %s41 = sadd.s32 1, %s32
      %s42 = scalar_select %p39, %s41, %s32
      %p43 = scmp.ge.s32.totalorder %s42, 2
      %s44 = scalar_select %p43, 0, %s42
      %s45 = ssub.s32 %s32, %s44
      %s46 = ssub.s32 %s33, %s40
      %s47 = sor.u32 %s45, %s46
      %p48 = scmp.eq.s32.totalorder %s47, 0
      %s50 = sadd.s32 %s49, 1
      %s51 = scalar_select %p48, %s49, %s50
      %p54 = pneg %p48
      %p55 = scmp.eq.s32.totalorder %s25, 3
      %p56 = por %p54, %p55
      %p57 = scmp.ne.s32.totalorder %s49, %s52
      %p58 = scmp.eq.s32.totalorder %s25, 0
      %p59 = por %p57, %p58
      %p60 = scmp.ne.s32.totalorder %s49, %s52
      %p61 = scmp.eq.s32.totalorder %s30, 3
      %p62 = por %p60, %p61
      %p63 = scmp.ne.s32.totalorder %s52, %s53
      %p64 = scmp.eq.s32.totalorder %s30, 0
      %p65 = por %p63, %p64
      %p66 = scmp.ne.s32.totalorder %s52, %s53
      %p67 = scmp.eq.s32.totalorder %s31, 3
      %p68 = por %p66, %p67
      %p70 = scmp.ne.s32.totalorder %s53, %s69
      %p71 = scmp.eq.s32.totalorder %s31, 0
      %p72 = por %p70, %p71
      %s73 = ssub.s32 %s32, %s44
      %p74 = scmp.eq.s32.totalorder %s73, 0
      %s76 = sadd.s32 %s75, 1
      %s77 = scalar_select %p74, %s75, %s76
      %p80 = pneg %p74
      %p81 = scmp.eq.s32.totalorder %s25, 3
      %p82 = por %p80, %p81
      %p83 = scmp.ne.s32.totalorder %s75, %s78
      %p84 = scmp.eq.s32.totalorder %s25, 0
      %p85 = por %p83, %p84
      %p86 = scmp.ne.s32.totalorder %s75, %s78
      %p87 = scmp.eq.s32.totalorder %s30, 3
      %p88 = por %p86, %p87
      %p89 = scmp.ne.s32.totalorder %s78, %s79
      %p90 = scmp.eq.s32.totalorder %s30, 0
      %p91 = por %p89, %p90
      %p92 = scmp.ne.s32.totalorder %s78, %s79
      %p93 = scmp.eq.s32.totalorder %s31, 3
      %p94 = por %p92, %p93
      %p96 = scmp.ne.s32.totalorder %s79, %s95
      %p97 = scmp.eq.s32.totalorder %s31, 0
      %p98 = por %p96, %p97
      %s99 = ssub.s32 %s32, %s44
      %p100 = scmp.eq.s32.totalorder %s99, 0
      %s102 = sadd.s32 %s101, 1
      %s103 = scalar_select %p100, %s101, %s102
      %p106 = pneg %p100
      %p107 = scmp.eq.s32.totalorder %s25, 3
      %p108 = por %p106, %p107
      %p109 = scmp.ne.s32.totalorder %s101, %s104
      %p110 = scmp.eq.s32.totalorder %s25, 0
      %p111 = por %p109, %p110
      %p112 = scmp.ne.s32.totalorder %s101, %s104
      %p113 = scmp.eq.s32.totalorder %s30, 3
      %p114 = por %p112, %p113
      %p115 = scmp.ne.s32.totalorder %s104, %s105
      %p116 = scmp.eq.s32.totalorder %s30, 0
      %p117 = por %p115, %p116
      %p118 = scmp.ne.s32.totalorder %s104, %s105
      %p119 = scmp.eq.s32.totalorder %s31, 3
      %p120 = por %p118, %p119
      %p122 = scmp.ne.s32.totalorder %s105, %s121
      %p123 = scmp.eq.s32.totalorder %s31, 0
      %p124 = por %p122, %p123
      %s126 = sadd.s32 %s125, 1
      %p129 = scmp.eq.s32.totalorder %s25, 3
      %p130 = scmp.ne.s32.totalorder %s125, %s127
      %p131 = scmp.eq.s32.totalorder %s25, 0
      %p132 = por %p130, %p131
      %p133 = scmp.ne.s32.totalorder %s125, %s127
      %p134 = scmp.eq.s32.totalorder %s30, 3
      %p135 = por %p133, %p134
      %p136 = scmp.ne.s32.totalorder %s127, %s128
      %p137 = scmp.eq.s32.totalorder %s30, 0
      %p138 = por %p136, %p137
      %p139 = scmp.ne.s32.totalorder %s127, %s128
      %p140 = scmp.eq.s32.totalorder %s31, 3
      %p141 = por %p139, %p140
      %p143 = scmp.ne.s32.totalorder %s128, %s142
      %p144 = scmp.eq.s32.totalorder %s31, 0
      %p145 = por %p143, %p144
      %s147 = sadd.s32 %s146, 1
      %p150 = scmp.eq.s32.totalorder %s25, 3
      %p151 = scmp.ne.s32.totalorder %s146, %s148
      %p152 = scmp.eq.s32.totalorder %s25, 0
      %p153 = por %p151, %p152
      %p154 = scmp.ne.s32.totalorder %s146, %s148
      %p155 = scmp.eq.s32.totalorder %s30, 3
      %p156 = por %p154, %p155
      %p157 = scmp.ne.s32.totalorder %s148, %s149
      %p158 = scmp.eq.s32.totalorder %s30, 0
      %p159 = por %p157, %p158
      %p160 = scmp.ne.s32.totalorder %s148, %s149
      %p161 = scmp.eq.s32.totalorder %s31, 3
      %p162 = por %p160, %p161
      %p164 = scmp.ne.s32.totalorder %s149, %s163
      %p165 = scmp.eq.s32.totalorder %s31, 0
      %p166 = por %p164, %p165
      %s168 = sadd.s32 %s167, 1
      %p171 = scmp.eq.s32.totalorder %s25, 3
      %p172 = scmp.ne.s32.totalorder %s167, %s169
      %p173 = scmp.eq.s32.totalorder %s25, 0
      %p174 = por %p172, %p173
      %p175 = scmp.ne.s32.totalorder %s167, %s169
      %p176 = scmp.eq.s32.totalorder %s30, 3
      %p177 = por %p175, %p176
      %p178 = scmp.ne.s32.totalorder %s169, %s170
      %p179 = scmp.eq.s32.totalorder %s30, 0
      %p180 = por %p178, %p179
      %p181 = scmp.ne.s32.totalorder %s169, %s170
      %p182 = scmp.eq.s32.totalorder %s31, 3
      %p183 = por %p181, %p182
      %p185 = scmp.ne.s32.totalorder %s170, %s184
      %p186 = scmp.eq.s32.totalorder %s31, 0
      %p187 = por %p185, %p186
      %s189 = sadd.s32 %s188, 1
      %p192 = scmp.eq.s32.totalorder %s25, 3
      %p193 = scmp.ne.s32.totalorder %s188, %s190
      %p194 = scmp.eq.s32.totalorder %s25, 0
      %p195 = por %p193, %p194
      %p196 = scmp.ne.s32.totalorder %s188, %s190
      %p197 = scmp.eq.s32.totalorder %s30, 3
      %p198 = por %p196, %p197
      %p199 = scmp.ne.s32.totalorder %s190, %s191
      %p200 = scmp.eq.s32.totalorder %s30, 0
      %p201 = por %p199, %p200
      %p202 = scmp.ne.s32.totalorder %s190, %s191
      %p203 = scmp.eq.s32.totalorder %s31, 3
      %p204 = por %p202, %p203
      %p206 = scmp.ne.s32.totalorder %s191, %s205
      %p207 = scmp.eq.s32.totalorder %s31, 0
      %p208 = por %p206, %p207
      %s210 = sadd.s32 %s209, 1
      %p213 = scmp.eq.s32.totalorder %s25, 3
      %p214 = scmp.ne.s32.totalorder %s209, %s211
      %p215 = scmp.eq.s32.totalorder %s25, 0
      %p216 = por %p214, %p215
      %p217 = scmp.ne.s32.totalorder %s209, %s211
      %p218 = scmp.eq.s32.totalorder %s30, 3
      %p219 = por %p217, %p218
      %p220 = scmp.ne.s32.totalorder %s211, %s212
      %p221 = scmp.eq.s32.totalorder %s30, 0
      %p222 = por %p220, %p221
      %p223 = scmp.ne.s32.totalorder %s211, %s212
      %p224 = scmp.eq.s32.totalorder %s31, 3
      %p225 = por %p223, %p224
      %p227 = scmp.ne.s32.totalorder %s212, %s226
      %p228 = scmp.eq.s32.totalorder %s31, 0
      %p229 = por %p227, %p228
      %s230 = ssub.s32 %s32, %s44
      %s231 = ssub.s32 %s33, %s40
      %s232 = sor.u32 %s230, %s231
      %p233 = scmp.eq.s32.totalorder %s232, 0
      %s235 = sadd.s32 %s234, 1
      %s236 = scalar_select %p233, %s234, %s235
      %p239 = pneg %p233
      %p240 = scmp.eq.s32.totalorder %s25, 3
      %p241 = por %p239, %p240
      %p242 = scmp.ne.s32.totalorder %s234, %s237
      %p243 = scmp.eq.s32.totalorder %s25, 0
      %p244 = por %p242, %p243
      %p245 = scmp.ne.s32.totalorder %s234, %s237
      %p246 = scmp.eq.s32.totalorder %s30, 3
      %p247 = por %p245, %p246
      %p248 = scmp.ne.s32.totalorder %s237, %s238
      %p249 = scmp.eq.s32.totalorder %s30, 0
      %p250 = por %p248, %p249
      %p251 = scmp.ne.s32.totalorder %s237, %s238
      %p252 = scmp.eq.s32.totalorder %s31, 3
      %p253 = por %p251, %p252
      %p255 = scmp.ne.s32.totalorder %s238, %s254
      %p256 = scmp.eq.s32.totalorder %s31, 0
      %p257 = por %p255, %p256
      %p258 = scmp.le.s32.totalorder 1, %s25
      %p259 = scmp.lt.s32.totalorder %s25, 5
      %p260 = pnand %p258, %p259
      %p261 = pneg %p260
      // Predicated region
      $region9: #{tpu_custom_call.1} parent=5 // pred_check
        _
      $region10: #{tpu_custom_call.1} parent=5 // pred_check_branch
        %263 = sbr.rel (%p260) target = $region12
      $region11: #{tpu_custom_call.1} parent=5 // pred_region
        %s264 = ssub.s32 %s25, 1
        // Predicated region
        $region13: #{tpu_custom_call.1} parent=11 // pred_check
          %p265 = pneg %p138
        $region14: #{tpu_custom_call.1} parent=11 // pred_check_branch
          %267 = sbr.rel (%p265) target = $region16
        $region15: #{tpu_custom_call.1} parent=11 // pred_region
          %s269 = ssub.s32 1024, 1024
          %270 = vsyncadd [#allocation9], %s269
          %s271 = sshll.u32 [#allocation8], 4
          %s272 = int_to_ptr.vmem [resolvable:$true] %s271
          %277 = dma.hbm_to_vmem [thread:$0]  %s3, 1024, %s272, [#allocation9], 64, 64, 4
        $region16: #{tpu_custom_call.1} parent=11 // pred_fallthru
          _
        // Predicated region
        $region17: #{tpu_custom_call.1} parent=11 // pred_check
          %p278 = pneg %p159
        $region18: #{tpu_custom_call.1} parent=11 // pred_check_branch
          %280 = sbr.rel (%p278) target = $region20
        $region19: #{tpu_custom_call.1} parent=11 // pred_region
          %s282 = ssub.s32 1024, 1024
          %283 = vsyncadd [#allocation9], %s282
          %s284 = sshll.u32 [#allocation10], 4
          %s285 = int_to_ptr.vmem [resolvable:$true] %s284
          %290 = dma.hbm_to_vmem [thread:$0]  %s4, 1024, %s285, [#allocation9], 64, 64, 4
        $region20: #{tpu_custom_call.1} parent=11 // pred_fallthru
          _
        // Predicated region
        $region21: #{tpu_custom_call.1} parent=11 // pred_check
          %p291 = pneg %p180
        $region22: #{tpu_custom_call.1} parent=11 // pred_check_branch
          %293 = sbr.rel (%p291) target = $region24
        $region23: #{tpu_custom_call.1} parent=11 // pred_region
          %s295 = ssub.s32 1024, 1024
          %296 = vsyncadd [#allocation12], %s295
          %s297 = sshll.u32 [#allocation11], 4
          %s298 = int_to_ptr.vmem [resolvable:$true] %s297
          %303 = dma.hbm_to_vmem [thread:$0]  %s5, 1024, %s298, [#allocation12], 64, 64, 4
        $region24: #{tpu_custom_call.1} parent=11 // pred_fallthru
          _
        // Predicated region
        $region25: #{tpu_custom_call.1} parent=11 // pred_check
          %p304 = pneg %p201
        $region26: #{tpu_custom_call.1} parent=11 // pred_check_branch
          %306 = sbr.rel (%p304) target = $region28
        $region27: #{tpu_custom_call.1} parent=11 // pred_region
          %s308 = ssub.s32 1024, 1024
          %309 = vsyncadd [#allocation12], %s308
          %s310 = sshll.u32 [#allocation13], 4
          %s311 = int_to_ptr.vmem [resolvable:$true] %s310
          %316 = dma.hbm_to_vmem [thread:$0]  %s6, 1024, %s311, [#allocation12], 64, 64, 4
        $region28: #{tpu_custom_call.1} parent=11 // pred_fallthru
          _
        // Predicated region
        $region29: #{tpu_custom_call.1} parent=11 // pred_check
          %p317 = pneg %p222
        $region30: #{tpu_custom_call.1} parent=11 // pred_check_branch
          %319 = sbr.rel (%p317) target = $region32
        $region31: #{tpu_custom_call.1} parent=11 // pred_region
          _
        $region32: #{tpu_custom_call.1} parent=11 // pred_fallthru
          _
      $region12: #{tpu_custom_call.1} parent=5 // pred_fallthru
        _
      %p320 = scmp.lt.s32.totalorder %s25, 4
      // Predicated region
      $region33: #{tpu_custom_call.1} parent=5 // pred_check
        %p321 = pneg %p320
      $region34: #{tpu_custom_call.1} parent=5 // pred_check_branch
        %323 = sbr.rel (%p321) target = $region36
      $region35: #{tpu_custom_call.1} parent=5 // pred_region
        // Predicated region
        $region37: #{tpu_custom_call.1} parent=35 // pred_check
          %p324 = pneg %p59
        $region38: #{tpu_custom_call.1} parent=35 // pred_check_branch
          %326 = sbr.rel (%p324) target = $region40
        $region39: #{tpu_custom_call.1} parent=35 // pred_region
          %s327 = sand.u32 %s49, 1
          %s328 = scalar_lea.sflag [#allocation3], %s327
          %s329 = sand.u32 %s49, 1
          %s330 = smul.addr %s329, 8
          %s331 = scalar_lea.vmem [#allocation2], %s330
          %s332 = smul.u32 2, %s33
          %s334 = ssub.s32 128, 128
          %335 = vsyncadd %s328, %s334
          %s336 = smul.addr %s32, 4
          %s337 = sadd.s32 %s332, %s336
          %s338 = smul.addr %s337, 64
          %s339 = scalar_lea.hbm %s0, %s338
          %s340 = sshll.u32 %s331, 4
          %s341 = int_to_ptr.vmem [resolvable:$true] %s340
          %346 = dma.hbm_to_vmem [thread:$0]  %s339, 128, %s341, %s328, 64, 64, 4
        $region40: #{tpu_custom_call.1} parent=35 // pred_fallthru
          _
        // Predicated region
        $region41: #{tpu_custom_call.1} parent=35 // pred_check
          %p347 = pneg %p85
        $region42: #{tpu_custom_call.1} parent=35 // pred_check_branch
          %349 = sbr.rel (%p347) target = $region44
        $region43: #{tpu_custom_call.1} parent=35 // pred_region
          %s350 = sand.u32 %s25, 1
          %s351 = scalar_lea.sflag [#allocation6], %s350
          %s352 = sand.u32 %s75, 1
          %s353 = smul.addr %s352, 8
          %s354 = scalar_lea.vmem [#allocation5], %s353
          %s356 = ssub.s32 128, 128
          %357 = vsyncadd %s351, %s356
          %s358 = smul.addr %s32, 2
          %s359 = smul.addr %s358, 64
          %s360 = scalar_lea.hbm %s1, %s359
          %s361 = sshll.u32 %s354, 4
          %s362 = int_to_ptr.vmem [resolvable:$true] %s361
          %367 = dma.hbm_to_vmem [thread:$0]  %s360, 128, %s362, %s351, 64, 64, 4
        $region44: #{tpu_custom_call.1} parent=35 // pred_fallthru
          _
        // Predicated region
        $region45: #{tpu_custom_call.1} parent=35 // pred_check
          %p368 = pneg %p111
        $region46: #{tpu_custom_call.1} parent=35 // pred_check_branch
          %370 = sbr.rel (%p368) target = $region48
        $region47: #{tpu_custom_call.1} parent=35 // pred_region
          %s371 = sand.u32 %s25, 1
          %s372 = scalar_lea.sflag [#allocation6], %s371
          %s373 = sand.u32 %s101, 1
          %s374 = smul.addr %s373, 8
          %s375 = scalar_lea.vmem [#allocation7], %s374
          %s377 = ssub.s32 128, 128
          %378 = vsyncadd %s372, %s377
          %s379 = smul.addr %s32, 2
          %s380 = smul.addr %s379, 64
          %s381 = scalar_lea.hbm %s2, %s380
          %s382 = sshll.u32 %s375, 4
          %s383 = int_to_ptr.vmem [resolvable:$true] %s382
          %388 = dma.hbm_to_vmem [thread:$0]  %s381, 128, %s383, %s372, 64, 64, 4
        $region48: #{tpu_custom_call.1} parent=35 // pred_fallthru
          _
      $region36: #{tpu_custom_call.1} parent=5 // pred_fallthru
        _
      %p389 = scmp.le.s32.totalorder 1, %s25
      %p390 = scmp.lt.s32.totalorder %s25, 5
      %p391 = pnand %p389, %p390
      %p392 = pneg %p391
      // Predicated region
      $region49: #{tpu_custom_call.1} parent=5 // pred_check
        _
      $region50: #{tpu_custom_call.1} parent=5 // pred_check_branch
        %394 = sbr.rel (%p391) target = $region52
      $region51: #{tpu_custom_call.1} parent=5 // pred_region
        %s395 = ssub.s32 %s25, 1
        %s396 = sand.u32 %s52, 1
        %s397 = scalar_lea.sflag [#allocation3], %s396
        %s398 = sand.u32 %s52, 1
        %s399 = smul.addr %s398, 8
        %s400 = scalar_lea.vmem [#allocation2], %s399
        // Predicated region
        $region53: #{tpu_custom_call.1} parent=51 // pred_check
          %p401 = pneg %p65
        $region54: #{tpu_custom_call.1} parent=51 // pred_check_branch
          %403 = sbr.rel (%p401) target = $region56
        $region55: #{tpu_custom_call.1} parent=51 // pred_region
          %404 = dma.done %s397, 128
        $region56: #{tpu_custom_call.1} parent=51 // pred_fallthru
          _
        %s405 = sand.u32 %s30, 1
        %s406 = scalar_lea.sflag [#allocation6], %s405
        %s407 = sand.u32 %s78, 1
        %s408 = smul.addr %s407, 8
        %s409 = scalar_lea.vmem [#allocation5], %s408
        // Predicated region
        $region57: #{tpu_custom_call.1} parent=51 // pred_check
          %p410 = pneg %p91
        $region58: #{tpu_custom_call.1} parent=51 // pred_check_branch
          %412 = sbr.rel (%p410) target = $region60
        $region59: #{tpu_custom_call.1} parent=51 // pred_region
          %413 = dma.done %s406, 128
        $region60: #{tpu_custom_call.1} parent=51 // pred_fallthru
          _
        %s414 = sand.u32 %s30, 1
        %s415 = scalar_lea.sflag [#allocation6], %s414
        %s416 = sand.u32 %s104, 1
        %s417 = smul.addr %s416, 8
        %s418 = scalar_lea.vmem [#allocation7], %s417
        // Predicated region
        $region61: #{tpu_custom_call.1} parent=51 // pred_check
          %p419 = pneg %p117
        $region62: #{tpu_custom_call.1} parent=51 // pred_check_branch
          %421 = sbr.rel (%p419) target = $region64
        $region63: #{tpu_custom_call.1} parent=51 // pred_region
          %422 = dma.done %s415, 128
        $region64: #{tpu_custom_call.1} parent=51 // pred_fallthru
          _
        // Predicated region
        $region65: #{tpu_custom_call.1} parent=51 // pred_check
          %p423 = pneg %p138
        $region66: #{tpu_custom_call.1} parent=51 // pred_check_branch
          %425 = sbr.rel (%p423) target = $region68
        $region67: #{tpu_custom_call.1} parent=51 // pred_region
          %426 = dma.done [#allocation9], 1024
        $region68: #{tpu_custom_call.1} parent=51 // pred_fallthru
          _
        // Predicated region
        $region69: #{tpu_custom_call.1} parent=51 // pred_check
          %p427 = pneg %p159
        $region70: #{tpu_custom_call.1} parent=51 // pred_check_branch
          %429 = sbr.rel (%p427) target = $region72
        $region71: #{tpu_custom_call.1} parent=51 // pred_region
          %430 = dma.done [#allocation9], 1024
        $region72: #{tpu_custom_call.1} parent=51 // pred_fallthru
          _
        // Predicated region
        $region73: #{tpu_custom_call.1} parent=51 // pred_check
          %p431 = pneg %p180
        $region74: #{tpu_custom_call.1} parent=51 // pred_check_branch
          %433 = sbr.rel (%p431) target = $region76
        $region75: #{tpu_custom_call.1} parent=51 // pred_region
          %434 = dma.done [#allocation12], 1024
        $region76: #{tpu_custom_call.1} parent=51 // pred_fallthru
          _
        // Predicated region
        $region77: #{tpu_custom_call.1} parent=51 // pred_check
          %p435 = pneg %p201
        $region78: #{tpu_custom_call.1} parent=51 // pred_check_branch
          %437 = sbr.rel (%p435) target = $region80
        $region79: #{tpu_custom_call.1} parent=51 // pred_region
          %438 = dma.done [#allocation12], 1024
        $region80: #{tpu_custom_call.1} parent=51 // pred_fallthru
          _
        %s439 = sand.u32 %s52, 1
        %s440 = scalar_lea.sflag [#allocation3], %s439
        %s441 = sand.u32 %s52, 1
        %s442 = smul.addr %s441, 8
        %s443 = scalar_lea.vmem [#allocation2], %s442
        %p444 = pneg %p65
        %p445 = pneg %p62
        %s446 = sand.u32 %s30, 1
        %s447 = scalar_lea.sflag [#allocation6], %s446
        %s448 = sand.u32 %s78, 1
        %s449 = smul.addr %s448, 8
        %s450 = scalar_lea.vmem [#allocation5], %s449
        %p451 = pneg %p91
        %p452 = pneg %p88
        %s453 = sand.u32 %s30, 1
        %s454 = scalar_lea.sflag [#allocation6], %s453
        %s455 = sand.u32 %s104, 1
        %s456 = smul.addr %s455, 8
        %s457 = scalar_lea.vmem [#allocation7], %s456
        %p458 = pneg %p117
        %p459 = pneg %p114
        %p460 = pneg %p138
        %p461 = pneg %p135
        %p462 = pneg %p159
        %p463 = pneg %p156
        %p464 = pneg %p180
        %p465 = pneg %p177
        %p466 = pneg %p201
        %p467 = pneg %p198
        %p468 = pneg %p222
        %p469 = pneg %p219
        %p470 = pneg %p250
        %p471 = pneg %p247
        %s472 = sand.u32 %s237, 1
        %s473 = scalar_lea.sflag [#allocation4], %s472
        %s474 = sand.u32 %s237, 1
        %s475 = smul.addr %s474, 16
        %s476 = scalar_lea.vmem [#allocation14], %s475
        %s477 = smul.u32 2, %s35
        %s478 = smul.u32 2, %s35
        %v480 = vld [vmem:[%s400] sm:$0xf]
        %v481 = vld [vmem:[%s400 + $0x4] sm:$0xf]
        %v482 = vld [vmem:[%s409] sm:$0xf]
        %v483 = vld [vmem:[%s409 + $0x4] sm:$0xf]
        %v484 = vld [vmem:[%s418] sm:$0xf]
        %v485 = vld [vmem:[%s418 + $0x4] sm:$0xf]
        %v486 = vld [vmem:[#allocation8] sm:$0xf]
        %v487 = vld [vmem:[#allocation8 + $0x4] sm:$0xf]
        %v488 = vld [vmem:[#allocation8 + $0x8] sm:$0xf]
        %v489 = vld [vmem:[#allocation8 + $0xc] sm:$0xf]
        %v490 = vld [vmem:[#allocation8 + $0x10] sm:$0xf]
        %v491 = vld [vmem:[#allocation8 + $0x14] sm:$0xf]
        %v492 = vld [vmem:[#allocation8 + $0x18] sm:$0xf]
        %v493 = vld [vmem:[#allocation8 + $0x1c] sm:$0xf]
        %v494 = vld [vmem:[#allocation8 + $0x20] sm:$0xf]
        %v495 = vld [vmem:[#allocation8 + $0x24] sm:$0xf]
        %v496 = vld [vmem:[#allocation8 + $0x28] sm:$0xf]
        %v497 = vld [vmem:[#allocation8 + $0x2c] sm:$0xf]
        %v498 = vld [vmem:[#allocation8 + $0x30] sm:$0xf]
        %v499 = vld [vmem:[#allocation8 + $0x34] sm:$0xf]
        %v500 = vld [vmem:[#allocation8 + $0x38] sm:$0xf]
        %v501 = vld [vmem:[#allocation8 + $0x3c] sm:$0xf]
        %v504 = vunpack.c.l.b16 %v480
        %v505 = vunpack.c.l.b16 %v481
        %v506 = vpack.c.b16 %v505, %v504
        %v524 = vunpack.c.l.b16 %v486
        %v525 = vunpack.c.l.b16 %v487
        %v526 = vunpack.c.l.b16 %v488
        %v527 = vunpack.c.l.b16 %v489
        %v528 = vunpack.c.l.b16 %v490
        %v529 = vunpack.c.l.b16 %v491
        %v530 = vunpack.c.l.b16 %v492
        %v531 = vunpack.c.l.b16 %v493
        %v532 = vunpack.c.l.b16 %v494
        %v533 = vunpack.c.l.b16 %v495
        %v534 = vunpack.c.l.b16 %v496
        %v535 = vunpack.c.l.b16 %v497
        %v536 = vunpack.c.l.b16 %v498
        %v537 = vunpack.c.l.b16 %v499
        %v538 = vunpack.c.l.b16 %v500
        %v539 = vunpack.c.l.b16 %v501
        %v540 = vpack.c.b16 %v525, %v524
        %v541 = vpack.c.b16 %v527, %v526
        %v542 = vpack.c.b16 %v529, %v528
        %v543 = vpack.c.b16 %v531, %v530
        %v544 = vpack.c.b16 %v533, %v532
        %v545 = vpack.c.b16 %v535, %v534
        %v546 = vpack.c.b16 %v537, %v536
        %v547 = vpack.c.b16 %v539, %v538
        %556 = vmatprep.subr.bf16.mxu0 0
        %557 = vmatpush1.bf16.msra.mxu0 %v540
        %558 = vmatprep.subr.bf16.mxu0 0
        %559 = vmatpush1.bf16.msra.mxu0 %v541
        %560 = vmatprep.subr.bf16.mxu0 0
        %561 = vmatpush1.bf16.msra.mxu0 %v542
        %562 = vmatprep.subr.bf16.mxu0 0
        %563 = vmatpush1.bf16.msra.mxu0 %v543
        %564 = vmatprep.subr.bf16.mxu0 0
        %565 = vmatpush1.bf16.msra.mxu0 %v544
        %566 = vmatprep.subr.bf16.mxu0 0
        %567 = vmatpush1.bf16.msra.mxu0 %v545
        %568 = vmatprep.subr.bf16.mxu0 0
        %569 = vmatpush1.bf16.msra.mxu0 %v546
        %570 = vmatprep.subr.bf16.mxu0 0
        %571 = vmatpush1.bf16.msra.mxu0 %v547
        %572 = vmatprep.subr.bf16.mxu0 0
        %573 = vmatpush1.bf16.msra.mxu0 0
        %574 = vmatprep.subr.bf16.mxu0 0
        %575 = vmatpush1.bf16.msra.mxu0 0
        %576 = vmatprep.subr.bf16.mxu0 0
        %577 = vmatpush1.bf16.msra.mxu0 0
        %578 = vmatprep.subr.bf16.mxu0 0
        %579 = vmatpush1.bf16.msra.mxu0 0
        %580 = vmatprep.subr.bf16.mxu0 0
        %581 = vmatpush1.bf16.msra.mxu0 0
        %582 = vmatprep.subr.bf16.mxu0 0
        %583 = vmatpush1.bf16.msra.mxu0 0
        %584 = vmatprep.subr.bf16.mxu0 0
        %585 = vmatpush1.bf16.msra.mxu0 0
        %586 = vmatprep.subr.bf16.mxu0 0
        %587 = vmatpush1.bf16.msra.mxu0 0
        %588 = vmatprep.mubr.bf16.mxu0 0
        %589 = vmatmul.mubr.bf16.gmra.mrb[0].mxu0 %v506
        %v590 = vpop.f32.mrb[0].mxu0
        %v591 = vadd.f32 0.0, %v590
        %v592 = vpop.f32.mrb[0].mxu0
        %v593 = vpop.f32.mrb[0].mxu0
        %v594 = vadd.f32 0.0, %v593
        %v595 = vpop.f32.mrb[0].mxu0
        %596 = vdwg.mxu0
        %v597 = vld [vmem:[#allocation10] sm:$0xf]
        %v598 = vld [vmem:[#allocation10 + $0x4] sm:$0xf]
        %v599 = vld [vmem:[#allocation10 + $0x8] sm:$0xf]
        %v600 = vld [vmem:[#allocation10 + $0xc] sm:$0xf]
        %v601 = vld [vmem:[#allocation10 + $0x10] sm:$0xf]
        %v602 = vld [vmem:[#allocation10 + $0x14] sm:$0xf]
        %v603 = vld [vmem:[#allocation10 + $0x18] sm:$0xf]
        %v604 = vld [vmem:[#allocation10 + $0x1c] sm:$0xf]
        %v605 = vld [vmem:[#allocation10 + $0x20] sm:$0xf]
        %v606 = vld [vmem:[#allocation10 + $0x24] sm:$0xf]
        %v607 = vld [vmem:[#allocation10 + $0x28] sm:$0xf]
        %v608 = vld [vmem:[#allocation10 + $0x2c] sm:$0xf]
        %v609 = vld [vmem:[#allocation10 + $0x30] sm:$0xf]
        %v610 = vld [vmem:[#allocation10 + $0x34] sm:$0xf]
        %v611 = vld [vmem:[#allocation10 + $0x38] sm:$0xf]
        %v612 = vld [vmem:[#allocation10 + $0x3c] sm:$0xf]
        %v615 = vunpack.c.l.b16 %v482
        %v616 = vunpack.c.l.b16 %v483
        %v617 = vpack.c.b16 %v616, %v615
        %v635 = vunpack.c.l.b16 %v597
        %v636 = vunpack.c.l.b16 %v598
        %v637 = vunpack.c.l.b16 %v599
        %v638 = vunpack.c.l.b16 %v600
        %v639 = vunpack.c.l.b16 %v601
        %v640 = vunpack.c.l.b16 %v602
        %v641 = vunpack.c.l.b16 %v603
        %v642 = vunpack.c.l.b16 %v604
        %v643 = vunpack.c.l.b16 %v605
        %v644 = vunpack.c.l.b16 %v606
        %v645 = vunpack.c.l.b16 %v607
        %v646 = vunpack.c.l.b16 %v608
        %v647 = vunpack.c.l.b16 %v609
        %v648 = vunpack.c.l.b16 %v610
        %v649 = vunpack.c.l.b16 %v611
        %v650 = vunpack.c.l.b16 %v612
        %v651 = vpack.c.b16 %v636, %v635
        %v652 = vpack.c.b16 %v638, %v637
        %v653 = vpack.c.b16 %v640, %v639
        %v654 = vpack.c.b16 %v642, %v641
        %v655 = vpack.c.b16 %v644, %v643
        %v656 = vpack.c.b16 %v646, %v645
        %v657 = vpack.c.b16 %v648, %v647
        %v658 = vpack.c.b16 %v650, %v649
        %667 = vmatprep.subr.bf16.mxu0 0
        %668 = vmatpush1.bf16.msra.mxu0 %v651
        %669 = vmatprep.subr.bf16.mxu0 0
        %670 = vmatpush1.bf16.msra.mxu0 %v652
        %671 = vmatprep.subr.bf16.mxu0 0
        %672 = vmatpush1.bf16.msra.mxu0 %v653
        %673 = vmatprep.subr.bf16.mxu0 0
        %674 = vmatpush1.bf16.msra.mxu0 %v654
        %675 = vmatprep.subr.bf16.mxu0 0
        %676 = vmatpush1.bf16.msra.mxu0 %v655
        %677 = vmatprep.subr.bf16.mxu0 0
        %678 = vmatpush1.bf16.msra.mxu0 %v656
        %679 = vmatprep.subr.bf16.mxu0 0
        %680 = vmatpush1.bf16.msra.mxu0 %v657
        %681 = vmatprep.subr.bf16.mxu0 0
        %682 = vmatpush1.bf16.msra.mxu0 %v658
        %683 = vmatprep.subr.bf16.mxu0 0
        %684 = vmatpush1.bf16.msra.mxu0 0
        %685 = vmatprep.subr.bf16.mxu0 0
        %686 = vmatpush1.bf16.msra.mxu0 0
        %687 = vmatprep.subr.bf16.mxu0 0
        %688 = vmatpush1.bf16.msra.mxu0 0
        %689 = vmatprep.subr.bf16.mxu0 0
        %690 = vmatpush1.bf16.msra.mxu0 0
        %691 = vmatprep.subr.bf16.mxu0 0
        %692 = vmatpush1.bf16.msra.mxu0 0
        %693 = vmatprep.subr.bf16.mxu0 0
        %694 = vmatpush1.bf16.msra.mxu0 0
        %695 = vmatprep.subr.bf16.mxu0 0
        %696 = vmatpush1.bf16.msra.mxu0 0
        %697 = vmatprep.subr.bf16.mxu0 0
        %698 = vmatpush1.bf16.msra.mxu0 0
        %699 = vmatprep.mubr.bf16.mxu0 0
        %700 = vmatmul.mubr.bf16.gmra.mrb[0].mxu0 %v617
        %v701 = vpop.f32.mrb[0].mxu0
        %v702 = vadd.f32 0.0, %v701
        %v703 = vpop.f32.mrb[0].mxu0
        %v704 = vpop.f32.mrb[0].mxu0
        %v705 = vadd.f32 0.0, %v704
        %v706 = vpop.f32.mrb[0].mxu0
        %707 = vdwg.mxu0
        %v708 = vld [vmem:[#allocation11] sm:$0xf]
        %v709 = vld [vmem:[#allocation11 + $0x4] sm:$0xf]
        %v710 = vld [vmem:[#allocation11 + $0x8] sm:$0xf]
        %v711 = vld [vmem:[#allocation11 + $0xc] sm:$0xf]
        %v712 = vld [vmem:[#allocation11 + $0x10] sm:$0xf]
        %v713 = vld [vmem:[#allocation11 + $0x14] sm:$0xf]
        %v714 = vld [vmem:[#allocation11 + $0x18] sm:$0xf]
        %v715 = vld [vmem:[#allocation11 + $0x1c] sm:$0xf]
        %v716 = vld [vmem:[#allocation11 + $0x20] sm:$0xf]
        %v717 = vld [vmem:[#allocation11 + $0x24] sm:$0xf]
        %v718 = vld [vmem:[#allocation11 + $0x28] sm:$0xf]
        %v719 = vld [vmem:[#allocation11 + $0x2c] sm:$0xf]
        %v720 = vld [vmem:[#allocation11 + $0x30] sm:$0xf]
        %v721 = vld [vmem:[#allocation11 + $0x34] sm:$0xf]
        %v722 = vld [vmem:[#allocation11 + $0x38] sm:$0xf]
        %v723 = vld [vmem:[#allocation11 + $0x3c] sm:$0xf]
        %v726 = vunpack.c.l.b16 %v484
        %v727 = vunpack.c.l.b16 %v485
        %v728 = vpack.c.b16 %v727, %v726
        %v746 = vunpack.c.l.b16 %v708
        %v747 = vunpack.c.l.b16 %v709
        %v748 = vunpack.c.l.b16 %v710
        %v749 = vunpack.c.l.b16 %v711
        %v750 = vunpack.c.l.b16 %v712
        %v751 = vunpack.c.l.b16 %v713
        %v752 = vunpack.c.l.b16 %v714
        %v753 = vunpack.c.l.b16 %v715
        %v754 = vunpack.c.l.b16 %v716
        %v755 = vunpack.c.l.b16 %v717
        %v756 = vunpack.c.l.b16 %v718
        %v757 = vunpack.c.l.b16 %v719
        %v758 = vunpack.c.l.b16 %v720
        %v759 = vunpack.c.l.b16 %v721
        %v760 = vunpack.c.l.b16 %v722
        %v761 = vunpack.c.l.b16 %v723
        %v762 = vpack.c.b16 %v747, %v746
        %v763 = vpack.c.b16 %v749, %v748
        %v764 = vpack.c.b16 %v751, %v750
        %v765 = vpack.c.b16 %v753, %v752
        %v766 = vpack.c.b16 %v755, %v754
        %v767 = vpack.c.b16 %v757, %v756
        %v768 = vpack.c.b16 %v759, %v758
        %v769 = vpack.c.b16 %v761, %v760
        %778 = vmatprep.subr.bf16.mxu0 0
        %779 = vmatpush1.bf16.msra.mxu0 %v762
        %780 = vmatprep.subr.bf16.mxu0 0
        %781 = vmatpush1.bf16.msra.mxu0 %v763
        %782 = vmatprep.subr.bf16.mxu0 0
        %783 = vmatpush1.bf16.msra.mxu0 %v764
        %784 = vmatprep.subr.bf16.mxu0 0
        %785 = vmatpush1.bf16.msra.mxu0 %v765
        %786 = vmatprep.subr.bf16.mxu0 0
        %787 = vmatpush1.bf16.msra.mxu0 %v766
        %788 = vmatprep.subr.bf16.mxu0 0
        %789 = vmatpush1.bf16.msra.mxu0 %v767
        %790 = vmatprep.subr.bf16.mxu0 0
        %791 = vmatpush1.bf16.msra.mxu0 %v768
        %792 = vmatprep.subr.bf16.mxu0 0
        %793 = vmatpush1.bf16.msra.mxu0 %v769
        %794 = vmatprep.subr.bf16.mxu0 0
        %795 = vmatpush1.bf16.msra.mxu0 0
        %796 = vmatprep.subr.bf16.mxu0 0
        %797 = vmatpush1.bf16.msra.mxu0 0
        %798 = vmatprep.subr.bf16.mxu0 0
        %799 = vmatpush1.bf16.msra.mxu0 0
        %800 = vmatprep.subr.bf16.mxu0 0
        %801 = vmatpush1.bf16.msra.mxu0 0
        %802 = vmatprep.subr.bf16.mxu0 0
        %803 = vmatpush1.bf16.msra.mxu0 0
        %804 = vmatprep.subr.bf16.mxu0 0
        %805 = vmatpush1.bf16.msra.mxu0 0
        %806 = vmatprep.subr.bf16.mxu0 0
        %807 = vmatpush1.bf16.msra.mxu0 0
        %808 = vmatprep.subr.bf16.mxu0 0
        %809 = vmatpush1.bf16.msra.mxu0 0
        %810 = vmatprep.mubr.bf16.mxu0 0
        %811 = vmatmul.mubr.bf16.gmra.mrb[0].mxu0 %v728
        %v812 = vpop.f32.mrb[0].mxu0
        %v813 = vadd.f32 0.0, %v812
        %v814 = vpop.f32.mrb[0].mxu0
        %v815 = vpop.f32.mrb[0].mxu0
        %v816 = vadd.f32 0.0, %v815
        %v817 = vpop.f32.mrb[0].mxu0
        %818 = vdwg.mxu0
        %v819 = vpack.c.bf16 %v594, %v591
        %v820 = vpack.c.bf16 %v705, %v702
        %v821 = vpack.c.bf16 %v816, %v813
        %vm822 = vcmask 130048
        %v824 = vsel %vm822, %v819, 0
        %v827 = vsel %vm822, %v820, 0
        %829 = vmatprep.subr.bf16.mxu0 0
        %830 = vmatpush1.bf16.xpose.msra.mxu0 %v827
        %831 = vmatprep.subr.bf16.mxu0 0
        %832 = vmatpush1.bf16.xpose.msra.mxu0 0
        %833 = vmatprep.subr.bf16.mxu0 0
        %834 = vmatpush1.bf16.xpose.msra.mxu0 0
        %835 = vmatprep.subr.bf16.mxu0 0
        %836 = vmatpush1.bf16.xpose.msra.mxu0 0
        %837 = vmatprep.subr.bf16.mxu0 0
        %838 = vmatpush1.bf16.xpose.msra.mxu0 0
        %839 = vmatprep.subr.bf16.mxu0 0
        %840 = vmatpush1.bf16.xpose.msra.mxu0 0
        %841 = vmatprep.subr.bf16.mxu0 0
        %842 = vmatpush1.bf16.xpose.msra.mxu0 0
        %843 = vmatprep.subr.bf16.mxu0 0
        %844 = vmatpush1.bf16.xpose.msra.mxu0 0
        %845 = vmatprep.subr.bf16.mxu0 0
        %846 = vmatpush1.bf16.xpose.msra.mxu0 0
        %847 = vmatprep.subr.bf16.mxu0 0
        %848 = vmatpush1.bf16.xpose.msra.mxu0 0
        %849 = vmatprep.subr.bf16.mxu0 0
        %850 = vmatpush1.bf16.xpose.msra.mxu0 0
        %851 = vmatprep.subr.bf16.mxu0 0
        %852 = vmatpush1.bf16.xpose.msra.mxu0 0
        %853 = vmatprep.subr.bf16.mxu0 0
        %854 = vmatpush1.bf16.xpose.msra.mxu0 0
        %855 = vmatprep.subr.bf16.mxu0 0
        %856 = vmatpush1.bf16.xpose.msra.mxu0 0
        %857 = vmatprep.subr.bf16.mxu0 0
        %858 = vmatpush1.bf16.xpose.msra.mxu0 0
        %859 = vmatprep.subr.bf16.mxu0 0
        %860 = vmatpush1.bf16.xpose.msra.mxu0 0
        %861 = vmatprep.mubr.bf16.mxu0 0
        %862 = vmatmul.mubr.bf16.gmra.mrb[0].mxu0 %v824
        %v863 = vpop.f32.mrb[0].mxu0
        %v864 = vadd.f32 0.0, %v863
        %v865 = vpop.f32.mrb[0].mxu0
        %v866 = vpop.f32.mrb[0].mxu0
        %v867 = vadd.f32 0.0, %v866
        %v868 = vpop.f32.mrb[0].mxu0
        %869 = vdwg.mxu0
        %v870 = vsel %vm822, %v864, -inf
        %871 = vmax.xlane.f32.xlu0 %v870
        %v872 = vpop.xlane.xlu0 %871
        %v873 = vsel %vm822, %v867, -inf
        %874 = vmax.xlane.f32.xlu0 %v873
        %v875 = vpop.xlane.xlu0 %874
        %v876 = vsub.f32 %v864, %v872
        %v877 = vsub.f32 %v867, %v875
        %v878 = vmul.f32 %v876, 1.442695
        %v879 = vpow.pop %v878
        %v880 = vmul.f32 %v877, 1.442695
        %v881 = vpow.pop %v880
        %v882 = vsel %vm822, %v879, 0.0
        %883 = vadd.xlane.f32.xlu0 %v882
        %v884 = vpop.xlane.xlu0 %883
        %v885 = vsel %vm822, %v881, 0.0
        %886 = vadd.xlane.f32.xlu0 %v885
        %v887 = vpop.xlane.xlu0 %886
        %v888 = vrcp.pop %v884
        %v889 = vrcp.pop %v887
        %v890 = vmul.f32 %v879, %v888
        %v891 = vmul.f32 %v881, %v889
        %v892 = vpack.c.bf16 %v891, %v890
        %v894 = vsel %vm822, %v892, 0
        %896 = vmatprep.subr.bf16.mxu0 0
        %897 = vmatpush1.bf16.msra.mxu0 %v821
        %898 = vmatprep.subr.bf16.mxu0 0
        %899 = vmatpush1.bf16.msra.mxu0 0
        %900 = vmatprep.subr.bf16.mxu0 0
        %901 = vmatpush1.bf16.msra.mxu0 0
        %902 = vmatprep.subr.bf16.mxu0 0
        %903 = vmatpush1.bf16.msra.mxu0 0
        %904 = vmatprep.subr.bf16.mxu0 0
        %905 = vmatpush1.bf16.msra.mxu0 0
        %906 = vmatprep.subr.bf16.mxu0 0
        %907 = vmatpush1.bf16.msra.mxu0 0
        %908 = vmatprep.subr.bf16.mxu0 0
        %909 = vmatpush1.bf16.msra.mxu0 0
        %910 = vmatprep.subr.bf16.mxu0 0
        %911 = vmatpush1.bf16.msra.mxu0 0
        %912 = vmatprep.subr.bf16.mxu0 0
        %913 = vmatpush1.bf16.msra.mxu0 0
        %914 = vmatprep.subr.bf16.mxu0 0
        %915 = vmatpush1.bf16.msra.mxu0 0
        %916 = vmatprep.subr.bf16.mxu0 0
        %917 = vmatpush1.bf16.msra.mxu0 0
        %918 = vmatprep.subr.bf16.mxu0 0
        %919 = vmatpush1.bf16.msra.mxu0 0
        %920 = vmatprep.subr.bf16.mxu0 0
        %921 = vmatpush1.bf16.msra.mxu0 0
        %922 = vmatprep.subr.bf16.mxu0 0
        %923 = vmatpush1.bf16.msra.mxu0 0
        %924 = vmatprep.subr.bf16.mxu0 0
        %925 = vmatpush1.bf16.msra.mxu0 0
        %926 = vmatprep.subr.bf16.mxu0 0
        %927 = vmatpush1.bf16.msra.mxu0 0
        %928 = vmatprep.mubr.bf16.mxu0 0
        %929 = vmatmul.mubr.bf16.gmra.mrb[0].mxu0 %v894
        %v930 = vpop.f32.mrb[0].mxu0
        %v931 = vadd.f32 0.0, %v930
        %v932 = vpop.f32.mrb[0].mxu0
        %v933 = vpop.f32.mrb[0].mxu0
        %v934 = vadd.f32 0.0, %v933
        %v935 = vpop.f32.mrb[0].mxu0
        %936 = vdwg.mxu0
        %v937 = vpack.c.bf16 %v934, %v931
        %v938 = vld [vmem:[#allocation13] sm:$0xf]
        %v939 = vld [vmem:[#allocation13 + $0x4] sm:$0xf]
        %941 = vrot.lane.b32.xlu0 %v819, 112
        %v942 = vpop.permute.xlu0 %941
        %944 = vrot.lane.b32.xlu0 %v820, 112
        %v945 = vpop.permute.xlu0 %944
        %v947 = vsel %vm822, %v942, 0
        %v950 = vsel %vm822, %v945, 0
        %952 = vmatprep.subr.bf16.mxu0 0
        %953 = vmatpush1.bf16.xpose.msra.mxu0 %v950
        %954 = vmatprep.subr.bf16.mxu0 0
        %955 = vmatpush1.bf16.xpose.msra.mxu0 0
        %956 = vmatprep.subr.bf16.mxu0 0
        %957 = vmatpush1.bf16.xpose.msra.mxu0 0
        %958 = vmatprep.subr.bf16.mxu0 0
        %959 = vmatpush1.bf16.xpose.msra.mxu0 0
        %960 = vmatprep.subr.bf16.mxu0 0
        %961 = vmatpush1.bf16.xpose.msra.mxu0 0
        %962 = vmatprep.subr.bf16.mxu0 0
        %963 = vmatpush1.bf16.xpose.msra.mxu0 0
        %964 = vmatprep.subr.bf16.mxu0 0
        %965 = vmatpush1.bf16.xpose.msra.mxu0 0
        %966 = vmatprep.subr.bf16.mxu0 0
        %967 = vmatpush1.bf16.xpose.msra.mxu0 0
        %968 = vmatprep.subr.bf16.mxu0 0
        %969 = vmatpush1.bf16.xpose.msra.mxu0 0
        %970 = vmatprep.subr.bf16.mxu0 0
        %971 = vmatpush1.bf16.xpose.msra.mxu0 0
        %972 = vmatprep.subr.bf16.mxu0 0
        %973 = vmatpush1.bf16.xpose.msra.mxu0 0
        %974 = vmatprep.subr.bf16.mxu0 0
        %975 = vmatpush1.bf16.xpose.msra.mxu0 0
        %976 = vmatprep.subr.bf16.mxu0 0
        %977 = vmatpush1.bf16.xpose.msra.mxu0 0
        %978 = vmatprep.subr.bf16.mxu0 0
        %979 = vmatpush1.bf16.xpose.msra.mxu0 0
        %980 = vmatprep.subr.bf16.mxu0 0
        %981 = vmatpush1.bf16.xpose.msra.mxu0 0
        %982 = vmatprep.subr.bf16.mxu0 0
        %983 = vmatpush1.bf16.xpose.msra.mxu0 0
        %984 = vmatprep.mubr.bf16.mxu0 0
        %985 = vmatmul.mubr.bf16.gmra.mrb[0].mxu0 %v947
        %v986 = vpop.f32.mrb[0].mxu0
        %v987 = vadd.f32 0.0, %v986
        %v988 = vpop.f32.mrb[0].mxu0
        %v989 = vpop.f32.mrb[0].mxu0
        %v990 = vadd.f32 0.0, %v989
        %v991 = vpop.f32.mrb[0].mxu0
        %992 = vdwg.mxu0
        %v993 = vsel %vm822, %v987, -inf
        %994 = vmax.xlane.f32.xlu0 %v993
        %v995 = vpop.xlane.xlu0 %994
        %v996 = vsel %vm822, %v990, -inf
        %997 = vmax.xlane.f32.xlu0 %v996
        %v998 = vpop.xlane.xlu0 %997
        %v999 = vsub.f32 %v987, %v995
        %v1000 = vsub.f32 %v990, %v998
        %v1001 = vmul.f32 %v999, 1.442695
        %v1002 = vpow.pop %v1001
        %v1003 = vmul.f32 %v1000, 1.442695
        %v1004 = vpow.pop %v1003
        %v1005 = vsel %vm822, %v1002, 0.0
        %1006 = vadd.xlane.f32.xlu0 %v1005
        %v1007 = vpop.xlane.xlu0 %1006
        %v1008 = vsel %vm822, %v1004, 0.0
        %1009 = vadd.xlane.f32.xlu0 %v1008
        %v1010 = vpop.xlane.xlu0 %1009
        %v1011 = vrcp.pop %v1007
        %v1012 = vrcp.pop %v1010
        %v1013 = vmul.f32 %v1002, %v1011
        %v1014 = vmul.f32 %v1004, %v1012
        %v1015 = vpack.c.bf16 %v1014, %v1013
        %1017 = vrot.lane.b32.xlu0 %v821, 112
        %v1018 = vpop.permute.xlu0 %1017
        %v1021 = vsel %vm822, %v1015, 0
        %1023 = vmatprep.subr.bf16.mxu0 0
        %1024 = vmatpush1.bf16.msra.mxu0 %v1018
        %1025 = vmatprep.subr.bf16.mxu0 0
        %1026 = vmatpush1.bf16.msra.mxu0 0
        %1027 = vmatprep.subr.bf16.mxu0 0
        %1028 = vmatpush1.bf16.msra.mxu0 0
        %1029 = vmatprep.subr.bf16.mxu0 0
        %1030 = vmatpush1.bf16.msra.mxu0 0
        %1031 = vmatprep.subr.bf16.mxu0 0
        %1032 = vmatpush1.bf16.msra.mxu0 0
        %1033 = vmatprep.subr.bf16.mxu0 0
        %1034 = vmatpush1.bf16.msra.mxu0 0
        %1035 = vmatprep.subr.bf16.mxu0 0
        %1036 = vmatpush1.bf16.msra.mxu0 0
        %1037 = vmatprep.subr.bf16.mxu0 0
        %1038 = vmatpush1.bf16.msra.mxu0 0
        %1039 = vmatprep.subr.bf16.mxu0 0
        %1040 = vmatpush1.bf16.msra.mxu0 0
        %1041 = vmatprep.subr.bf16.mxu0 0
        %1042 = vmatpush1.bf16.msra.mxu0 0
        %1043 = vmatprep.subr.bf16.mxu0 0
        %1044 = vmatpush1.bf16.msra.mxu0 0
        %1045 = vmatprep.subr.bf16.mxu0 0
        %1046 = vmatpush1.bf16.msra.mxu0 0
        %1047 = vmatprep.subr.bf16.mxu0 0
        %1048 = vmatpush1.bf16.msra.mxu0 0
        %1049 = vmatprep.subr.bf16.mxu0 0
        %1050 = vmatpush1.bf16.msra.mxu0 0
        %1051 = vmatprep.subr.bf16.mxu0 0
        %1052 = vmatpush1.bf16.msra.mxu0 0
        %1053 = vmatprep.subr.bf16.mxu0 0
        %1054 = vmatpush1.bf16.msra.mxu0 0
        %1055 = vmatprep.mubr.bf16.mxu0 0
        %1056 = vmatmul.mubr.bf16.gmra.mrb[0].mxu0 %v1021
        %v1057 = vpop.f32.mrb[0].mxu0
        %v1058 = vadd.f32 0.0, %v1057
        %v1059 = vpop.f32.mrb[0].mxu0
        %v1060 = vpop.f32.mrb[0].mxu0
        %v1061 = vadd.f32 0.0, %v1060
        %v1062 = vpop.f32.mrb[0].mxu0
        %1063 = vdwg.mxu0
        %v1064 = vpack.c.bf16 %v1061, %v1058
        %s1065 = scalar_lea.vmem [#allocation13], 8
        %v1066 = vld [vmem:[%s1065] sm:$0xf]
        %v1067 = vld [vmem:[%s1065 + $0x4] sm:$0xf]
        %v1070 = vunpack.c.l.b16 %v1066
        %v1071 = vunpack.c.l.b16 %v1067
        %v1072 = vpack.c.b16 %v1071, %v1070
        %v1075 = vsel %vm822, %v1064, 0
        %1077 = vmatprep.subr.bf16.mxu0 0
        %1078 = vmatpush1.bf16.msra.mxu0 %v1072
        %1079 = vmatprep.subr.bf16.mxu0 0
        %1080 = vmatpush1.bf16.msra.mxu0 0
        %1081 = vmatprep.subr.bf16.mxu0 0
        %1082 = vmatpush1.bf16.msra.mxu0 0
        %1083 = vmatprep.subr.bf16.mxu0 0
        %1084 = vmatpush1.bf16.msra.mxu0 0
        %1085 = vmatprep.subr.bf16.mxu0 0
        %1086 = vmatpush1.bf16.msra.mxu0 0
        %1087 = vmatprep.subr.bf16.mxu0 0
        %1088 = vmatpush1.bf16.msra.mxu0 0
        %1089 = vmatprep.subr.bf16.mxu0 0
        %1090 = vmatpush1.bf16.msra.mxu0 0
        %1091 = vmatprep.subr.bf16.mxu0 0
        %1092 = vmatpush1.bf16.msra.mxu0 0
        %1093 = vmatprep.subr.bf16.mxu0 0
        %1094 = vmatpush1.bf16.msra.mxu0 0
        %1095 = vmatprep.subr.bf16.mxu0 0
        %1096 = vmatpush1.bf16.msra.mxu0 0
        %1097 = vmatprep.subr.bf16.mxu0 0
        %1098 = vmatpush1.bf16.msra.mxu0 0
        %1099 = vmatprep.subr.bf16.mxu0 0
        %1100 = vmatpush1.bf16.msra.mxu0 0
        %1101 = vmatprep.subr.bf16.mxu0 0
        %1102 = vmatpush1.bf16.msra.mxu0 0
        %1103 = vmatprep.subr.bf16.mxu0 0
        %1104 = vmatpush1.bf16.msra.mxu0 0
        %1105 = vmatprep.subr.bf16.mxu0 0
        %1106 = vmatpush1.bf16.msra.mxu0 0
        %1107 = vmatprep.subr.bf16.mxu0 0
        %1108 = vmatpush1.bf16.msra.mxu0 0
        %1109 = vmatprep.mubr.bf16.mxu0 0
        %1110 = vmatmul.mubr.bf16.gmra.mrb[0].mxu0 %v1075
        %v1111 = vpop.f32.mrb[0].mxu0
        %v1112 = vadd.f32 0.0, %v1111
        %v1113 = vpop.f32.mrb[0].mxu0
        %v1114 = vpop.f32.mrb[0].mxu0
        %v1115 = vadd.f32 0.0, %v1114
        %v1116 = vpop.f32.mrb[0].mxu0
        %1117 = vdwg.mxu0
        %v1120 = vunpack.c.l.b16 %v938
        %v1121 = vunpack.c.l.b16 %v939
        %v1122 = vpack.c.b16 %v1121, %v1120
        %v1125 = vsel %vm822, %v937, 0
        %1127 = vmatprep.subr.bf16.mxu0 0
        %1128 = vmatpush1.bf16.msra.mxu0 %v1122
        %1129 = vmatprep.subr.bf16.mxu0 0
        %1130 = vmatpush1.bf16.msra.mxu0 0
        %1131 = vmatprep.subr.bf16.mxu0 0
        %1132 = vmatpush1.bf16.msra.mxu0 0
        %1133 = vmatprep.subr.bf16.mxu0 0
        %1134 = vmatpush1.bf16.msra.mxu0 0
        %1135 = vmatprep.subr.bf16.mxu0 0
        %1136 = vmatpush1.bf16.msra.mxu0 0
        %1137 = vmatprep.subr.bf16.mxu0 0
        %1138 = vmatpush1.bf16.msra.mxu0 0
        %1139 = vmatprep.subr.bf16.mxu0 0
        %1140 = vmatpush1.bf16.msra.mxu0 0
        %1141 = vmatprep.subr.bf16.mxu0 0
        %1142 = vmatpush1.bf16.msra.mxu0 0
        %1143 = vmatprep.subr.bf16.mxu0 0
        %1144 = vmatpush1.bf16.msra.mxu0 0
        %1145 = vmatprep.subr.bf16.mxu0 0
        %1146 = vmatpush1.bf16.msra.mxu0 0
        %1147 = vmatprep.subr.bf16.mxu0 0
        %1148 = vmatpush1.bf16.msra.mxu0 0
        %1149 = vmatprep.subr.bf16.mxu0 0
        %1150 = vmatpush1.bf16.msra.mxu0 0
        %1151 = vmatprep.subr.bf16.mxu0 0
        %1152 = vmatpush1.bf16.msra.mxu0 0
        %1153 = vmatprep.subr.bf16.mxu0 0
        %1154 = vmatpush1.bf16.msra.mxu0 0
        %1155 = vmatprep.subr.bf16.mxu0 0
        %1156 = vmatpush1.bf16.msra.mxu0 0
        %1157 = vmatprep.subr.bf16.mxu0 0
        %1158 = vmatpush1.bf16.msra.mxu0 0
        %1159 = vmatprep.mubr.bf16.mxu0 0
        %1160 = vmatmul.mubr.bf16.gmra.mrb[0].mxu0 %v1125
        %v1161 = vpop.f32.mrb[0].mxu0
        %v1162 = vadd.f32 %v1112, %v1161
        %v1163 = vpop.f32.mrb[0].mxu0
        %v1164 = vpop.f32.mrb[0].mxu0
        %v1165 = vadd.f32 %v1115, %v1164
        %v1166 = vpop.f32.mrb[0].mxu0
        %1167 = vdwg.mxu0
        %1168 = vrot.lane.b32.xlu0 %v819, 96
        %v1169 = vpop.permute.xlu0 %1168
        %1170 = vrot.lane.b32.xlu0 %v820, 96
        %v1171 = vpop.permute.xlu0 %1170
        %v1173 = vsel %vm822, %v1169, 0
        %v1176 = vsel %vm822, %v1171, 0
        %1178 = vmatprep.subr.bf16.mxu0 0
        %1179 = vmatpush1.bf16.xpose.msra.mxu0 %v1176
        %1180 = vmatprep.subr.bf16.mxu0 0
        %1181 = vmatpush1.bf16.xpose.msra.mxu0 0
        %1182 = vmatprep.subr.bf16.mxu0 0
        %1183 = vmatpush1.bf16.xpose.msra.mxu0 0
        %1184 = vmatprep.subr.bf16.mxu0 0
        %1185 = vmatpush1.bf16.xpose.msra.mxu0 0
        %1186 = vmatprep.subr.bf16.mxu0 0
        %1187 = vmatpush1.bf16.xpose.msra.mxu0 0
        %1188 = vmatprep.subr.bf16.mxu0 0
        %1189 = vmatpush1.bf16.xpose.msra.mxu0 0
        %1190 = vmatprep.subr.bf16.mxu0 0
        %1191 = vmatpush1.bf16.xpose.msra.mxu0 0
        %1192 = vmatprep.subr.bf16.mxu0 0
        %1193 = vmatpush1.bf16.xpose.msra.mxu0 0
        %1194 = vmatprep.subr.bf16.mxu0 0
        %1195 = vmatpush1.bf16.xpose.msra.mxu0 0
        %1196 = vmatprep.subr.bf16.mxu0 0
        %1197 = vmatpush1.bf16.xpose.msra.mxu0 0
        %1198 = vmatprep.subr.bf16.mxu0 0
        %1199 = vmatpush1.bf16.xpose.msra.mxu0 0
        %1200 = vmatprep.subr.bf16.mxu0 0
        %1201 = vmatpush1.bf16.xpose.msra.mxu0 0
        %1202 = vmatprep.subr.bf16.mxu0 0
        %1203 = vmatpush1.bf16.xpose.msra.mxu0 0
        %1204 = vmatprep.subr.bf16.mxu0 0
        %1205 = vmatpush1.bf16.xpose.msra.mxu0 0
        %1206 = vmatprep.subr.bf16.mxu0 0
        %1207 = vmatpush1.bf16.xpose.msra.mxu0 0
        %1208 = vmatprep.subr.bf16.mxu0 0
        %1209 = vmatpush1.bf16.xpose.msra.mxu0 0
        %1210 = vmatprep.mubr.bf16.mxu0 0
        %1211 = vmatmul.mubr.bf16.gmra.mrb[0].mxu0 %v1173
        %v1212 = vpop.f32.mrb[0].mxu0
        %v1213 = vadd.f32 0.0, %v1212
        %v1214 = vpop.f32.mrb[0].mxu0
        %v1215 = vpop.f32.mrb[0].mxu0
        %v1216 = vadd.f32 0.0, %v1215
        %v1217 = vpop.f32.mrb[0].mxu0
        %1218 = vdwg.mxu0
        %v1219 = vsel %vm822, %v1213, -inf
        %1220 = vmax.xlane.f32.xlu0 %v1219
        %v1221 = vpop.xlane.xlu0 %1220
        %v1222 = vsel %vm822, %v1216, -inf
        %1223 = vmax.xlane.f32.xlu0 %v1222
        %v1224 = vpop.xlane.xlu0 %1223
        %v1225 = vsub.f32 %v1213, %v1221
        %v1226 = vsub.f32 %v1216, %v1224
        %v1227 = vmul.f32 %v1225, 1.442695
        %v1228 = vpow.pop %v1227
        %v1229 = vmul.f32 %v1226, 1.442695
        %v1230 = vpow.pop %v1229
        %v1231 = vsel %vm822, %v1228, 0.0
        %1232 = vadd.xlane.f32.xlu0 %v1231
        %v1233 = vpop.xlane.xlu0 %1232
        %v1234 = vsel %vm822, %v1230, 0.0
        %1235 = vadd.xlane.f32.xlu0 %v1234
        %v1236 = vpop.xlane.xlu0 %1235
        %v1237 = vrcp.pop %v1233
        %v1238 = vrcp.pop %v1236
        %v1239 = vmul.f32 %v1228, %v1237
        %v1240 = vmul.f32 %v1230, %v1238
        %v1241 = vpack.c.bf16 %v1240, %v1239
        %1242 = vrot.lane.b32.xlu0 %v821, 96
        %v1243 = vpop.permute.xlu0 %1242
        %v1246 = vsel %vm822, %v1241, 0
        %1248 = vmatprep.subr.bf16.mxu0 0
        %1249 = vmatpush1.bf16.msra.mxu0 %v1243
        %1250 = vmatprep.subr.bf16.mxu0 0
        %1251 = vmatpush1.bf16.msra.mxu0 0
        %1252 = vmatprep.subr.bf16.mxu0 0
        %1253 = vmatpush1.bf16.msra.mxu0 0
        %1254 = vmatprep.subr.bf16.mxu0 0
        %1255 = vmatpush1.bf16.msra.mxu0 0
        %1256 = vmatprep.subr.bf16.mxu0 0
        %1257 = vmatpush1.bf16.msra.mxu0 0
        %1258 = vmatprep.subr.bf16.mxu0 0
        %1259 = vmatpush1.bf16.msra.mxu0 0
        %1260 = vmatprep.subr.bf16.mxu0 0
        %1261 = vmatpush1.bf16.msra.mxu0 0
        %1262 = vmatprep.subr.bf16.mxu0 0
        %1263 = vmatpush1.bf16.msra.mxu0 0
        %1264 = vmatprep.subr.bf16.mxu0 0
        %1265 = vmatpush1.bf16.msra.mxu0 0
        %1266 = vmatprep.subr.bf16.mxu0 0
        %1267 = vmatpush1.bf16.msra.mxu0 0
        %1268 = vmatprep.subr.bf16.mxu0 0
        %1269 = vmatpush1.bf16.msra.mxu0 0
        %1270 = vmatprep.subr.bf16.mxu0 0
        %1271 = vmatpush1.bf16.msra.mxu0 0
        %1272 = vmatprep.subr.bf16.mxu0 0
        %1273 = vmatpush1.bf16.msra.mxu0 0
        %1274 = vmatprep.subr.bf16.mxu0 0
        %1275 = vmatpush1.bf16.msra.mxu0 0
        %1276 = vmatprep.subr.bf16.mxu0 0
        %1277 = vmatpush1.bf16.msra.mxu0 0
        %1278 = vmatprep.subr.bf16.mxu0 0
        %1279 = vmatpush1.bf16.msra.mxu0 0
        %1280 = vmatprep.mubr.bf16.mxu0 0
        %1281 = vmatmul.mubr.bf16.gmra.mrb[0].mxu0 %v1246
        %v1282 = vpop.f32.mrb[0].mxu0
        %v1283 = vadd.f32 0.0, %v1282
        %v1284 = vpop.f32.mrb[0].mxu0
        %v1285 = vpop.f32.mrb[0].mxu0
        %v1286 = vadd.f32 0.0, %v1285
        %v1287 = vpop.f32.mrb[0].mxu0
        %1288 = vdwg.mxu0
        %v1289 = vpack.c.bf16 %v1286, %v1283
        %s1290 = scalar_lea.vmem [#allocation13], 16
        %v1291 = vld [vmem:[%s1290] sm:$0xf]
        %v1292 = vld [vmem:[%s1290 + $0x4] sm:$0xf]
        %v1295 = vunpack.c.l.b16 %v1291
        %v1296 = vunpack.c.l.b16 %v1292
        %v1297 = vpack.c.b16 %v1296, %v1295
        %v1300 = vsel %vm822, %v1289, 0
        %1302 = vmatprep.subr.bf16.mxu0 0
        %1303 = vmatpush1.bf16.msra.mxu0 %v1297
        %1304 = vmatprep.subr.bf16.mxu0 0
        %1305 = vmatpush1.bf16.msra.mxu0 0
        %1306 = vmatprep.subr.bf16.mxu0 0
        %1307 = vmatpush1.bf16.msra.mxu0 0
        %1308 = vmatprep.subr.bf16.mxu0 0
        %1309 = vmatpush1.bf16.msra.mxu0 0
        %1310 = vmatprep.subr.bf16.mxu0 0
        %1311 = vmatpush1.bf16.msra.mxu0 0
        %1312 = vmatprep.subr.bf16.mxu0 0
        %1313 = vmatpush1.bf16.msra.mxu0 0
        %1314 = vmatprep.subr.bf16.mxu0 0
        %1315 = vmatpush1.bf16.msra.mxu0 0
        %1316 = vmatprep.subr.bf16.mxu0 0
        %1317 = vmatpush1.bf16.msra.mxu0 0
        %1318 = vmatprep.subr.bf16.mxu0 0
        %1319 = vmatpush1.bf16.msra.mxu0 0
        %1320 = vmatprep.subr.bf16.mxu0 0
        %1321 = vmatpush1.bf16.msra.mxu0 0
        %1322 = vmatprep.subr.bf16.mxu0 0
        %1323 = vmatpush1.bf16.msra.mxu0 0
        %1324 = vmatprep.subr.bf16.mxu0 0
        %1325 = vmatpush1.bf16.msra.mxu0 0
        %1326 = vmatprep.subr.bf16.mxu0 0
        %1327 = vmatpush1.bf16.msra.mxu0 0
        %1328 = vmatprep.subr.bf16.mxu0 0
        %1329 = vmatpush1.bf16.msra.mxu0 0
        %1330 = vmatprep.subr.bf16.mxu0 0
        %1331 = vmatpush1.bf16.msra.mxu0 0
        %1332 = vmatprep.subr.bf16.mxu0 0
        %1333 = vmatpush1.bf16.msra.mxu0 0
        %1334 = vmatprep.mubr.bf16.mxu0 0
        %1335 = vmatmul.mubr.bf16.gmra.mrb[0].mxu0 %v1300
        %v1336 = vpop.f32.mrb[0].mxu0
        %v1337 = vadd.f32 0.0, %v1336
        %v1338 = vpop.f32.mrb[0].mxu0
        %v1339 = vpop.f32.mrb[0].mxu0
        %v1340 = vadd.f32 0.0, %v1339
        %v1341 = vpop.f32.mrb[0].mxu0
        %1342 = vdwg.mxu0
        %v1343 = vadd.f32 %v1162, %v1337
        %v1344 = vadd.f32 %v1165, %v1340
        %1345 = vrot.lane.b32.xlu0 %v819, 80
        %v1346 = vpop.permute.xlu0 %1345
        %1347 = vrot.lane.b32.xlu0 %v820, 80
        %v1348 = vpop.permute.xlu0 %1347
        %v1350 = vsel %vm822, %v1346, 0
        %v1353 = vsel %vm822, %v1348, 0
        %1355 = vmatprep.subr.bf16.mxu0 0
        %1356 = vmatpush1.bf16.xpose.msra.mxu0 %v1353
        %1357 = vmatprep.subr.bf16.mxu0 0
        %1358 = vmatpush1.bf16.xpose.msra.mxu0 0
        %1359 = vmatprep.subr.bf16.mxu0 0
        %1360 = vmatpush1.bf16.xpose.msra.mxu0 0
        %1361 = vmatprep.subr.bf16.mxu0 0
        %1362 = vmatpush1.bf16.xpose.msra.mxu0 0
        %1363 = vmatprep.subr.bf16.mxu0 0
        %1364 = vmatpush1.bf16.xpose.msra.mxu0 0
        %1365 = vmatprep.subr.bf16.mxu0 0
        %1366 = vmatpush1.bf16.xpose.msra.mxu0 0
        %1367 = vmatprep.subr.bf16.mxu0 0
        %1368 = vmatpush1.bf16.xpose.msra.mxu0 0
        %1369 = vmatprep.subr.bf16.mxu0 0
        %1370 = vmatpush1.bf16.xpose.msra.mxu0 0
        %1371 = vmatprep.subr.bf16.mxu0 0
        %1372 = vmatpush1.bf16.xpose.msra.mxu0 0
        %1373 = vmatprep.subr.bf16.mxu0 0
        %1374 = vmatpush1.bf16.xpose.msra.mxu0 0
        %1375 = vmatprep.subr.bf16.mxu0 0
        %1376 = vmatpush1.bf16.xpose.msra.mxu0 0
        %1377 = vmatprep.subr.bf16.mxu0 0
        %1378 = vmatpush1.bf16.xpose.msra.mxu0 0
        %1379 = vmatprep.subr.bf16.mxu0 0
        %1380 = vmatpush1.bf16.xpose.msra.mxu0 0
        %1381 = vmatprep.subr.bf16.mxu0 0
        %1382 = vmatpush1.bf16.xpose.msra.mxu0 0
        %1383 = vmatprep.subr.bf16.mxu0 0
        %1384 = vmatpush1.bf16.xpose.msra.mxu0 0
        %1385 = vmatprep.subr.bf16.mxu0 0
        %1386 = vmatpush1.bf16.xpose.msra.mxu0 0
        %1387 = vmatprep.mubr.bf16.mxu0 0
        %1388 = vmatmul.mubr.bf16.gmra.mrb[0].mxu0 %v1350
        %v1389 = vpop.f32.mrb[0].mxu0
        %v1390 = vadd.f32 0.0, %v1389
        %v1391 = vpop.f32.mrb[0].mxu0
        %v1392 = vpop.f32.mrb[0].mxu0
        %v1393 = vadd.f32 0.0, %v1392
        %v1394 = vpop.f32.mrb[0].mxu0
        %1395 = vdwg.mxu0
        %v1396 = vsel %vm822, %v1390, -inf
        %1397 = vmax.xlane.f32.xlu0 %v1396
        %v1398 = vpop.xlane.xlu0 %1397
        %v1399 = vsel %vm822, %v1393, -inf
        %1400 = vmax.xlane.f32.xlu0 %v1399
        %v1401 = vpop.xlane.xlu0 %1400
        %v1402 = vsub.f32 %v1390, %v1398
        %v1403 = vsub.f32 %v1393, %v1401
        %v1404 = vmul.f32 %v1402, 1.442695
        %v1405 = vpow.pop %v1404
        %v1406 = vmul.f32 %v1403, 1.442695
        %v1407 = vpow.pop %v1406
        %v1408 = vsel %vm822, %v1405, 0.0
        %1409 = vadd.xlane.f32.xlu0 %v1408
        %v1410 = vpop.xlane.xlu0 %1409
        %v1411 = vsel %vm822, %v1407, 0.0
        %1412 = vadd.xlane.f32.xlu0 %v1411
        %v1413 = vpop.xlane.xlu0 %1412
        %v1414 = vrcp.pop %v1410
        %v1415 = vrcp.pop %v1413
        %v1416 = vmul.f32 %v1405, %v1414
        %v1417 = vmul.f32 %v1407, %v1415
        %v1418 = vpack.c.bf16 %v1417, %v1416
        %1419 = vrot.lane.b32.xlu0 %v821, 80
        %v1420 = vpop.permute.xlu0 %1419
        %v1423 = vsel %vm822, %v1418, 0
        %1425 = vmatprep.subr.bf16.mxu0 0
        %1426 = vmatpush1.bf16.msra.mxu0 %v1420
        %1427 = vmatprep.subr.bf16.mxu0 0
        %1428 = vmatpush1.bf16.msra.mxu0 0
        %1429 = vmatprep.subr.bf16.mxu0 0
        %1430 = vmatpush1.bf16.msra.mxu0 0
        %1431 = vmatprep.subr.bf16.mxu0 0
        %1432 = vmatpush1.bf16.msra.mxu0 0
        %1433 = vmatprep.subr.bf16.mxu0 0
        %1434 = vmatpush1.bf16.msra.mxu0 0
        %1435 = vmatprep.subr.bf16.mxu0 0
        %1436 = vmatpush1.bf16.msra.mxu0 0
        %1437 = vmatprep.subr.bf16.mxu0 0
        %1438 = vmatpush1.bf16.msra.mxu0 0
        %1439 = vmatprep.subr.bf16.mxu0 0
        %1440 = vmatpush1.bf16.msra.mxu0 0
        %1441 = vmatprep.subr.bf16.mxu0 0
        %1442 = vmatpush1.bf16.msra.mxu0 0
        %1443 = vmatprep.subr.bf16.mxu0 0
        %1444 = vmatpush1.bf16.msra.mxu0 0
        %1445 = vmatprep.subr.bf16.mxu0 0
        %1446 = vmatpush1.bf16.msra.mxu0 0
        %1447 = vmatprep.subr.bf16.mxu0 0
        %1448 = vmatpush1.bf16.msra.mxu0 0
        %1449 = vmatprep.subr.bf16.mxu0 0
        %1450 = vmatpush1.bf16.msra.mxu0 0
        %1451 = vmatprep.subr.bf16.mxu0 0
        %1452 = vmatpush1.bf16.msra.mxu0 0
        %1453 = vmatprep.subr.bf16.mxu0 0
        %1454 = vmatpush1.bf16.msra.mxu0 0
        %1455 = vmatprep.subr.bf16.mxu0 0
        %1456 = vmatpush1.bf16.msra.mxu0 0
        %1457 = vmatprep.mubr.bf16.mxu0 0
        %1458 = vmatmul.mubr.bf16.gmra.mrb[0].mxu0 %v1423
        %v1459 = vpop.f32.mrb[0].mxu0
        %v1460 = vadd.f32 0.0, %v1459
        %v1461 = vpop.f32.mrb[0].mxu0
        %v1462 = vpop.f32.mrb[0].mxu0
        %v1463 = vadd.f32 0.0, %v1462
        %v1464 = vpop.f32.mrb[0].mxu0
        %1465 = vdwg.mxu0
        %v1466 = vpack.c.bf16 %v1463, %v1460
        %s1467 = scalar_lea.vmem [#allocation13], 24
        %v1468 = vld [vmem:[%s1467] sm:$0xf]
        %v1469 = vld [vmem:[%s1467 + $0x4] sm:$0xf]
        %v1472 = vunpack.c.l.b16 %v1468
        %v1473 = vunpack.c.l.b16 %v1469
        %v1474 = vpack.c.b16 %v1473, %v1472
        %v1477 = vsel %vm822, %v1466, 0
        %1479 = vmatprep.subr.bf16.mxu0 0
        %1480 = vmatpush1.bf16.msra.mxu0 %v1474
        %1481 = vmatprep.subr.bf16.mxu0 0
        %1482 = vmatpush1.bf16.msra.mxu0 0
        %1483 = vmatprep.subr.bf16.mxu0 0
        %1484 = vmatpush1.bf16.msra.mxu0 0
        %1485 = vmatprep.subr.bf16.mxu0 0
        %1486 = vmatpush1.bf16.msra.mxu0 0
        %1487 = vmatprep.subr.bf16.mxu0 0
        %1488 = vmatpush1.bf16.msra.mxu0 0
        %1489 = vmatprep.subr.bf16.mxu0 0
        %1490 = vmatpush1.bf16.msra.mxu0 0
        %1491 = vmatprep.subr.bf16.mxu0 0
        %1492 = vmatpush1.bf16.msra.mxu0 0
        %1493 = vmatprep.subr.bf16.mxu0 0
        %1494 = vmatpush1.bf16.msra.mxu0 0
        %1495 = vmatprep.subr.bf16.mxu0 0
        %1496 = vmatpush1.bf16.msra.mxu0 0
        %1497 = vmatprep.subr.bf16.mxu0 0
        %1498 = vmatpush1.bf16.msra.mxu0 0
        %1499 = vmatprep.subr.bf16.mxu0 0
        %1500 = vmatpush1.bf16.msra.mxu0 0
        %1501 = vmatprep.subr.bf16.mxu0 0
        %1502 = vmatpush1.bf16.msra.mxu0 0
        %1503 = vmatprep.subr.bf16.mxu0 0
        %1504 = vmatpush1.bf16.msra.mxu0 0
        %1505 = vmatprep.subr.bf16.mxu0 0
        %1506 = vmatpush1.bf16.msra.mxu0 0
        %1507 = vmatprep.subr.bf16.mxu0 0
        %1508 = vmatpush1.bf16.msra.mxu0 0
        %1509 = vmatprep.subr.bf16.mxu0 0
        %1510 = vmatpush1.bf16.msra.mxu0 0
        %1511 = vmatprep.mubr.bf16.mxu0 0
        %1512 = vmatmul.mubr.bf16.gmra.mrb[0].mxu0 %v1477
        %v1513 = vpop.f32.mrb[0].mxu0
        %v1514 = vadd.f32 0.0, %v1513
        %v1515 = vpop.f32.mrb[0].mxu0
        %v1516 = vpop.f32.mrb[0].mxu0
        %v1517 = vadd.f32 0.0, %v1516
        %v1518 = vpop.f32.mrb[0].mxu0
        %1519 = vdwg.mxu0
        %v1520 = vadd.f32 %v1343, %v1514
        %v1521 = vadd.f32 %v1344, %v1517
        %1522 = vrot.lane.b32.xlu0 %v819, 64
        %v1523 = vpop.permute.xlu0 %1522
        %1524 = vrot.lane.b32.xlu0 %v820, 64
        %v1525 = vpop.permute.xlu0 %1524
        %v1527 = vsel %vm822, %v1523, 0
        %v1530 = vsel %vm822, %v1525, 0
        %1532 = vmatprep.subr.bf16.mxu0 0
        %1533 = vmatpush1.bf16.xpose.msra.mxu0 %v1530
        %1534 = vmatprep.subr.bf16.mxu0 0
        %1535 = vmatpush1.bf16.xpose.msra.mxu0 0
        %1536 = vmatprep.subr.bf16.mxu0 0
        %1537 = vmatpush1.bf16.xpose.msra.mxu0 0
        %1538 = vmatprep.subr.bf16.mxu0 0
        %1539 = vmatpush1.bf16.xpose.msra.mxu0 0
        %1540 = vmatprep.subr.bf16.mxu0 0
        %1541 = vmatpush1.bf16.xpose.msra.mxu0 0
        %1542 = vmatprep.subr.bf16.mxu0 0
        %1543 = vmatpush1.bf16.xpose.msra.mxu0 0
        %1544 = vmatprep.subr.bf16.mxu0 0
        %1545 = vmatpush1.bf16.xpose.msra.mxu0 0
        %1546 = vmatprep.subr.bf16.mxu0 0
        %1547 = vmatpush1.bf16.xpose.msra.mxu0 0
        %1548 = vmatprep.subr.bf16.mxu0 0
        %1549 = vmatpush1.bf16.xpose.msra.mxu0 0
        %1550 = vmatprep.subr.bf16.mxu0 0
        %1551 = vmatpush1.bf16.xpose.msra.mxu0 0
        %1552 = vmatprep.subr.bf16.mxu0 0
        %1553 = vmatpush1.bf16.xpose.msra.mxu0 0
        %1554 = vmatprep.subr.bf16.mxu0 0
        %1555 = vmatpush1.bf16.xpose.msra.mxu0 0
        %1556 = vmatprep.subr.bf16.mxu0 0
        %1557 = vmatpush1.bf16.xpose.msra.mxu0 0
        %1558 = vmatprep.subr.bf16.mxu0 0
        %1559 = vmatpush1.bf16.xpose.msra.mxu0 0
        %1560 = vmatprep.subr.bf16.mxu0 0
        %1561 = vmatpush1.bf16.xpose.msra.mxu0 0
        %1562 = vmatprep.subr.bf16.mxu0 0
        %1563 = vmatpush1.bf16.xpose.msra.mxu0 0
        %1564 = vmatprep.mubr.bf16.mxu0 0
        %1565 = vmatmul.mubr.bf16.gmra.mrb[0].mxu0 %v1527
        %v1566 = vpop.f32.mrb[0].mxu0
        %v1567 = vadd.f32 0.0, %v1566
        %v1568 = vpop.f32.mrb[0].mxu0
        %v1569 = vpop.f32.mrb[0].mxu0
        %v1570 = vadd.f32 0.0, %v1569
        %v1571 = vpop.f32.mrb[0].mxu0
        %1572 = vdwg.mxu0
        %v1573 = vsel %vm822, %v1567, -inf
        %1574 = vmax.xlane.f32.xlu0 %v1573
        %v1575 = vpop.xlane.xlu0 %1574
        %v1576 = vsel %vm822, %v1570, -inf
        %1577 = vmax.xlane.f32.xlu0 %v1576
        %v1578 = vpop.xlane.xlu0 %1577
        %v1579 = vsub.f32 %v1567, %v1575
        %v1580 = vsub.f32 %v1570, %v1578
        %v1581 = vmul.f32 %v1579, 1.442695
        %v1582 = vpow.pop %v1581
        %v1583 = vmul.f32 %v1580, 1.442695
        %v1584 = vpow.pop %v1583
        %v1585 = vsel %vm822, %v1582, 0.0
        %1586 = vadd.xlane.f32.xlu0 %v1585
        %v1587 = vpop.xlane.xlu0 %1586
        %v1588 = vsel %vm822, %v1584, 0.0
        %1589 = vadd.xlane.f32.xlu0 %v1588
        %v1590 = vpop.xlane.xlu0 %1589
        %v1591 = vrcp.pop %v1587
        %v1592 = vrcp.pop %v1590
        %v1593 = vmul.f32 %v1582, %v1591
        %v1594 = vmul.f32 %v1584, %v1592
        %v1595 = vpack.c.bf16 %v1594, %v1593
        %1596 = vrot.lane.b32.xlu0 %v821, 64
        %v1597 = vpop.permute.xlu0 %1596
        %v1600 = vsel %vm822, %v1595, 0
        %1602 = vmatprep.subr.bf16.mxu0 0
        %1603 = vmatpush1.bf16.msra.mxu0 %v1597
        %1604 = vmatprep.subr.bf16.mxu0 0
        %1605 = vmatpush1.bf16.msra.mxu0 0
        %1606 = vmatprep.subr.bf16.mxu0 0
        %1607 = vmatpush1.bf16.msra.mxu0 0
        %1608 = vmatprep.subr.bf16.mxu0 0
        %1609 = vmatpush1.bf16.msra.mxu0 0
        %1610 = vmatprep.subr.bf16.mxu0 0
        %1611 = vmatpush1.bf16.msra.mxu0 0
        %1612 = vmatprep.subr.bf16.mxu0 0
        %1613 = vmatpush1.bf16.msra.mxu0 0
        %1614 = vmatprep.subr.bf16.mxu0 0
        %1615 = vmatpush1.bf16.msra.mxu0 0
        %1616 = vmatprep.subr.bf16.mxu0 0
        %1617 = vmatpush1.bf16.msra.mxu0 0
        %1618 = vmatprep.subr.bf16.mxu0 0
        %1619 = vmatpush1.bf16.msra.mxu0 0
        %1620 = vmatprep.subr.bf16.mxu0 0
        %1621 = vmatpush1.bf16.msra.mxu0 0
        %1622 = vmatprep.subr.bf16.mxu0 0
        %1623 = vmatpush1.bf16.msra.mxu0 0
        %1624 = vmatprep.subr.bf16.mxu0 0
        %1625 = vmatpush1.bf16.msra.mxu0 0
        %1626 = vmatprep.subr.bf16.mxu0 0
        %1627 = vmatpush1.bf16.msra.mxu0 0
        %1628 = vmatprep.subr.bf16.mxu0 0
        %1629 = vmatpush1.bf16.msra.mxu0 0
        %1630 = vmatprep.subr.bf16.mxu0 0
        %1631 = vmatpush1.bf16.msra.mxu0 0
        %1632 = vmatprep.subr.bf16.mxu0 0
        %1633 = vmatpush1.bf16.msra.mxu0 0
        %1634 = vmatprep.mubr.bf16.mxu0 0
        %1635 = vmatmul.mubr.bf16.gmra.mrb[0].mxu0 %v1600
        %v1636 = vpop.f32.mrb[0].mxu0
        %v1637 = vadd.f32 0.0, %v1636
        %v1638 = vpop.f32.mrb[0].mxu0
        %v1639 = vpop.f32.mrb[0].mxu0
        %v1640 = vadd.f32 0.0, %v1639
        %v1641 = vpop.f32.mrb[0].mxu0
        %1642 = vdwg.mxu0
        %v1643 = vpack.c.bf16 %v1640, %v1637
        %s1644 = scalar_lea.vmem [#allocation13], 32
        %v1645 = vld [vmem:[%s1644] sm:$0xf]
        %v1646 = vld [vmem:[%s1644 + $0x4] sm:$0xf]
        %v1649 = vunpack.c.l.b16 %v1645
        %v1650 = vunpack.c.l.b16 %v1646
        %v1651 = vpack.c.b16 %v1650, %v1649
        %v1654 = vsel %vm822, %v1643, 0
        %1656 = vmatprep.subr.bf16.mxu0 0
        %1657 = vmatpush1.bf16.msra.mxu0 %v1651
        %1658 = vmatprep.subr.bf16.mxu0 0
        %1659 = vmatpush1.bf16.msra.mxu0 0
        %1660 = vmatprep.subr.bf16.mxu0 0
        %1661 = vmatpush1.bf16.msra.mxu0 0
        %1662 = vmatprep.subr.bf16.mxu0 0
        %1663 = vmatpush1.bf16.msra.mxu0 0
        %1664 = vmatprep.subr.bf16.mxu0 0
        %1665 = vmatpush1.bf16.msra.mxu0 0
        %1666 = vmatprep.subr.bf16.mxu0 0
        %1667 = vmatpush1.bf16.msra.mxu0 0
        %1668 = vmatprep.subr.bf16.mxu0 0
        %1669 = vmatpush1.bf16.msra.mxu0 0
        %1670 = vmatprep.subr.bf16.mxu0 0
        %1671 = vmatpush1.bf16.msra.mxu0 0
        %1672 = vmatprep.subr.bf16.mxu0 0
        %1673 = vmatpush1.bf16.msra.mxu0 0
        %1674 = vmatprep.subr.bf16.mxu0 0
        %1675 = vmatpush1.bf16.msra.mxu0 0
        %1676 = vmatprep.subr.bf16.mxu0 0
        %1677 = vmatpush1.bf16.msra.mxu0 0
        %1678 = vmatprep.subr.bf16.mxu0 0
        %1679 = vmatpush1.bf16.msra.mxu0 0
        %1680 = vmatprep.subr.bf16.mxu0 0
        %1681 = vmatpush1.bf16.msra.mxu0 0
        %1682 = vmatprep.subr.bf16.mxu0 0
        %1683 = vmatpush1.bf16.msra.mxu0 0
        %1684 = vmatprep.subr.bf16.mxu0 0
        %1685 = vmatpush1.bf16.msra.mxu0 0
        %1686 = vmatprep.subr.bf16.mxu0 0
        %1687 = vmatpush1.bf16.msra.mxu0 0
        %1688 = vmatprep.mubr.bf16.mxu0 0
        %1689 = vmatmul.mubr.bf16.gmra.mrb[0].mxu0 %v1654
        %v1690 = vpop.f32.mrb[0].mxu0
        %v1691 = vadd.f32 0.0, %v1690
        %v1692 = vpop.f32.mrb[0].mxu0
        %v1693 = vpop.f32.mrb[0].mxu0
        %v1694 = vadd.f32 0.0, %v1693
        %v1695 = vpop.f32.mrb[0].mxu0
        %1696 = vdwg.mxu0
        %v1697 = vadd.f32 %v1520, %v1691
        %v1698 = vadd.f32 %v1521, %v1694
        %1699 = vrot.lane.b32.xlu0 %v819, 48
        %v1700 = vpop.permute.xlu0 %1699
        %1701 = vrot.lane.b32.xlu0 %v820, 48
        %v1702 = vpop.permute.xlu0 %1701
        %v1704 = vsel %vm822, %v1700, 0
        %v1707 = vsel %vm822, %v1702, 0
        %1709 = vmatprep.subr.bf16.mxu0 0
        %1710 = vmatpush1.bf16.xpose.msra.mxu0 %v1707
        %1711 = vmatprep.subr.bf16.mxu0 0
        %1712 = vmatpush1.bf16.xpose.msra.mxu0 0
        %1713 = vmatprep.subr.bf16.mxu0 0
        %1714 = vmatpush1.bf16.xpose.msra.mxu0 0
        %1715 = vmatprep.subr.bf16.mxu0 0
        %1716 = vmatpush1.bf16.xpose.msra.mxu0 0
        %1717 = vmatprep.subr.bf16.mxu0 0
        %1718 = vmatpush1.bf16.xpose.msra.mxu0 0
        %1719 = vmatprep.subr.bf16.mxu0 0
        %1720 = vmatpush1.bf16.xpose.msra.mxu0 0
        %1721 = vmatprep.subr.bf16.mxu0 0
        %1722 = vmatpush1.bf16.xpose.msra.mxu0 0
        %1723 = vmatprep.subr.bf16.mxu0 0
        %1724 = vmatpush1.bf16.xpose.msra.mxu0 0
        %1725 = vmatprep.subr.bf16.mxu0 0
        %1726 = vmatpush1.bf16.xpose.msra.mxu0 0
        %1727 = vmatprep.subr.bf16.mxu0 0
        %1728 = vmatpush1.bf16.xpose.msra.mxu0 0
        %1729 = vmatprep.subr.bf16.mxu0 0
        %1730 = vmatpush1.bf16.xpose.msra.mxu0 0
        %1731 = vmatprep.subr.bf16.mxu0 0
        %1732 = vmatpush1.bf16.xpose.msra.mxu0 0
        %1733 = vmatprep.subr.bf16.mxu0 0
        %1734 = vmatpush1.bf16.xpose.msra.mxu0 0
        %1735 = vmatprep.subr.bf16.mxu0 0
        %1736 = vmatpush1.bf16.xpose.msra.mxu0 0
        %1737 = vmatprep.subr.bf16.mxu0 0
        %1738 = vmatpush1.bf16.xpose.msra.mxu0 0
        %1739 = vmatprep.subr.bf16.mxu0 0
        %1740 = vmatpush1.bf16.xpose.msra.mxu0 0
        %1741 = vmatprep.mubr.bf16.mxu0 0
        %1742 = vmatmul.mubr.bf16.gmra.mrb[0].mxu0 %v1704
        %v1743 = vpop.f32.mrb[0].mxu0
        %v1744 = vadd.f32 0.0, %v1743
        %v1745 = vpop.f32.mrb[0].mxu0
        %v1746 = vpop.f32.mrb[0].mxu0
        %v1747 = vadd.f32 0.0, %v1746
        %v1748 = vpop.f32.mrb[0].mxu0
        %1749 = vdwg.mxu0
        %v1750 = vsel %vm822, %v1744, -inf
        %1751 = vmax.xlane.f32.xlu0 %v1750
        %v1752 = vpop.xlane.xlu0 %1751
        %v1753 = vsel %vm822, %v1747, -inf
        %1754 = vmax.xlane.f32.xlu0 %v1753
        %v1755 = vpop.xlane.xlu0 %1754
        %v1756 = vsub.f32 %v1744, %v1752
        %v1757 = vsub.f32 %v1747, %v1755
        %v1758 = vmul.f32 %v1756, 1.442695
        %v1759 = vpow.pop %v1758
        %v1760 = vmul.f32 %v1757, 1.442695
        %v1761 = vpow.pop %v1760
        %v1762 = vsel %vm822, %v1759, 0.0
        %1763 = vadd.xlane.f32.xlu0 %v1762
        %v1764 = vpop.xlane.xlu0 %1763
        %v1765 = vsel %vm822, %v1761, 0.0
        %1766 = vadd.xlane.f32.xlu0 %v1765
        %v1767 = vpop.xlane.xlu0 %1766
        %v1768 = vrcp.pop %v1764
        %v1769 = vrcp.pop %v1767
        %v1770 = vmul.f32 %v1759, %v1768
        %v1771 = vmul.f32 %v1761, %v1769
        %v1772 = vpack.c.bf16 %v1771, %v1770
        %1773 = vrot.lane.b32.xlu0 %v821, 48
        %v1774 = vpop.permute.xlu0 %1773
        %v1777 = vsel %vm822, %v1772, 0
        %1779 = vmatprep.subr.bf16.mxu0 0
        %1780 = vmatpush1.bf16.msra.mxu0 %v1774
        %1781 = vmatprep.subr.bf16.mxu0 0
        %1782 = vmatpush1.bf16.msra.mxu0 0
        %1783 = vmatprep.subr.bf16.mxu0 0
        %1784 = vmatpush1.bf16.msra.mxu0 0
        %1785 = vmatprep.subr.bf16.mxu0 0
        %1786 = vmatpush1.bf16.msra.mxu0 0
        %1787 = vmatprep.subr.bf16.mxu0 0
        %1788 = vmatpush1.bf16.msra.mxu0 0
        %1789 = vmatprep.subr.bf16.mxu0 0
        %1790 = vmatpush1.bf16.msra.mxu0 0
        %1791 = vmatprep.subr.bf16.mxu0 0
        %1792 = vmatpush1.bf16.msra.mxu0 0
        %1793 = vmatprep.subr.bf16.mxu0 0
        %1794 = vmatpush1.bf16.msra.mxu0 0
        %1795 = vmatprep.subr.bf16.mxu0 0
        %1796 = vmatpush1.bf16.msra.mxu0 0
        %1797 = vmatprep.subr.bf16.mxu0 0
        %1798 = vmatpush1.bf16.msra.mxu0 0
        %1799 = vmatprep.subr.bf16.mxu0 0
        %1800 = vmatpush1.bf16.msra.mxu0 0
        %1801 = vmatprep.subr.bf16.mxu0 0
        %1802 = vmatpush1.bf16.msra.mxu0 0
        %1803 = vmatprep.subr.bf16.mxu0 0
        %1804 = vmatpush1.bf16.msra.mxu0 0
        %1805 = vmatprep.subr.bf16.mxu0 0
        %1806 = vmatpush1.bf16.msra.mxu0 0
        %1807 = vmatprep.subr.bf16.mxu0 0
        %1808 = vmatpush1.bf16.msra.mxu0 0
        %1809 = vmatprep.subr.bf16.mxu0 0
        %1810 = vmatpush1.bf16.msra.mxu0 0
        %1811 = vmatprep.mubr.bf16.mxu0 0
        %1812 = vmatmul.mubr.bf16.gmra.mrb[0].mxu0 %v1777
        %v1813 = vpop.f32.mrb[0].mxu0
        %v1814 = vadd.f32 0.0, %v1813
        %v1815 = vpop.f32.mrb[0].mxu0
        %v1816 = vpop.f32.mrb[0].mxu0
        %v1817 = vadd.f32 0.0, %v1816
        %v1818 = vpop.f32.mrb[0].mxu0
        %1819 = vdwg.mxu0
        %v1820 = vpack.c.bf16 %v1817, %v1814
        %s1821 = scalar_lea.vmem [#allocation13], 40
        %v1822 = vld [vmem:[%s1821] sm:$0xf]
        %v1823 = vld [vmem:[%s1821 + $0x4] sm:$0xf]
        %v1826 = vunpack.c.l.b16 %v1822
        %v1827 = vunpack.c.l.b16 %v1823
        %v1828 = vpack.c.b16 %v1827, %v1826
        %v1831 = vsel %vm822, %v1820, 0
        %1833 = vmatprep.subr.bf16.mxu0 0
        %1834 = vmatpush1.bf16.msra.mxu0 %v1828
        %1835 = vmatprep.subr.bf16.mxu0 0
        %1836 = vmatpush1.bf16.msra.mxu0 0
        %1837 = vmatprep.subr.bf16.mxu0 0
        %1838 = vmatpush1.bf16.msra.mxu0 0
        %1839 = vmatprep.subr.bf16.mxu0 0
        %1840 = vmatpush1.bf16.msra.mxu0 0
        %1841 = vmatprep.subr.bf16.mxu0 0
        %1842 = vmatpush1.bf16.msra.mxu0 0
        %1843 = vmatprep.subr.bf16.mxu0 0
        %1844 = vmatpush1.bf16.msra.mxu0 0
        %1845 = vmatprep.subr.bf16.mxu0 0
        %1846 = vmatpush1.bf16.msra.mxu0 0
        %1847 = vmatprep.subr.bf16.mxu0 0
        %1848 = vmatpush1.bf16.msra.mxu0 0
        %1849 = vmatprep.subr.bf16.mxu0 0
        %1850 = vmatpush1.bf16.msra.mxu0 0
        %1851 = vmatprep.subr.bf16.mxu0 0
        %1852 = vmatpush1.bf16.msra.mxu0 0
        %1853 = vmatprep.subr.bf16.mxu0 0
        %1854 = vmatpush1.bf16.msra.mxu0 0
        %1855 = vmatprep.subr.bf16.mxu0 0
        %1856 = vmatpush1.bf16.msra.mxu0 0
        %1857 = vmatprep.subr.bf16.mxu0 0
        %1858 = vmatpush1.bf16.msra.mxu0 0
        %1859 = vmatprep.subr.bf16.mxu0 0
        %1860 = vmatpush1.bf16.msra.mxu0 0
        %1861 = vmatprep.subr.bf16.mxu0 0
        %1862 = vmatpush1.bf16.msra.mxu0 0
        %1863 = vmatprep.subr.bf16.mxu0 0
        %1864 = vmatpush1.bf16.msra.mxu0 0
        %1865 = vmatprep.mubr.bf16.mxu0 0
        %1866 = vmatmul.mubr.bf16.gmra.mrb[0].mxu0 %v1831
        %v1867 = vpop.f32.mrb[0].mxu0
        %v1868 = vadd.f32 0.0, %v1867
        %v1869 = vpop.f32.mrb[0].mxu0
        %v1870 = vpop.f32.mrb[0].mxu0
        %v1871 = vadd.f32 0.0, %v1870
        %v1872 = vpop.f32.mrb[0].mxu0
        %1873 = vdwg.mxu0
        %v1874 = vadd.f32 %v1697, %v1868
        %v1875 = vadd.f32 %v1698, %v1871
        %1876 = vrot.lane.b32.xlu0 %v819, 32
        %v1877 = vpop.permute.xlu0 %1876
        %1878 = vrot.lane.b32.xlu0 %v820, 32
        %v1879 = vpop.permute.xlu0 %1878
        %v1881 = vsel %vm822, %v1877, 0
        %v1884 = vsel %vm822, %v1879, 0
        %1886 = vmatprep.subr.bf16.mxu0 0
        %1887 = vmatpush1.bf16.xpose.msra.mxu0 %v1884
        %1888 = vmatprep.subr.bf16.mxu0 0
        %1889 = vmatpush1.bf16.xpose.msra.mxu0 0
        %1890 = vmatprep.subr.bf16.mxu0 0
        %1891 = vmatpush1.bf16.xpose.msra.mxu0 0
        %1892 = vmatprep.subr.bf16.mxu0 0
        %1893 = vmatpush1.bf16.xpose.msra.mxu0 0
        %1894 = vmatprep.subr.bf16.mxu0 0
        %1895 = vmatpush1.bf16.xpose.msra.mxu0 0
        %1896 = vmatprep.subr.bf16.mxu0 0
        %1897 = vmatpush1.bf16.xpose.msra.mxu0 0
        %1898 = vmatprep.subr.bf16.mxu0 0
        %1899 = vmatpush1.bf16.xpose.msra.mxu0 0
        %1900 = vmatprep.subr.bf16.mxu0 0
        %1901 = vmatpush1.bf16.xpose.msra.mxu0 0
        %1902 = vmatprep.subr.bf16.mxu0 0
        %1903 = vmatpush1.bf16.xpose.msra.mxu0 0
        %1904 = vmatprep.subr.bf16.mxu0 0
        %1905 = vmatpush1.bf16.xpose.msra.mxu0 0
        %1906 = vmatprep.subr.bf16.mxu0 0
        %1907 = vmatpush1.bf16.xpose.msra.mxu0 0
        %1908 = vmatprep.subr.bf16.mxu0 0
        %1909 = vmatpush1.bf16.xpose.msra.mxu0 0
        %1910 = vmatprep.subr.bf16.mxu0 0
        %1911 = vmatpush1.bf16.xpose.msra.mxu0 0
        %1912 = vmatprep.subr.bf16.mxu0 0
        %1913 = vmatpush1.bf16.xpose.msra.mxu0 0
        %1914 = vmatprep.subr.bf16.mxu0 0
        %1915 = vmatpush1.bf16.xpose.msra.mxu0 0
        %1916 = vmatprep.subr.bf16.mxu0 0
        %1917 = vmatpush1.bf16.xpose.msra.mxu0 0
        %1918 = vmatprep.mubr.bf16.mxu0 0
        %1919 = vmatmul.mubr.bf16.gmra.mrb[0].mxu0 %v1881
        %v1920 = vpop.f32.mrb[0].mxu0
        %v1921 = vadd.f32 0.0, %v1920
        %v1922 = vpop.f32.mrb[0].mxu0
        %v1923 = vpop.f32.mrb[0].mxu0
        %v1924 = vadd.f32 0.0, %v1923
        %v1925 = vpop.f32.mrb[0].mxu0
        %1926 = vdwg.mxu0
        %v1927 = vsel %vm822, %v1921, -inf
        %1928 = vmax.xlane.f32.xlu0 %v1927
        %v1929 = vpop.xlane.xlu0 %1928
        %v1930 = vsel %vm822, %v1924, -inf
        %1931 = vmax.xlane.f32.xlu0 %v1930
        %v1932 = vpop.xlane.xlu0 %1931
        %v1933 = vsub.f32 %v1921, %v1929
        %v1934 = vsub.f32 %v1924, %v1932
        %v1935 = vmul.f32 %v1933, 1.442695
        %v1936 = vpow.pop %v1935
        %v1937 = vmul.f32 %v1934, 1.442695
        %v1938 = vpow.pop %v1937
        %v1939 = vsel %vm822, %v1936, 0.0
        %1940 = vadd.xlane.f32.xlu0 %v1939
        %v1941 = vpop.xlane.xlu0 %1940
        %v1942 = vsel %vm822, %v1938, 0.0
        %1943 = vadd.xlane.f32.xlu0 %v1942
        %v1944 = vpop.xlane.xlu0 %1943
        %v1945 = vrcp.pop %v1941
        %v1946 = vrcp.pop %v1944
        %v1947 = vmul.f32 %v1936, %v1945
        %v1948 = vmul.f32 %v1938, %v1946
        %v1949 = vpack.c.bf16 %v1948, %v1947
        %1950 = vrot.lane.b32.xlu0 %v821, 32
        %v1951 = vpop.permute.xlu0 %1950
        %v1954 = vsel %vm822, %v1949, 0
        %1956 = vmatprep.subr.bf16.mxu0 0
        %1957 = vmatpush1.bf16.msra.mxu0 %v1951
        %1958 = vmatprep.subr.bf16.mxu0 0
        %1959 = vmatpush1.bf16.msra.mxu0 0
        %1960 = vmatprep.subr.bf16.mxu0 0
        %1961 = vmatpush1.bf16.msra.mxu0 0
        %1962 = vmatprep.subr.bf16.mxu0 0
        %1963 = vmatpush1.bf16.msra.mxu0 0
        %1964 = vmatprep.subr.bf16.mxu0 0
        %1965 = vmatpush1.bf16.msra.mxu0 0
        %1966 = vmatprep.subr.bf16.mxu0 0
        %1967 = vmatpush1.bf16.msra.mxu0 0
        %1968 = vmatprep.subr.bf16.mxu0 0
        %1969 = vmatpush1.bf16.msra.mxu0 0
        %1970 = vmatprep.subr.bf16.mxu0 0
        %1971 = vmatpush1.bf16.msra.mxu0 0
        %1972 = vmatprep.subr.bf16.mxu0 0
        %1973 = vmatpush1.bf16.msra.mxu0 0
        %1974 = vmatprep.subr.bf16.mxu0 0
        %1975 = vmatpush1.bf16.msra.mxu0 0
        %1976 = vmatprep.subr.bf16.mxu0 0
        %1977 = vmatpush1.bf16.msra.mxu0 0
        %1978 = vmatprep.subr.bf16.mxu0 0
        %1979 = vmatpush1.bf16.msra.mxu0 0
        %1980 = vmatprep.subr.bf16.mxu0 0
        %1981 = vmatpush1.bf16.msra.mxu0 0
        %1982 = vmatprep.subr.bf16.mxu0 0
        %1983 = vmatpush1.bf16.msra.mxu0 0
        %1984 = vmatprep.subr.bf16.mxu0 0
        %1985 = vmatpush1.bf16.msra.mxu0 0
        %1986 = vmatprep.subr.bf16.mxu0 0
        %1987 = vmatpush1.bf16.msra.mxu0 0
        %1988 = vmatprep.mubr.bf16.mxu0 0
        %1989 = vmatmul.mubr.bf16.gmra.mrb[0].mxu0 %v1954
        %v1990 = vpop.f32.mrb[0].mxu0
        %v1991 = vadd.f32 0.0, %v1990
        %v1992 = vpop.f32.mrb[0].mxu0
        %v1993 = vpop.f32.mrb[0].mxu0
        %v1994 = vadd.f32 0.0, %v1993
        %v1995 = vpop.f32.mrb[0].mxu0
        %1996 = vdwg.mxu0
        %v1997 = vpack.c.bf16 %v1994, %v1991
        %s1998 = scalar_lea.vmem [#allocation13], 48
        %v1999 = vld [vmem:[%s1998] sm:$0xf]
        %v2000 = vld [vmem:[%s1998 + $0x4] sm:$0xf]
        %v2003 = vunpack.c.l.b16 %v1999
        %v2004 = vunpack.c.l.b16 %v2000
        %v2005 = vpack.c.b16 %v2004, %v2003
        %v2008 = vsel %vm822, %v1997, 0
        %2010 = vmatprep.subr.bf16.mxu0 0
        %2011 = vmatpush1.bf16.msra.mxu0 %v2005
        %2012 = vmatprep.subr.bf16.mxu0 0
        %2013 = vmatpush1.bf16.msra.mxu0 0
        %2014 = vmatprep.subr.bf16.mxu0 0
        %2015 = vmatpush1.bf16.msra.mxu0 0
        %2016 = vmatprep.subr.bf16.mxu0 0
        %2017 = vmatpush1.bf16.msra.mxu0 0
        %2018 = vmatprep.subr.bf16.mxu0 0
        %2019 = vmatpush1.bf16.msra.mxu0 0
        %2020 = vmatprep.subr.bf16.mxu0 0
        %2021 = vmatpush1.bf16.msra.mxu0 0
        %2022 = vmatprep.subr.bf16.mxu0 0
        %2023 = vmatpush1.bf16.msra.mxu0 0
        %2024 = vmatprep.subr.bf16.mxu0 0
        %2025 = vmatpush1.bf16.msra.mxu0 0
        %2026 = vmatprep.subr.bf16.mxu0 0
        %2027 = vmatpush1.bf16.msra.mxu0 0
        %2028 = vmatprep.subr.bf16.mxu0 0
        %2029 = vmatpush1.bf16.msra.mxu0 0
        %2030 = vmatprep.subr.bf16.mxu0 0
        %2031 = vmatpush1.bf16.msra.mxu0 0
        %2032 = vmatprep.subr.bf16.mxu0 0
        %2033 = vmatpush1.bf16.msra.mxu0 0
        %2034 = vmatprep.subr.bf16.mxu0 0
        %2035 = vmatpush1.bf16.msra.mxu0 0
        %2036 = vmatprep.subr.bf16.mxu0 0
        %2037 = vmatpush1.bf16.msra.mxu0 0
        %2038 = vmatprep.subr.bf16.mxu0 0
        %2039 = vmatpush1.bf16.msra.mxu0 0
        %2040 = vmatprep.subr.bf16.mxu0 0
        %2041 = vmatpush1.bf16.msra.mxu0 0
        %2042 = vmatprep.mubr.bf16.mxu0 0
        %2043 = vmatmul.mubr.bf16.gmra.mrb[0].mxu0 %v2008
        %v2044 = vpop.f32.mrb[0].mxu0
        %v2045 = vadd.f32 0.0, %v2044
        %v2046 = vpop.f32.mrb[0].mxu0
        %v2047 = vpop.f32.mrb[0].mxu0
        %v2048 = vadd.f32 0.0, %v2047
        %v2049 = vpop.f32.mrb[0].mxu0
        %2050 = vdwg.mxu0
        %v2051 = vadd.f32 %v1874, %v2045
        %v2052 = vadd.f32 %v1875, %v2048
        %2053 = vrot.lane.b32.xlu0 %v819, 16
        %v2054 = vpop.permute.xlu0 %2053
        %2055 = vrot.lane.b32.xlu0 %v820, 16
        %v2056 = vpop.permute.xlu0 %2055
        %v2058 = vsel %vm822, %v2054, 0
        %v2061 = vsel %vm822, %v2056, 0
        %2063 = vmatprep.subr.bf16.mxu0 0
        %2064 = vmatpush1.bf16.xpose.msra.mxu0 %v2061
        %2065 = vmatprep.subr.bf16.mxu0 0
        %2066 = vmatpush1.bf16.xpose.msra.mxu0 0
        %2067 = vmatprep.subr.bf16.mxu0 0
        %2068 = vmatpush1.bf16.xpose.msra.mxu0 0
        %2069 = vmatprep.subr.bf16.mxu0 0
        %2070 = vmatpush1.bf16.xpose.msra.mxu0 0
        %2071 = vmatprep.subr.bf16.mxu0 0
        %2072 = vmatpush1.bf16.xpose.msra.mxu0 0
        %2073 = vmatprep.subr.bf16.mxu0 0
        %2074 = vmatpush1.bf16.xpose.msra.mxu0 0
        %2075 = vmatprep.subr.bf16.mxu0 0
        %2076 = vmatpush1.bf16.xpose.msra.mxu0 0
        %2077 = vmatprep.subr.bf16.mxu0 0
        %2078 = vmatpush1.bf16.xpose.msra.mxu0 0
        %2079 = vmatprep.subr.bf16.mxu0 0
        %2080 = vmatpush1.bf16.xpose.msra.mxu0 0
        %2081 = vmatprep.subr.bf16.mxu0 0
        %2082 = vmatpush1.bf16.xpose.msra.mxu0 0
        %2083 = vmatprep.subr.bf16.mxu0 0
        %2084 = vmatpush1.bf16.xpose.msra.mxu0 0
        %2085 = vmatprep.subr.bf16.mxu0 0
        %2086 = vmatpush1.bf16.xpose.msra.mxu0 0
        %2087 = vmatprep.subr.bf16.mxu0 0
        %2088 = vmatpush1.bf16.xpose.msra.mxu0 0
        %2089 = vmatprep.subr.bf16.mxu0 0
        %2090 = vmatpush1.bf16.xpose.msra.mxu0 0
        %2091 = vmatprep.subr.bf16.mxu0 0
        %2092 = vmatpush1.bf16.xpose.msra.mxu0 0
        %2093 = vmatprep.subr.bf16.mxu0 0
        %2094 = vmatpush1.bf16.xpose.msra.mxu0 0
        %2095 = vmatprep.mubr.bf16.mxu0 0
        %2096 = vmatmul.mubr.bf16.gmra.mrb[0].mxu0 %v2058
        %v2097 = vpop.f32.mrb[0].mxu0
        %v2098 = vadd.f32 0.0, %v2097
        %v2099 = vpop.f32.mrb[0].mxu0
        %v2100 = vpop.f32.mrb[0].mxu0
        %v2101 = vadd.f32 0.0, %v2100
        %v2102 = vpop.f32.mrb[0].mxu0
        %2103 = vdwg.mxu0
        %v2104 = vsel %vm822, %v2098, -inf
        %2105 = vmax.xlane.f32.xlu0 %v2104
        %v2106 = vpop.xlane.xlu0 %2105
        %v2107 = vsel %vm822, %v2101, -inf
        %2108 = vmax.xlane.f32.xlu0 %v2107
        %v2109 = vpop.xlane.xlu0 %2108
        %v2110 = vsub.f32 %v2098, %v2106
        %v2111 = vsub.f32 %v2101, %v2109
        %v2112 = vmul.f32 %v2110, 1.442695
        %v2113 = vpow.pop %v2112
        %v2114 = vmul.f32 %v2111, 1.442695
        %v2115 = vpow.pop %v2114
        %v2116 = vsel %vm822, %v2113, 0.0
        %2117 = vadd.xlane.f32.xlu0 %v2116
        %v2118 = vpop.xlane.xlu0 %2117
        %v2119 = vsel %vm822, %v2115, 0.0
        %2120 = vadd.xlane.f32.xlu0 %v2119
        %v2121 = vpop.xlane.xlu0 %2120
        %v2122 = vrcp.pop %v2118
        %v2123 = vrcp.pop %v2121
        %v2124 = vmul.f32 %v2113, %v2122
        %v2125 = vmul.f32 %v2115, %v2123
        %v2126 = vpack.c.bf16 %v2125, %v2124
        %2127 = vrot.lane.b32.xlu0 %v821, 16
        %v2128 = vpop.permute.xlu0 %2127
        %v2131 = vsel %vm822, %v2126, 0
        %2133 = vmatprep.subr.bf16.mxu0 0
        %2134 = vmatpush1.bf16.msra.mxu0 %v2128
        %2135 = vmatprep.subr.bf16.mxu0 0
        %2136 = vmatpush1.bf16.msra.mxu0 0
        %2137 = vmatprep.subr.bf16.mxu0 0
        %2138 = vmatpush1.bf16.msra.mxu0 0
        %2139 = vmatprep.subr.bf16.mxu0 0
        %2140 = vmatpush1.bf16.msra.mxu0 0
        %2141 = vmatprep.subr.bf16.mxu0 0
        %2142 = vmatpush1.bf16.msra.mxu0 0
        %2143 = vmatprep.subr.bf16.mxu0 0
        %2144 = vmatpush1.bf16.msra.mxu0 0
        %2145 = vmatprep.subr.bf16.mxu0 0
        %2146 = vmatpush1.bf16.msra.mxu0 0
        %2147 = vmatprep.subr.bf16.mxu0 0
        %2148 = vmatpush1.bf16.msra.mxu0 0
        %2149 = vmatprep.subr.bf16.mxu0 0
        %2150 = vmatpush1.bf16.msra.mxu0 0
        %2151 = vmatprep.subr.bf16.mxu0 0
        %2152 = vmatpush1.bf16.msra.mxu0 0
        %2153 = vmatprep.subr.bf16.mxu0 0
        %2154 = vmatpush1.bf16.msra.mxu0 0
        %2155 = vmatprep.subr.bf16.mxu0 0
        %2156 = vmatpush1.bf16.msra.mxu0 0
        %2157 = vmatprep.subr.bf16.mxu0 0
        %2158 = vmatpush1.bf16.msra.mxu0 0
        %2159 = vmatprep.subr.bf16.mxu0 0
        %2160 = vmatpush1.bf16.msra.mxu0 0
        %2161 = vmatprep.subr.bf16.mxu0 0
        %2162 = vmatpush1.bf16.msra.mxu0 0
        %2163 = vmatprep.subr.bf16.mxu0 0
        %2164 = vmatpush1.bf16.msra.mxu0 0
        %2165 = vmatprep.mubr.bf16.mxu0 0
        %2166 = vmatmul.mubr.bf16.gmra.mrb[0].mxu0 %v2131
        %v2167 = vpop.f32.mrb[0].mxu0
        %v2168 = vadd.f32 0.0, %v2167
        %v2169 = vpop.f32.mrb[0].mxu0
        %v2170 = vpop.f32.mrb[0].mxu0
        %v2171 = vadd.f32 0.0, %v2170
        %v2172 = vpop.f32.mrb[0].mxu0
        %2173 = vdwg.mxu0
        %v2174 = vpack.c.bf16 %v2171, %v2168
        %s2175 = scalar_lea.vmem [#allocation13], 56
        %v2176 = vld [vmem:[%s2175] sm:$0xf]
        %v2177 = vld [vmem:[%s2175 + $0x4] sm:$0xf]
        %v2180 = vunpack.c.l.b16 %v2176
        %v2181 = vunpack.c.l.b16 %v2177
        %v2182 = vpack.c.b16 %v2181, %v2180
        %v2185 = vsel %vm822, %v2174, 0
        %2187 = vmatprep.subr.bf16.mxu0 0
        %2188 = vmatpush1.bf16.msra.mxu0 %v2182
        %2189 = vmatprep.subr.bf16.mxu0 0
        %2190 = vmatpush1.bf16.msra.mxu0 0
        %2191 = vmatprep.subr.bf16.mxu0 0
        %2192 = vmatpush1.bf16.msra.mxu0 0
        %2193 = vmatprep.subr.bf16.mxu0 0
        %2194 = vmatpush1.bf16.msra.mxu0 0
        %2195 = vmatprep.subr.bf16.mxu0 0
        %2196 = vmatpush1.bf16.msra.mxu0 0
        %2197 = vmatprep.subr.bf16.mxu0 0
        %2198 = vmatpush1.bf16.msra.mxu0 0
        %2199 = vmatprep.subr.bf16.mxu0 0
        %2200 = vmatpush1.bf16.msra.mxu0 0
        %2201 = vmatprep.subr.bf16.mxu0 0
        %2202 = vmatpush1.bf16.msra.mxu0 0
        %2203 = vmatprep.subr.bf16.mxu0 0
        %2204 = vmatpush1.bf16.msra.mxu0 0
        %2205 = vmatprep.subr.bf16.mxu0 0
        %2206 = vmatpush1.bf16.msra.mxu0 0
        %2207 = vmatprep.subr.bf16.mxu0 0
        %2208 = vmatpush1.bf16.msra.mxu0 0
        %2209 = vmatprep.subr.bf16.mxu0 0
        %2210 = vmatpush1.bf16.msra.mxu0 0
        %2211 = vmatprep.subr.bf16.mxu0 0
        %2212 = vmatpush1.bf16.msra.mxu0 0
        %2213 = vmatprep.subr.bf16.mxu0 0
        %2214 = vmatpush1.bf16.msra.mxu0 0
        %2215 = vmatprep.subr.bf16.mxu0 0
        %2216 = vmatpush1.bf16.msra.mxu0 0
        %2217 = vmatprep.subr.bf16.mxu0 0
        %2218 = vmatpush1.bf16.msra.mxu0 0
        %2219 = vmatprep.mubr.bf16.mxu0 0
        %2220 = vmatmul.mubr.bf16.gmra.mrb[0].mxu0 %v2185
        %v2221 = vpop.f32.mrb[0].mxu0
        %v2222 = vadd.f32 0.0, %v2221
        %v2223 = vpop.f32.mrb[0].mxu0
        %v2224 = vpop.f32.mrb[0].mxu0
        %v2225 = vadd.f32 0.0, %v2224
        %v2226 = vpop.f32.mrb[0].mxu0
        %2227 = vdwg.mxu0
        %v2228 = vadd.f32 %v2051, %v2222
        %v2229 = vadd.f32 %v2052, %v2225
        %v2230 = vld [vmem:[%s7] sm:$0x1]
        %v2232 = vlaneseq
        %v2233 = vshrl.u32 %v2232, 7
        %v2234 = vsub.s32 0, %v2233
        %v2235 = vrot.slane %v2230, %v2234
        %v2237 = vadd.f32 %v2228, %v2235
        %v2238 = vadd.f32 %v2229, %v2235
        %2239 = vst [vmem:[%s476] sm:$0xff] %v2237
        %2240 = vst [vmem:[%s476 + $0x8] sm:$0xff] %v2238
        %s2241 = sand.u32 %s237, 1
        %s2242 = scalar_lea.sflag [#allocation4], %s2241
        %s2243 = sand.u32 %s237, 1
        %s2244 = smul.addr %s2243, 16
        %s2245 = scalar_lea.vmem [#allocation14], %s2244
        // Predicated region
        $region81: #{tpu_custom_call.1} parent=51 // pred_check
          %p2246 = pneg %p247
        $region82: #{tpu_custom_call.1} parent=51 // pred_check_branch
          %2248 = sbr.rel (%p2246) target = $region84
        $region83: #{tpu_custom_call.1} parent=51 // pred_region
          %s2249 = smul.u32 2, %s35
          %s2251 = ssub.s32 256, 256
          %2252 = vsyncadd %s2242, %s2251
          %s2253 = smul.addr %s34, 4
          %s2254 = sadd.s32 %s2249, %s2253
          %s2255 = smul.addr %s2254, 128
          %s2256 = scalar_lea.hbm %s8, %s2255
          %s2257 = sshll.u32 %s2245, 4
          %s2258 = int_to_ptr.vmem [resolvable:$true] %s2257
          %2263 = dma.vmem_to_hbm [thread:$0]  %s2258, 256, %s2256, %s2242, 128, 128, 8
        $region84: #{tpu_custom_call.1} parent=51 // pred_fallthru
          _
      $region52: #{tpu_custom_call.1} parent=5 // pred_fallthru
        _
      %p2264 = scmp.le.s32.totalorder 2, %s25
      // Predicated region
      $region85: #{tpu_custom_call.1} parent=5 // pred_check
        %p2265 = pneg %p2264
      $region86: #{tpu_custom_call.1} parent=5 // pred_check_branch
        %2267 = sbr.rel (%p2265) target = $region88
      $region87: #{tpu_custom_call.1} parent=5 // pred_region
        %s2268 = ssub.s32 %s25, 2
        // Predicated region
        $region89: #{tpu_custom_call.1} parent=87 // pred_check
          %p2269 = pneg %p253
        $region90: #{tpu_custom_call.1} parent=87 // pred_check_branch
          %2271 = sbr.rel (%p2269) target = $region92
        $region91: #{tpu_custom_call.1} parent=87 // pred_region
          %s2272 = sand.u32 %s238, 1
          %s2273 = scalar_lea.sflag [#allocation4], %s2272
          %s2274 = sand.u32 %s238, 1
          %s2275 = smul.addr %s2274, 16
          %s2276 = scalar_lea.vmem [#allocation14], %s2275
          %2277 = dma.done %s2273, 256
        $region92: #{tpu_custom_call.1} parent=87 // pred_fallthru
          _
      $region88: #{tpu_custom_call.1} parent=5 // pred_fallthru
        _
    $region6: #{tpu_custom_call.1} parent=1 // loop_footer
      %s29 = sadd.s32 1, %s25
    $region7: #{tpu_custom_call.1} parent=1 // loop_footer_branch
      %24 = sbr.rel target = $region3
    $region8: #{tpu_custom_call.1} parent=1 // loop_exit
      _
    %2278 = vsyncpa [#allocation3], 1
    %s2279 = scalar_lea.sflag [#allocation3], 1
    %2280 = vsyncpa %s2279, 1
    %2281 = vsyncpa [#allocation6], 1
    %s2282 = scalar_lea.sflag [#allocation6], 1
    %2283 = vsyncpa %s2282, 1
    %2284 = vsyncpa [#allocation9], 1
    %2285 = vsyncpa [#allocation12], 1
    %2286 = vsyncpa [#allocation4], 1
    %s2287 = scalar_lea.sflag [#allocation4], 1
    %2288 = vsyncpa %s2287, 1

</llo_original>
